<compile_context>
chip_gen: v6e
topology: v6e:2x2x1
jax: 0.10.0
libtpu: 0.0.40
codegen_flags: <defaults>
</compile_context>

<pallas_src>
import functools
import math

import jax
import jax.numpy as jnp
from jax.experimental import pallas as pl
from jax.experimental.pallas import tpu as pltpu


# ---------------------------------------------------------------------------
# Tiling constants / helpers
# ---------------------------------------------------------------------------
_ROW_Q = 16                      # token-row quantum (bf16 sublane packing = 16)
_M_CAP = 512                     # row-tile cap for token matmuls
_N_CAP = 1024                    # output-column tile cap
_K_CAP = 512                     # contraction tile cap
_MLP_M_CAP = 256                 # fused-MLP row tile (keeps hidden tile in VMEM)
_MLP_H_CAP = 1280                # fused-MLP hidden-axis tile
# 40 MiB scoped VMEM: above v5e's 16 MiB default, below v7x's 64 MiB physical.
_VMEM_LIMIT = 40 * 1024 * 1024


def _round_up(v, q):
    return ((v + q - 1) // q) * q


def _pick_tile(dim, cap, quantum):
    """Largest tile <= cap that divides `dim` and is a multiple of `quantum`
    (falls back to the full dim for small / non-multiple sizes)."""
    if dim <= cap or dim % quantum:
        return dim
    t = (min(cap, dim) // quantum) * quantum
    while dim % t:
        t -= quantum
    return t


def _pad_rows(x, rows):
    m = x.shape[0]
    if m == rows:
        return x
    return jnp.pad(x, ((0, rows - m), (0, 0)))


def _gelu_tanh(y):
    # TODO(synk): PyTorch nn.GELU defaults to the exact erf form; the tanh
    # approximation is used for robust Mosaic lowering (~1e-3 rel. deviation).
    return 0.5 * y * (1.0 + jnp.tanh(0.7978845608028654 * (y + 0.044715 * y * y * y)))


# ---------------------------------------------------------------------------
# Pallas kernels
# ---------------------------------------------------------------------------
def _ln_linear_kernel(x_ref, g_ref, bt_ref, w_ref, b_ref, o_ref, xn_ref, *, eps):
    """Fused LayerNorm + matmul.  Grid = (row tiles, output-column tiles).

    LN (and the f32->bf16 cast) is computed once per row tile, at j == 0, into a
    bf16 VMEM scratch; every subsequent column tile matmuls from the scratch."""
    j = pl.program_id(1)

    @pl.when(j == 0)
    def _():
        x = x_ref[...].astype(jnp.float32)
        mu = jnp.mean(x, axis=-1, keepdims=True)
        var = jnp.mean((x - mu) ** 2, axis=-1, keepdims=True)
        xn = (x - mu) * jax.lax.rsqrt(var + eps)
        xn_ref[...] = (xn * g_ref[...] + bt_ref[...]).astype(jnp.bfloat16)

    y = jnp.dot(xn_ref[...], w_ref[...], preferred_element_type=jnp.float32)
    o_ref[...] = (y + b_ref[...]).astype(o_ref.dtype)


def _mlp_kernel(x_ref, g_ref, bt_ref, w1_ref, b1_ref, w2_ref, b2_ref, o_ref,
                xn_ref, acc_ref, *, eps):
    """Fully fused MLP block: out = x + fc2(GELU(fc1(LN2(x)))).

    Grid = (row tiles, hidden-dim tiles); the hidden activation tile lives only
    in VMEM/registers.  LN is computed once per row tile (hk == 0)."""
    hk = pl.program_id(1)

    @pl.when(hk == 0)
    def _():
        x = x_ref[...].astype(jnp.float32)
        mu = jnp.mean(x, axis=-1, keepdims=True)
        var = jnp.mean((x - mu) ** 2, axis=-1, keepdims=True)
        xn = (x - mu) * jax.lax.rsqrt(var + eps)
        xn_ref[...] = (xn * g_ref[...] + bt_ref[...]).astype(jnp.bfloat16)
        acc_ref[...] = jnp.zeros_like(acc_ref)

    h = jnp.dot(xn_ref[...], w1_ref[...], preferred_element_type=jnp.float32)
    h = _gelu_tanh(h + b1_ref[...])
    acc_ref[...] += jnp.dot(h.astype(jnp.bfloat16), w2_ref[...],
                            preferred_element_type=jnp.float32)

    @pl.when(hk == pl.num_programs(1) - 1)
    def _():
        o_ref[...] = acc_ref[...] + b2_ref[...] + x_ref[...].astype(jnp.float32)


def _matmul_kernel(x_ref, w_ref, b_ref, o_ref, acc_ref):
    """K-tiled bf16 matmul with f32 VMEM accumulator.  Grid = (M, N, K), K last."""
    k = pl.program_id(2)

    @pl.when(k == 0)
    def _():
        acc_ref[...] = jnp.zeros_like(acc_ref)

    acc_ref[...] += jnp.dot(x_ref[...].astype(jnp.bfloat16),
                            w_ref[...].astype(jnp.bfloat16),
                            preferred_element_type=jnp.float32)

    @pl.when(k == pl.num_programs(2) - 1)
    def _():
        o_ref[...] = (acc_ref[...] + b_ref[...]).astype(o_ref.dtype)


def _matmul_residual_kernel(x_ref, w_ref, b_ref, res_ref, o_ref, acc_ref):
    """Same as _matmul_kernel but fuses the residual add at finalize."""
    k = pl.program_id(2)

    @pl.when(k == 0)
    def _():
        acc_ref[...] = jnp.zeros_like(acc_ref)

    acc_ref[...] += jnp.dot(x_ref[...].astype(jnp.bfloat16),
                            w_ref[...].astype(jnp.bfloat16),
                            preferred_element_type=jnp.float32)

    @pl.when(k == pl.num_programs(2) - 1)
    def _():
        o_ref[...] = (acc_ref[...] + b_ref[...]
                      + res_ref[...].astype(jnp.float32)).astype(o_ref.dtype)


def _layernorm_kernel(x_ref, g_ref, b_ref, o_ref, *, eps):
    x = x_ref[...].astype(jnp.float32)
    mu = jnp.mean(x, axis=-1, keepdims=True)
    var = jnp.mean((x - mu) ** 2, axis=-1, keepdims=True)
    xn = (x - mu) * jax.lax.rsqrt(var + eps)
    o_ref[...] = xn * g_ref[...] + b_ref[...]


def _flash_attn_kernel(q_ref, k_ref, v_ref, o_ref, m_sc, l_sc, acc_sc,
                       *, n_real, tk, need_mask):
    """Online-softmax attention over the packed QKV slab.
    Grid = (B, heads, Nq-tiles, Nk-tiles), Nk last.  The 1/sqrt(hd) scale is
    pre-folded into the q columns of the QKV projection."""
    ki = pl.program_id(3)

    @pl.when(ki == 0)
    def _():
        m_sc[...] = jnp.full_like(m_sc, -jnp.inf)
        l_sc[...] = jnp.zeros_like(l_sc)
        acc_sc[...] = jnp.zeros_like(acc_sc)

    q = q_ref[...]                     # bf16 (tq, hd_pad), already scaled
    k = k_ref[...]                     # bf16 (tk, hd_pad)
    # NT matmul (contraction on the lane dim of both operands) lowers to a plain
    # MXU matmul with a transposed RHS latch; no in-loop XLU transpose chain.
    s = jax.lax.dot_general(q, k, (((1,), (1,)), ((), ())),
                            preferred_element_type=jnp.float32)   # (tq, tk)
    if need_mask:
        kpos = ki * tk + jax.lax.broadcasted_iota(jnp.int32, s.shape, 1)
        s = jnp.where(kpos < n_real, s, jnp.float32(-1e30))

    m_new = jnp.maximum(m_sc[...], jnp.max(s, axis=-1, keepdims=True))
    alpha = jnp.exp(m_sc[...] - m_new)
    p = jnp.exp(s - m_new)
    l_sc[...] = alpha * l_sc[...] + jnp.sum(p, axis=-1, keepdims=True)
    acc_sc[...] = alpha * acc_sc[...] + jnp.dot(
        p.astype(jnp.bfloat16), v_ref[...], preferred_element_type=jnp.float32)
    m_sc[...] = m_new

    @pl.when(ki == pl.num_programs(3) - 1)
    def _():
        o_ref[...] = (acc_sc[...] *
                      pl.reciprocal(l_sc[...], approx=True)).astype(o_ref.dtype)


# ---------------------------------------------------------------------------
# pallas_call wrappers
# ---------------------------------------------------------------------------
def pallas_ln_linear(x, gamma, beta, w_bf16, b, out_dtype=jnp.bfloat16, eps=1e-6):
    m, d = x.shape
    nout = w_bf16.shape[1]
    tm = _pick_tile(m, _M_CAP, _ROW_Q)
    tn = _pick_tile(nout, _N_CAP, 128)
    grid = (m // tm, nout // tn)
    cost = pl.CostEstimate(
        flops=2 * m * d * nout + 8 * m * d,
        transcendentals=0,
        bytes_accessed=m * d * 4 + d * nout * 2 + m * nout * jnp.dtype(out_dtype).itemsize)
    return pl.pallas_call(
        functools.partial(_ln_linear_kernel, eps=eps),
        out_shape=jax.ShapeDtypeStruct((m, nout), out_dtype),
        grid=grid,
        in_specs=[
            pl.BlockSpec((tm, d), lambda i, j: (i, 0)),
            pl.BlockSpec((1, d), lambda i, j: (0, 0)),
            pl.BlockSpec((1, d), lambda i, j: (0, 0)),
            pl.BlockSpec((d, tn), lambda i, j: (0, j)),
            pl.BlockSpec((1, tn), lambda i, j: (0, j)),
        ],
        out_specs=pl.BlockSpec((tm, tn), lambda i, j: (i, j)),
        scratch_shapes=[pltpu.VMEM((tm, d), jnp.bfloat16)],
        compiler_params=pltpu.CompilerParams(
            dimension_semantics=("parallel", "arbitrary"),
            vmem_limit_bytes=_VMEM_LIMIT),
        cost_estimate=cost,
    )(x, gamma.reshape(1, d), beta.reshape(1, d), w_bf16, b.reshape(1, nout))


def pallas_mlp(x, gamma, beta, w1_bf16, b1, w2_bf16, b2, eps=1e-6):
    m, d = x.shape
    hidden = w1_bf16.shape[1]
    tm = _pick_tile(m, _MLP_M_CAP, _ROW_Q)
    th = _pick_tile(hidden, _MLP_H_CAP, 128)
    grid = (m // tm, hidden // th)
    cost = pl.CostEstimate(
        flops=4 * m * d * hidden,
        transcendentals=m * hidden,
        bytes_accessed=2 * m * d * 4 + 2 * d * hidden * 2)
    return pl.pallas_call(
        functools.partial(_mlp_kernel, eps=eps),
        out_shape=jax.ShapeDtypeStruct((m, d), jnp.float32),
        grid=grid,
        in_specs=[
            pl.BlockSpec((tm, d), lambda i, k: (i, 0)),
            pl.BlockSpec((1, d), lambda i, k: (0, 0)),
            pl.BlockSpec((1, d), lambda i, k: (0, 0)),
            pl.BlockSpec((d, th), lambda i, k: (0, k)),
            pl.BlockSpec((1, th), lambda i, k: (0, k)),
            pl.BlockSpec((th, d), lambda i, k: (k, 0)),
            pl.BlockSpec((1, d), lambda i, k: (0, 0)),
        ],
        out_specs=pl.BlockSpec((tm, d), lambda i, k: (i, 0)),
        scratch_shapes=[pltpu.VMEM((tm, d), jnp.bfloat16),
                        pltpu.VMEM((tm, d), jnp.float32)],
        input_output_aliases={0: 0},
        compiler_params=pltpu.CompilerParams(
            dimension_semantics=("parallel", "arbitrary"),
            vmem_limit_bytes=_VMEM_LIMIT),
        cost_estimate=cost,
    )(x, gamma.reshape(1, d), beta.reshape(1, d),
      w1_bf16, b1.reshape(1, hidden), w2_bf16, b2.reshape(1, d))


def pallas_matmul(x, w_bf16, b, residual=None):
    m, kdim = x.shape
    nout = w_bf16.shape[1]
    tm = _pick_tile(m, _M_CAP, _ROW_Q)
    tn = _pick_tile(nout, _N_CAP, 128)
    tk = _pick_tile(kdim, _K_CAP, 128)
    grid = (m // tm, nout // tn, kdim // tk)

    in_specs = [
        pl.BlockSpec((tm, tk), lambda i, j, k: (i, k)),
        pl.BlockSpec((tk, tn), lambda i, j, k: (k, j)),
        pl.BlockSpec((1, tn), lambda i, j, k: (0, j)),
    ]
    args = [x, w_bf16, b.reshape(1, nout)]
    bytes_accessed = (m * kdim * x.dtype.itemsize + kdim * nout * 2 + m * nout * 4)
    aliases = {}
    if residual is None:
        kernel = _matmul_kernel
    else:
        kernel = _matmul_residual_kernel
        in_specs.append(pl.BlockSpec((tm, tn), lambda i, j, k: (i, j)))
        args.append(residual)
        bytes_accessed += m * nout * 4
        aliases = {3: 0}     # hstate is updated in place (no extra HBM slab)

    return pl.pallas_call(
        kernel,
        out_shape=jax.ShapeDtypeStruct((m, nout), jnp.float32),
        grid=grid,
        in_specs=in_specs,
        out_specs=pl.BlockSpec((tm, tn), lambda i, j, k: (i, j)),
        scratch_shapes=[pltpu.VMEM((tm, tn), jnp.float32)],
        input_output_aliases=aliases,
        compiler_params=pltpu.CompilerParams(
            dimension_semantics=("parallel", "parallel", "arbitrary"),
            vmem_limit_bytes=_VMEM_LIMIT),
        cost_estimate=pl.CostEstimate(flops=2 * m * kdim * nout, transcendentals=0,
                                      bytes_accessed=bytes_accessed),
    )(*args)


def pallas_layernorm(x, gamma, beta, eps=1e-6):
    m, d = x.shape
    tm = _pick_tile(m, _M_CAP, _ROW_Q)
    return pl.pallas_call(
        functools.partial(_layernorm_kernel, eps=eps),
        out_shape=jax.ShapeDtypeStruct((m, d), jnp.float32),
        grid=(m // tm,),
        in_specs=[
            pl.BlockSpec((tm, d), lambda i: (i, 0)),
            pl.BlockSpec((1, d), lambda i: (0, 0)),
            pl.BlockSpec((1, d), lambda i: (0, 0)),
        ],
        out_specs=pl.BlockSpec((tm, d), lambda i: (i, 0)),
        compiler_params=pltpu.CompilerParams(dimension_semantics=("parallel",)),
    )(x, gamma.reshape(1, d), beta.reshape(1, d))


def pallas_flash_attention(qkv, *, batch, n_pad, n_real, num_heads, hd_pad, seq_tile):
    """qkv: [batch*n_pad, 3*num_heads*hd_pad] bf16 slab (q|k|v per-head packed).
    Returns [batch*n_pad, num_heads*hd_pad] bf16 -- no head split/merge copies."""
    tq = tk = seq_tile
    nqb = n_pad // tq
    nkb = n_pad // tk
    heads = num_heads
    grid = (batch, heads, nqb, nkb)
    need_mask = n_pad != n_real

    q_spec = pl.BlockSpec((tq, hd_pad), lambda b, h, qi, ki: (b * nqb + qi, h))
    k_spec = pl.BlockSpec((tk, hd_pad), lambda b, h, qi, ki: (b * nkb + ki, heads + h))
    v_spec = pl.BlockSpec((tk, hd_pad), lambda b, h, qi, ki: (b * nkb + ki, 2 * heads + h))
    o_spec = pl.BlockSpec((tq, hd_pad), lambda b, h, qi, ki: (b * nqb + qi, h))

    cost = pl.CostEstimate(
        flops=4 * batch * heads * n_pad * n_pad * hd_pad,
        transcendentals=batch * heads * n_pad * n_pad,
        bytes_accessed=4 * batch * n_pad * heads * hd_pad * 2)

    return pl.pallas_call(
        functools.partial(_flash_attn_kernel, n_real=n_real, tk=tk,
                          need_mask=need_mask),
        out_shape=jax.ShapeDtypeStruct((batch * n_pad, heads * hd_pad), jnp.bfloat16),
        grid=grid,
        in_specs=[q_spec, k_spec, v_spec],
        out_specs=o_spec,
        scratch_shapes=[
            pltpu.VMEM((tq, 1), jnp.float32),
            pltpu.VMEM((tq, 1), jnp.float32),
            pltpu.VMEM((tq, hd_pad), jnp.float32),
        ],
        compiler_params=pltpu.CompilerParams(
            dimension_semantics=("parallel", "parallel", "parallel", "arbitrary"),
            vmem_limit_bytes=_VMEM_LIMIT),
        cost_estimate=cost,
    )(qkv, qkv, qkv)


# ---------------------------------------------------------------------------
# Parameter construction (deterministic, synthetic) + inference prep
# ---------------------------------------------------------------------------
def init_params(key, *, in_chans, patch, resolution, embed_dim, depth, num_heads,
                mlp_ratio):
    gh, gw = resolution[0] // patch, resolution[1] // patch
    num_patches = gh * gw
    hidden = int(embed_dim * mlp_ratio)
    kdim = in_chans * patch * patch

    def normal(k, shape, std=0.02):
        return (std * jax.random.normal(k, shape)).astype(jnp.float32)

    keys = iter(jax.random.split(key, 8 + depth * 8))
    params = {
        # RADIO input conditioner (ImageNet mean/std), broadcast to im2col order (c,i,j)
        "cond_mean": jnp.repeat(
            jnp.array([0.485, 0.456, 0.406], jnp.float32)[:in_chans], patch * patch),
        "cond_istd": jnp.repeat(
            1.0 / jnp.array([0.229, 0.224, 0.225], jnp.float32)[:in_chans],
            patch * patch),
        # patch-embed conv as matmul: weight [C*p*p, D], bias [D]
        "patch_w": normal(next(keys), (kdim, embed_dim)),
        "patch_b": jnp.zeros((embed_dim,), jnp.float32),
        "cls_token": normal(next(keys), (1, 1, embed_dim)),
        "pos_embed": normal(next(keys), (1, 1 + num_patches, embed_dim)),
        "norm_g": jnp.ones((embed_dim,), jnp.float32),
        "norm_b": jnp.zeros((embed_dim,), jnp.float32),
        "blocks": [],
    }
    for _ in range(depth):
        params["blocks"].append({
            "ln1_g": jnp.ones((embed_dim,), jnp.float32),
            "ln1_b": jnp.zeros((embed_dim,), jnp.float32),
            "qkv_w": normal(next(keys), (embed_dim, 3 * embed_dim)),
            "qkv_b": jnp.zeros((3 * embed_dim,), jnp.float32),
            "proj_w": normal(next(keys), (embed_dim, embed_dim)),
            "proj_b": jnp.zeros((embed_dim,), jnp.float32),
            "ln2_g": jnp.ones((embed_dim,), jnp.float32),
            "ln2_b": jnp.zeros((embed_dim,), jnp.float32),
            "fc1_w": normal(next(keys), (embed_dim, hidden)),
            "fc1_b": jnp.zeros((hidden,), jnp.float32),
            "fc2_w": normal(next(keys), (embed_dim * 0 + hidden, embed_dim)),
            "fc2_b": jnp.zeros((embed_dim,), jnp.float32),
        })
    return params


def prepare_inference_params(params, *, num_heads):
    """Offline weight packing:
      * fold the input conditioner into the patch-embed weights,
      * fold the attention scale into the q columns of qkv_w / qkv_b,
      * zero-pad head_dim -> multiple of 128 in qkv_w columns and proj_w rows
        (lane-dense attention output, full-depth QK^T contraction),
      * cast all matmul weights to bf16 (halves weight DMA, full MXU rate)."""
    d = params["patch_w"].shape[1]
    hd = d // num_heads
    hd_pad = _round_up(hd, 128)
    scale = 1.0 / math.sqrt(hd)

    p = dict(params)
    mean, istd = params["cond_mean"], params["cond_istd"]
    w = params["patch_w"]
    # (x - mean) * istd @ W + b  ==  x @ (istd[:,None] * W) + (b - (mean*istd) @ W)
    p["patch_w"] = (istd[:, None] * w).astype(jnp.bfloat16)
    p["patch_b"] = params["patch_b"] - (mean * istd) @ w

    blocks = []
    for blk in params["blocks"]:
        nb = dict(blk)
        qw = blk["qkv_w"].reshape(d, 3, num_heads, hd)
        qb = blk["qkv_b"].reshape(3, num_heads, hd)
        qw = qw.at[:, 0].multiply(scale)
        qb = qb.at[0].multiply(scale)
        qw_pad = jnp.zeros((d, 3, num_heads, hd_pad), jnp.float32).at[..., :hd].set(qw)
        qb_pad = jnp.zeros((3, num_heads, hd_pad), jnp.float32).at[..., :hd].set(qb)
        nb["qkv_w"] = qw_pad.reshape(d, 3 * num_heads * hd_pad).astype(jnp.bfloat16)
        nb["qkv_b"] = qb_pad.reshape(3 * num_heads * hd_pad)

        pw = blk["proj_w"].reshape(num_heads, hd, d)
        pw_pad = jnp.zeros((num_heads, hd_pad, d), jnp.float32).at[:, :hd, :].set(pw)
        nb["proj_w"] = pw_pad.reshape(num_heads * hd_pad, d).astype(jnp.bfloat16)

        nb["fc1_w"] = blk["fc1_w"].astype(jnp.bfloat16)
        nb["fc2_w"] = blk["fc2_w"].astype(jnp.bfloat16)
        blocks.append(nb)
    p["blocks"] = blocks
    return p


# ---------------------------------------------------------------------------
# Forward pass
# ---------------------------------------------------------------------------
def cradio_v2_forward(params, x, *, resolution, patch, num_heads):
    b, c, h, w = x.shape
    if (h, w) != tuple(resolution):
        # RADIOWrapper resizes the input to its configured resolution (glue).
        x = jax.image.resize(x, (b, c) + tuple(resolution), method="bilinear")
        h, w = resolution
    p = patch
    gh, gw = h // p, w // p
    d = params["patch_w"].shape[1]
    hd_pad = params["blocks"][0]["qkv_w"].shape[1] // (3 * num_heads)

    # im2col patchify (glue): NCHW -> [B*nP, C*p*p] with (c, i, j) flatten order,
    # matching the PyTorch conv weight reshape [D, C*p*p].
    xp = (x.reshape(b, c, gh, p, gw, p)
            .transpose(0, 2, 4, 1, 3, 5)
            .reshape(b * gh * gw, c * p * p)
            .astype(jnp.float32))
    m0 = xp.shape[0]
    m0_pad = _round_up(m0, _ROW_Q)

    # Patch embed (conditioner already folded into the weights).
    tokens = pallas_matmul(_pad_rows(xp, m0_pad), params["patch_w"],
                           params["patch_b"])[:m0]
    tokens = tokens.reshape(b, gh * gw, d)

    cls = jnp.broadcast_to(params["cls_token"], (b, 1, d))
    seq = jnp.concatenate([cls, tokens], axis=1) + params["pos_embed"]
    n = seq.shape[1]

    # Pad the per-batch sequence to the attention tile so every kernel sees
    # row-block aligned slabs and flash tiling never collapses for odd N.
    seq_tile = 128 if n >= 128 else _round_up(n, _ROW_Q)
    n_pad = _round_up(n, seq_tile)
    seq = jnp.pad(seq, ((0, 0), (0, n_pad - n), (0, 0)))
    m = b * n_pad
    hstate = seq.reshape(m, d)          # residual stream, f32 [B*Npad, D]

    for blk in params["blocks"]:
        # --- multi-head self attention (pre-norm; LN1 fused into the QKV matmul,
        #     scale folded into q, heads packed per 128-lane column blocks) ---
        qkv = pallas_ln_linear(hstate, blk["ln1_g"], blk["ln1_b"],
                               blk["qkv_w"], blk["qkv_b"])      # [M, 3*H*hd_pad] bf16
        attn = pallas_flash_attention(qkv, batch=b, n_pad=n_pad, n_real=n,
                                      num_heads=num_heads, hd_pad=hd_pad,
                                      seq_tile=seq_tile)        # [M, H*hd_pad] bf16
        hstate = pallas_matmul(attn, blk["proj_w"], blk["proj_b"],
                               residual=hstate)                 # [M, D] f32
        # --- fused MLP: LN2 + fc1 + GELU + fc2 + residual, hidden stays in VMEM ---
        hstate = pallas_mlp(hstate, blk["ln2_g"], blk["ln2_b"],
                            blk["fc1_w"], blk["fc1_b"],
                            blk["fc2_w"], blk["fc2_b"])         # [M, D] f32

    hstate = pallas_layernorm(hstate, params["norm_g"], params["norm_b"])
    hstate = hstate.reshape(b, n_pad, d)[:, :n]
    summary = hstate[:, 0, :]                                              # [B, D]
    spatial = hstate[:, 1:, :].reshape(b, gh, gw, d).transpose(0, 3, 1, 2)  # NCHW
    return summary, spatial


# ---------------------------------------------------------------------------
if __name__ == "__main__":
    # Small synthetic configuration consistent with a (scaled-down) ViT/16 RADIO.
    B, C = 2, 3
    RESOLUTION = (32, 32)
    PATCH = 16
    EMBED_DIM = 64
    DEPTH = 2
    NUM_HEADS = 4
    MLP_RATIO = 4.0

    key = jax.random.PRNGKey(0)
    pkey, xkey = jax.random.split(key)
    params = init_params(pkey, in_chans=C, patch=PATCH, resolution=RESOLUTION,
                         embed_dim=EMBED_DIM, depth=DEPTH, num_heads=NUM_HEADS,
                         mlp_ratio=MLP_RATIO)
    params = prepare_inference_params(params, num_heads=NUM_HEADS)
    x = jax.random.uniform(xkey, (B, C, RESOLUTION[0], RESOLUTION[1]),
                           dtype=jnp.float32)

    fwd = jax.jit(functools.partial(cradio_v2_forward, resolution=RESOLUTION,
                                    patch=PATCH, num_heads=NUM_HEADS))
    summary, spatial = fwd(params, x)
    jax.block_until_ready((summary, spatial))

    assert summary.shape == (B, EMBED_DIM)
    assert spatial.shape == (B, EMBED_DIM,
                             RESOLUTION[0] // PATCH, RESOLUTION[1] // PATCH)
    assert bool(jnp.all(jnp.isfinite(summary))) and bool(jnp.all(jnp.isfinite(spatial)))
    print("KERNEL_OK")
</pallas_src>

<mosaic_0001>
module attributes {stable_mosaic.version = 11 : i64} {
  func.func @_matmul_kernel(%arg0: i32, %arg1: i32, %arg2: i32, %arg3: memref<16x384xf32, #tpu.memory_space<vmem>>, %arg4: memref<384x64xbf16, #tpu.memory_space<vmem>>, %arg5: memref<1x64xf32, #tpu.memory_space<vmem>>, %arg6: memref<16x64xf32, #tpu.memory_space<vmem>>, %arg7: memref<16x64xf32, #tpu.memory_space<vmem>>) attributes {dimension_semantics = [#tpu.dimension_semantics<parallel>, #tpu.dimension_semantics<parallel>, #tpu.dimension_semantics<arbitrary>], iteration_bounds = array<i64: 1, 1, 2>, scalar_prefetch = 0 : i64, scratch_operands = 1 : i64, tpu.core_type = #tpu.core_type<tc>, window_params = [{transform_indices = @transform_0, window_bounds = array<i64: 16, 384>}, {transform_indices = @transform_1, window_bounds = array<i64: 384, 64>}, {transform_indices = @transform_2, window_bounds = array<i64: 1, 64>}, {transform_indices = @transform_3, window_bounds = array<i64: 16, 64>}]} {
    %c0_i32 = arith.constant 0 : i32
    %0 = arith.cmpi eq, %arg2, %c0_i32 : i32
    %1 = arith.extui %0 : i1 to i32
    %c0_i32_0 = arith.constant 0 : i32
    %2 = arith.cmpi ne, %1, %c0_i32_0 : i32
    scf.if %2 {
      %cst_9 = arith.constant 0.000000e+00 : f32
      %13 = vector.broadcast %cst_9 : f32 to vector<16x64xf32>
      %c0_10 = arith.constant 0 : index
      %c0_11 = arith.constant 0 : index
      %14 = vector.load %arg7[%c0_10, %c0_11] : memref<16x64xf32, #tpu.memory_space<vmem>>, vector<16x64xf32>
      tpu.vector_store %arg7[%c0_10, %c0_11], %13 {strides = array<i32>} : memref<16x64xf32, #tpu.memory_space<vmem>>, vector<16x64xf32>,
    } else {
    }
    %c0 = arith.constant 0 : index
    %c0_1 = arith.constant 0 : index
    %3 = vector.load %arg7[%c0, %c0_1] : memref<16x64xf32, #tpu.memory_space<vmem>>, vector<16x64xf32>
    %c0_2 = arith.constant 0 : index
    %c0_3 = arith.constant 0 : index
    %4 = vector.load %arg3[%c0_2, %c0_3] : memref<16x384xf32, #tpu.memory_space<vmem>>, vector<16x384xf32>
    %5 = arith.truncf %4 : vector<16x384xf32> to vector<16x384xbf16>
    %c0_4 = arith.constant 0 : index
    %c0_5 = arith.constant 0 : index
    %6 = vector.load %arg4[%c0_4, %c0_5] : memref<384x64xbf16, #tpu.memory_space<vmem>>, vector<384x64xbf16>
    %cst = arith.constant dense<0.000000e+00> : vector<16x64xf32>
    %7 = tpu.matmul %5, %6, %cst {dimension_numbers = #tpu.dot_dimension_numbers<[1], [0], [0], [1], [0, 0, 1, 1], [], []>} : vector<16x384xbf16>, vector<384x64xbf16>, vector<16x64xf32> -> vector<16x64xf32>
    %8 = arith.addf %3, %7 : vector<16x64xf32>
    %c0_6 = arith.constant 0 : index
    %c0_7 = arith.constant 0 : index
    %9 = vector.load %arg7[%c0_6, %c0_7] : memref<16x64xf32, #tpu.memory_space<vmem>>, vector<16x64xf32>
    tpu.vector_store %arg7[%c0_6, %c0_7], %8 {strides = array<i32>} : memref<16x64xf32, #tpu.memory_space<vmem>>, vector<16x64xf32>,
    %c1_i32 = arith.constant 1 : i32
    %10 = arith.cmpi eq, %arg2, %c1_i32 : i32
    %11 = arith.extui %10 : i1 to i32
    %c0_i32_8 = arith.constant 0 : i32
    %12 = arith.cmpi ne, %11, %c0_i32_8 : i32
    scf.if %12 {
      %c0_9 = arith.constant 0 : index
      %c0_10 = arith.constant 0 : index
      %13 = vector.load %arg7[%c0_9, %c0_10] : memref<16x64xf32, #tpu.memory_space<vmem>>, vector<16x64xf32>
      %c0_11 = arith.constant 0 : index
      %c0_12 = arith.constant 0 : index
      %14 = vector.load %arg5[%c0_11, %c0_12] : memref<1x64xf32, #tpu.memory_space<vmem>>, vector<1x64xf32>
      %15 = vector.broadcast %14 : vector<1x64xf32> to vector<16x64xf32>
      %16 = arith.addf %13, %15 : vector<16x64xf32>
      %c0_13 = arith.constant 0 : index
      %c0_14 = arith.constant 0 : index
      %17 = vector.load %arg6[%c0_13, %c0_14] : memref<16x64xf32, #tpu.memory_space<vmem>>, vector<16x64xf32>
      tpu.vector_store %arg6[%c0_13, %c0_14], %16 {strides = array<i32>} : memref<16x64xf32, #tpu.memory_space<vmem>>, vector<16x64xf32>,
    } else {
    }
    return
  }
  func.func @transform_0(%arg0: i32, %arg1: i32, %arg2: i32) -> (i32, i32) {
    %c0_i32 = arith.constant 0 : i32
    return %arg0, %arg2 : i32, i32
  }
  func.func @transform_1(%arg0: i32, %arg1: i32, %arg2: i32) -> (i32, i32) {
    %c0_i32 = arith.constant 0 : i32
    return %arg2, %arg1 : i32, i32
  }
  func.func @transform_2(%arg0: i32, %arg1: i32, %arg2: i32) -> (i32, i32) {
    %c0_i32 = arith.constant 0 : i32
    %c0_i32_0 = arith.constant 0 : i32
    return %c0_i32, %arg1 : i32, i32
  }
  func.func @transform_3(%arg0: i32, %arg1: i32, %arg2: i32) -> (i32, i32) {
    %c0_i32 = arith.constant 0 : i32
    return %arg0, %arg1 : i32, i32
  }
}

module attributes {stable_mosaic.version = 11 : i64} {
  func.func @_ln_linear_kernel(%arg0: i32, %arg1: i32, %arg2: memref<32x64xf32, #tpu.memory_space<vmem>>, %arg3: memref<1x64xf32, #tpu.memory_space<vmem>>, %arg4: memref<1x64xf32, #tpu.memory_space<vmem>>, %arg5: memref<64x768xbf16, #tpu.memory_space<vmem>>, %arg6: memref<1x768xf32, #tpu.memory_space<vmem>>, %arg7: memref<32x768xbf16, #tpu.memory_space<vmem>>, %arg8: memref<32x64xbf16, #tpu.memory_space<vmem>>) attributes {dimension_semantics = [#tpu.dimension_semantics<parallel>, #tpu.dimension_semantics<arbitrary>], iteration_bounds = array<i64: 1, 2>, scalar_prefetch = 0 : i64, scratch_operands = 1 : i64, tpu.core_type = #tpu.core_type<tc>, window_params = [{transform_indices = @transform_0, window_bounds = array<i64: 32, 64>}, {pipeline_mode = #tpu.pipeline_mode<synchronous>, transform_indices = @transform_1, window_bounds = array<i64: 1, 64>}, {pipeline_mode = #tpu.pipeline_mode<synchronous>, transform_indices = @transform_2, window_bounds = array<i64: 1, 64>}, {transform_indices = @transform_3, window_bounds = array<i64: 64, 768>}, {transform_indices = @transform_4, window_bounds = array<i64: 1, 768>}, {transform_indices = @transform_5, window_bounds = array<i64: 32, 768>}]} {
    %c0_i32 = arith.constant 0 : i32
    %0 = arith.cmpi eq, %arg1, %c0_i32 : i32
    %1 = arith.extui %0 : i1 to i32
    %c0_i32_0 = arith.constant 0 : i32
    %2 = arith.cmpi ne, %1, %c0_i32_0 : i32
    scf.if %2 {
      %c0_8 = arith.constant 0 : index
      %c0_9 = arith.constant 0 : index
      %11 = vector.load %arg2[%c0_8, %c0_9] : memref<32x64xf32, #tpu.memory_space<vmem>>, vector<32x64xf32>
      %cst_10 = arith.constant dense<0.000000e+00> : vector<32xf32>
      %12 = vector.multi_reduction <add>, %11, %cst_10 [1] : vector<32x64xf32> to vector<32xf32>
      %13 = vector.shape_cast %12 : vector<32xf32> to vector<32x1xf32>
      %cst_11 = arith.constant 6.400000e+01 : f32
      %14 = vector.broadcast %cst_11 : f32 to vector<32x1xf32>
      %15 = arith.divf %13, %14 : vector<32x1xf32>
      %16 = vector.broadcast %15 : vector<32x1xf32> to vector<32x64xf32>
      %17 = arith.subf %11, %16 : vector<32x64xf32>
      %18 = arith.mulf %17, %17 : vector<32x64xf32>
      %cst_12 = arith.constant dense<0.000000e+00> : vector<32xf32>
      %19 = vector.multi_reduction <add>, %18, %cst_12 [1] : vector<32x64xf32> to vector<32xf32>
      %20 = vector.shape_cast %19 : vector<32xf32> to vector<32x1xf32>
      %cst_13 = arith.constant 6.400000e+01 : f32
      %21 = vector.broadcast %cst_13 : f32 to vector<32x1xf32>
      %22 = arith.divf %20, %21 : vector<32x1xf32>
      %23 = vector.broadcast %15 : vector<32x1xf32> to vector<32x64xf32>
      %24 = arith.subf %11, %23 : vector<32x64xf32>
      %cst_14 = arith.constant 9.99999997E-7 : f32
      %25 = vector.broadcast %cst_14 : f32 to vector<32x1xf32>
      %26 = arith.addf %22, %25 : vector<32x1xf32>
      %27 = math.rsqrt %26 : vector<32x1xf32>
      %28 = vector.broadcast %27 : vector<32x1xf32> to vector<32x64xf32>
      %29 = arith.mulf %24, %28 : vector<32x64xf32>
      %c0_15 = arith.constant 0 : index
      %c0_16 = arith.constant 0 : index
      %30 = vector.load %arg3[%c0_15, %c0_16] : memref<1x64xf32, #tpu.memory_space<vmem>>, vector<1x64xf32>
      %31 = vector.broadcast %30 : vector<1x64xf32> to vector<32x64xf32>
      %32 = arith.mulf %29, %31 : vector<32x64xf32>
      %c0_17 = arith.constant 0 : index
      %c0_18 = arith.constant 0 : index
      %33 = vector.load %arg4[%c0_17, %c0_18] : memref<1x64xf32, #tpu.memory_space<vmem>>, vector<1x64xf32>
      %34 = vector.broadcast %33 : vector<1x64xf32> to vector<32x64xf32>
      %35 = arith.addf %32, %34 : vector<32x64xf32>
      %36 = arith.truncf %35 : vector<32x64xf32> to vector<32x64xbf16>
      %c0_19 = arith.constant 0 : index
      %c0_20 = arith.constant 0 : index
      %37 = vector.load %arg8[%c0_19, %c0_20] : memref<32x64xbf16, #tpu.memory_space<vmem>>, vector<32x64xbf16>
      tpu.vector_store %arg8[%c0_19, %c0_20], %36 {strides = array<i32>} : memref<32x64xbf16, #tpu.memory_space<vmem>>, vector<32x64xbf16>,
    } else {
    }
    %c0 = arith.constant 0 : index
    %c0_1 = arith.constant 0 : index
    %3 = vector.load %arg8[%c0, %c0_1] : memref<32x64xbf16, #tpu.memory_space<vmem>>, vector<32x64xbf16>
    %c0_2 = arith.constant 0 : index
    %c0_3 = arith.constant 0 : index
    %4 = vector.load %arg5[%c0_2, %c0_3] : memref<64x768xbf16, #tpu.memory_space<vmem>>, vector<64x768xbf16>
    %cst = arith.constant dense<0.000000e+00> : vector<32x768xf32>
    %5 = tpu.matmul %3, %4, %cst {dimension_numbers = #tpu.dot_dimension_numbers<[1], [0], [0], [1], [0, 0, 1, 1], [], []>} : vector<32x64xbf16>, vector<64x768xbf16>, vector<32x768xf32> -> vector<32x768xf32>
    %c0_4 = arith.constant 0 : index
    %c0_5 = arith.constant 0 : index
    %6 = vector.load %arg6[%c0_4, %c0_5] : memref<1x768xf32, #tpu.memory_space<vmem>>, vector<1x768xf32>
    %7 = vector.broadcast %6 : vector<1x768xf32> to vector<32x768xf32>
    %8 = arith.addf %5, %7 : vector<32x768xf32>
    %9 = arith.truncf %8 : vector<32x768xf32> to vector<32x768xbf16>
    %c0_6 = arith.constant 0 : index
    %c0_7 = arith.constant 0 : index
    %10 = vector.load %arg7[%c0_6, %c0_7] : memref<32x768xbf16, #tpu.memory_space<vmem>>, vector<32x768xbf16>
    tpu.vector_store %arg7[%c0_6, %c0_7], %9 {strides = array<i32>} : memref<32x768xbf16, #tpu.memory_space<vmem>>, vector<32x768xbf16>,
    return
  }
  func.func @transform_0(%arg0: i32, %arg1: i32) -> (i32, i32) {
    %c0_i32 = arith.constant 0 : i32
    %c0_i32_0 = arith.constant 0 : i32
    return %arg0, %c0_i32 : i32, i32
  }
  func.func @transform_1(%arg0: i32, %arg1: i32) -> (i32, i32) {
    %c0_i32 = arith.constant 0 : i32
    %c0_i32_0 = arith.constant 0 : i32
    %c0_i32_1 = arith.constant 0 : i32
    return %c0_i32, %c0_i32_0 : i32, i32
  }
  func.func @transform_2(%arg0: i32, %arg1: i32) -> (i32, i32) {
    %c0_i32 = arith.constant 0 : i32
    %c0_i32_0 = arith.constant 0 : i32
    %c0_i32_1 = arith.constant 0 : i32
    return %c0_i32, %c0_i32_0 : i32, i32
  }
  func.func @transform_3(%arg0: i32, %arg1: i32) -> (i32, i32) {
    %c0_i32 = arith.constant 0 : i32
    %c0_i32_0 = arith.constant 0 : i32
    return %c0_i32, %arg1 : i32, i32
  }
  func.func @transform_4(%arg0: i32, %arg1: i32) -> (i32, i32) {
    %c0_i32 = arith.constant 0 : i32
    %c0_i32_0 = arith.constant 0 : i32
    return %c0_i32, %arg1 : i32, i32
  }
  func.func @transform_5(%arg0: i32, %arg1: i32) -> (i32, i32) {
    %c0_i32 = arith.constant 0 : i32
    return %arg0, %arg1 : i32, i32
  }
}

module attributes {stable_mosaic.version = 11 : i64} {
  func.func @_flash_attn_kernel(%arg0: i32, %arg1: i32, %arg2: i32, %arg3: i32, %arg4: memref<16x128xbf16, #tpu.memory_space<vmem>>, %arg5: memref<16x128xbf16, #tpu.memory_space<vmem>>, %arg6: memref<16x128xbf16, #tpu.memory_space<vmem>>, %arg7: memref<16x128xbf16, #tpu.memory_space<vmem>>, %arg8: memref<16x1xf32, #tpu.memory_space<vmem>>, %arg9: memref<16x1xf32, #tpu.memory_space<vmem>>, %arg10: memref<16x128xf32, #tpu.memory_space<vmem>>) attributes {dimension_semantics = [#tpu.dimension_semantics<parallel>, #tpu.dimension_semantics<parallel>, #tpu.dimension_semantics<parallel>, #tpu.dimension_semantics<arbitrary>], iteration_bounds = array<i64: 2, 4, 1, 1>, scalar_prefetch = 0 : i64, scratch_operands = 3 : i64, tpu.core_type = #tpu.core_type<tc>, window_params = [{transform_indices = @transform_0, window_bounds = array<i64: 16, 128>}, {transform_indices = @transform_1, window_bounds = array<i64: 16, 128>}, {transform_indices = @transform_2, window_bounds = array<i64: 16, 128>}, {transform_indices = @transform_3, window_bounds = array<i64: 16, 128>}]} {
    %c0_i32 = arith.constant 0 : i32
    %0 = arith.cmpi eq, %arg3, %c0_i32 : i32
    %1 = arith.extui %0 : i1 to i32
    %c0_i32_0 = arith.constant 0 : i32
    %2 = arith.cmpi ne, %1, %c0_i32_0 : i32
    scf.if %2 {
      %cst_26 = arith.constant 0xFF800000 : f32
      %42 = vector.broadcast %cst_26 : f32 to vector<16x1xf32>
      %c0_27 = arith.constant 0 : index
      %c0_28 = arith.constant 0 : index
      %43 = vector.load %arg8[%c0_27, %c0_28] : memref<16x1xf32, #tpu.memory_space<vmem>>, vector<16x1xf32>
      tpu.vector_store %arg8[%c0_27, %c0_28], %42 {strides = array<i32>} : memref<16x1xf32, #tpu.memory_space<vmem>>, vector<16x1xf32>,
      %cst_29 = arith.constant 0.000000e+00 : f32
      %44 = vector.broadcast %cst_29 : f32 to vector<16x1xf32>
      %c0_30 = arith.constant 0 : index
      %c0_31 = arith.constant 0 : index
      %45 = vector.load %arg9[%c0_30, %c0_31] : memref<16x1xf32, #tpu.memory_space<vmem>>, vector<16x1xf32>
      tpu.vector_store %arg9[%c0_30, %c0_31], %44 {strides = array<i32>} : memref<16x1xf32, #tpu.memory_space<vmem>>, vector<16x1xf32>,
      %cst_32 = arith.constant 0.000000e+00 : f32
      %46 = vector.broadcast %cst_32 : f32 to vector<16x128xf32>
      %c0_33 = arith.constant 0 : index
      %c0_34 = arith.constant 0 : index
      %47 = vector.load %arg10[%c0_33, %c0_34] : memref<16x128xf32, #tpu.memory_space<vmem>>, vector<16x128xf32>
      tpu.vector_store %arg10[%c0_33, %c0_34], %46 {strides = array<i32>} : memref<16x128xf32, #tpu.memory_space<vmem>>, vector<16x128xf32>,
    } else {
    }
    %c0 = arith.constant 0 : index
    %c0_1 = arith.constant 0 : index
    %3 = vector.load %arg4[%c0, %c0_1] : memref<16x128xbf16, #tpu.memory_space<vmem>>, vector<16x128xbf16>
    %c0_2 = arith.constant 0 : index
    %c0_3 = arith.constant 0 : index
    %4 = vector.load %arg5[%c0_2, %c0_3] : memref<16x128xbf16, #tpu.memory_space<vmem>>, vector<16x128xbf16>
    %cst = arith.constant dense<0.000000e+00> : vector<16x16xf32>
    %5 = tpu.matmul %3, %4, %cst {dimension_numbers = #tpu.dot_dimension_numbers<[1], [1], [0], [0], [0, 0, 1, 0], [], []>} : vector<16x128xbf16>, vector<16x128xbf16>, vector<16x16xf32> -> vector<16x16xf32>
    %c16_i32 = arith.constant 16 : i32
    %6 = arith.muli %arg3, %c16_i32 : i32
    %7 = tpu.iota {dimensions = array<i32: 1>} : vector<16x16xi32>
    %8 = vector.broadcast %6 : i32 to vector<16x16xi32>
    %9 = arith.addi %8, %7 : vector<16x16xi32>
    %c5_i32 = arith.constant 5 : i32
    %10 = vector.broadcast %c5_i32 : i32 to vector<16x16xi32>
    %11 = arith.cmpi slt, %9, %10 : vector<16x16xi32>
    %cst_4 = arith.constant -1.000000e+30 : f32
    %12 = vector.broadcast %cst_4 : f32 to vector<16x16xf32>
    %13 = arith.select %11, %5, %12 : vector<16x16xi1>, vector<16x16xf32>
    %c0_5 = arith.constant 0 : index
    %c0_6 = arith.constant 0 : index
    %14 = vector.load %arg8[%c0_5, %c0_6] : memref<16x1xf32, #tpu.memory_space<vmem>>, vector<16x1xf32>
    %cst_7 = arith.constant dense<0xFF800000> : vector<16xf32>
    %15 = vector.multi_reduction <maximumf>, %13, %cst_7 [1] : vector<16x16xf32> to vector<16xf32>
    %16 = vector.shape_cast %15 : vector<16xf32> to vector<16x1xf32>
    %17 = arith.maximumf %14, %16 : vector<16x1xf32>
    %c0_8 = arith.constant 0 : index
    %c0_9 = arith.constant 0 : index
    %18 = vector.load %arg8[%c0_8, %c0_9] : memref<16x1xf32, #tpu.memory_space<vmem>>, vector<16x1xf32>
    %19 = arith.subf %18, %17 : vector<16x1xf32>
    %20 = math.exp %19 : vector<16x1xf32>
    %21 = vector.broadcast %17 : vector<16x1xf32> to vector<16x16xf32>
    %22 = arith.subf %13, %21 : vector<16x16xf32>
    %23 = math.exp %22 : vector<16x16xf32>
    %c0_10 = arith.constant 0 : index
    %c0_11 = arith.constant 0 : index
    %24 = vector.load %arg9[%c0_10, %c0_11] : memref<16x1xf32, #tpu.memory_space<vmem>>, vector<16x1xf32>
    %25 = arith.mulf %20, %24 : vector<16x1xf32>
    %cst_12 = arith.constant dense<0.000000e+00> : vector<16xf32>
    %26 = vector.multi_reduction <add>, %23, %cst_12 [1] : vector<16x16xf32> to vector<16xf32>
    %27 = vector.shape_cast %26 : vector<16xf32> to vector<16x1xf32>
    %28 = arith.addf %25, %27 : vector<16x1xf32>
    %c0_13 = arith.constant 0 : index
    %c0_14 = arith.constant 0 : index
    %29 = vector.load %arg9[%c0_13, %c0_14] : memref<16x1xf32, #tpu.memory_space<vmem>>, vector<16x1xf32>
    tpu.vector_store %arg9[%c0_13, %c0_14], %28 {strides = array<i32>} : memref<16x1xf32, #tpu.memory_space<vmem>>, vector<16x1xf32>,
    %c0_15 = arith.constant 0 : index
    %c0_16 = arith.constant 0 : index
    %30 = vector.load %arg10[%c0_15, %c0_16] : memref<16x128xf32, #tpu.memory_space<vmem>>, vector<16x128xf32>
    %31 = vector.broadcast %20 : vector<16x1xf32> to vector<16x128xf32>
    %32 = arith.mulf %31, %30 : vector<16x128xf32>
    %33 = arith.truncf %23 : vector<16x16xf32> to vector<16x16xbf16>
    %c0_17 = arith.constant 0 : index
    %c0_18 = arith.constant 0 : index
    %34 = vector.load %arg6[%c0_17, %c0_18] : memref<16x128xbf16, #tpu.memory_space<vmem>>, vector<16x128xbf16>
    %cst_19 = arith.constant dense<0.000000e+00> : vector<16x128xf32>
    %35 = tpu.matmul %33, %34, %cst_19 {dimension_numbers = #tpu.dot_dimension_numbers<[1], [0], [0], [1], [0, 0, 1, 1], [], []>} : vector<16x16xbf16>, vector<16x128xbf16>, vector<16x128xf32> -> vector<16x128xf32>
    %36 = arith.addf %32, %35 : vector<16x128xf32>
    %c0_20 = arith.constant 0 : index
    %c0_21 = arith.constant 0 : index
    %37 = vector.load %arg10[%c0_20, %c0_21] : memref<16x128xf32, #tpu.memory_space<vmem>>, vector<16x128xf32>
    tpu.vector_store %arg10[%c0_20, %c0_21], %36 {strides = array<i32>} : memref<16x128xf32, #tpu.memory_space<vmem>>, vector<16x128xf32>,
    %c0_22 = arith.constant 0 : index
    %c0_23 = arith.constant 0 : index
    %38 = vector.load %arg8[%c0_22, %c0_23] : memref<16x1xf32, #tpu.memory_space<vmem>>, vector<16x1xf32>
    tpu.vector_store %arg8[%c0_22, %c0_23], %17 {strides = array<i32>} : memref<16x1xf32, #tpu.memory_space<vmem>>, vector<16x1xf32>,
    %c0_i32_24 = arith.constant 0 : i32
    %39 = arith.cmpi eq, %arg3, %c0_i32_24 : i32
    %40 = arith.extui %39 : i1 to i32
    %c0_i32_25 = arith.constant 0 : i32
    %41 = arith.cmpi ne, %40, %c0_i32_25 : i32
    scf.if %41 {
      %c0_26 = arith.constant 0 : index
      %c0_27 = arith.constant 0 : index
      %42 = vector.load %arg10[%c0_26, %c0_27] : memref<16x128xf32, #tpu.memory_space<vmem>>, vector<16x128xf32>
      %c0_28 = arith.constant 0 : index
      %c0_29 = arith.constant 0 : index
      %43 = vector.load %arg9[%c0_28, %c0_29] : memref<16x1xf32, #tpu.memory_space<vmem>>, vector<16x1xf32>
      %44 = tpu.reciprocal %43 {approx = true} : vector<16x1xf32> -> vector<16x1xf32>
      %45 = vector.broadcast %44 : vector<16x1xf32> to vector<16x128xf32>
      %46 = arith.mulf %42, %45 : vector<16x128xf32>
      %47 = arith.truncf %46 : vector<16x128xf32> to vector<16x128xbf16>
      %c0_30 = arith.constant 0 : index
      %c0_31 = arith.constant 0 : index
      %48 = vector.load %arg7[%c0_30, %c0_31] : memref<16x128xbf16, #tpu.memory_space<vmem>>, vector<16x128xbf16>
      tpu.vector_store %arg7[%c0_30, %c0_31], %47 {strides = array<i32>} : memref<16x128xbf16, #tpu.memory_space<vmem>>, vector<16x128xbf16>,
    } else {
    }
    return
  }
  func.func @transform_0(%arg0: i32, %arg1: i32, %arg2: i32, %arg3: i32) -> (i32, i32) {
    %c1_i32 = arith.constant 1 : i32
    %0 = arith.muli %arg0, %c1_i32 : i32
    %1 = arith.addi %0, %arg2 : i32
    %c0_i32 = arith.constant 0 : i32
    return %1, %arg1 : i32, i32
  }
  func.func @transform_1(%arg0: i32, %arg1: i32, %arg2: i32, %arg3: i32) -> (i32, i32) {
    %c1_i32 = arith.constant 1 : i32
    %0 = arith.muli %arg0, %c1_i32 : i32
    %1 = arith.addi %0, %arg3 : i32
    %c4_i32 = arith.constant 4 : i32
    %2 = arith.addi %c4_i32, %arg1 : i32
    %c0_i32 = arith.constant 0 : i32
    return %1, %2 : i32, i32
  }
  func.func @transform_2(%arg0: i32, %arg1: i32, %arg2: i32, %arg3: i32) -> (i32, i32) {
    %c1_i32 = arith.constant 1 : i32
    %0 = arith.muli %arg0, %c1_i32 : i32
    %1 = arith.addi %0, %arg3 : i32
    %c8_i32 = arith.constant 8 : i32
    %2 = arith.addi %c8_i32, %arg1 : i32
    %c0_i32 = arith.constant 0 : i32
    return %1, %2 : i32, i32
  }
  func.func @transform_3(%arg0: i32, %arg1: i32, %arg2: i32, %arg3: i32) -> (i32, i32) {
    %c1_i32 = arith.constant 1 : i32
    %0 = arith.muli %arg0, %c1_i32 : i32
    %1 = arith.addi %0, %arg2 : i32
    %c0_i32 = arith.constant 0 : i32
    return %1, %arg1 : i32, i32
  }
}

module attributes {stable_mosaic.version = 11 : i64} {
  func.func @_matmul_residual_kernel(%arg0: i32, %arg1: i32, %arg2: i32, %arg3: memref<32x512xbf16, #tpu.memory_space<vmem>>, %arg4: memref<512x64xbf16, #tpu.memory_space<vmem>>, %arg5: memref<1x64xf32, #tpu.memory_space<vmem>>, %arg6: memref<32x64xf32, #tpu.memory_space<vmem>>, %arg7: memref<32x64xf32, #tpu.memory_space<vmem>>, %arg8: memref<32x64xf32, #tpu.memory_space<vmem>>) attributes {dimension_semantics = [#tpu.dimension_semantics<parallel>, #tpu.dimension_semantics<parallel>, #tpu.dimension_semantics<arbitrary>], iteration_bounds = array<i64: 1, 1, 1>, scalar_prefetch = 0 : i64, scratch_operands = 1 : i64, tpu.core_type = #tpu.core_type<tc>, window_params = [{transform_indices = @transform_0, window_bounds = array<i64: 32, 512>}, {transform_indices = @transform_1, window_bounds = array<i64: 512, 64>}, {transform_indices = @transform_2, window_bounds = array<i64: 1, 64>}, {transform_indices = @transform_3, window_bounds = array<i64: 32, 64>}, {transform_indices = @transform_4, window_bounds = array<i64: 32, 64>}]} {
    %c0_i32 = arith.constant 0 : i32
    %0 = arith.cmpi eq, %arg2, %c0_i32 : i32
    %1 = arith.extui %0 : i1 to i32
    %c0_i32_0 = arith.constant 0 : i32
    %2 = arith.cmpi ne, %1, %c0_i32_0 : i32
    scf.if %2 {
      %cst_10 = arith.constant 0.000000e+00 : f32
      %12 = vector.broadcast %cst_10 : f32 to vector<32x64xf32>
      %c0_11 = arith.constant 0 : index
      %c0_12 = arith.constant 0 : index
      %13 = vector.load %arg8[%c0_11, %c0_12] : memref<32x64xf32, #tpu.memory_space<vmem>>, vector<32x64xf32>
      tpu.vector_store %arg8[%c0_11, %c0_12], %12 {strides = array<i32>} : memref<32x64xf32, #tpu.memory_space<vmem>>, vector<32x64xf32>,
    } else {
    }
    %c0 = arith.constant 0 : index
    %c0_1 = arith.constant 0 : index
    %3 = vector.load %arg8[%c0, %c0_1] : memref<32x64xf32, #tpu.memory_space<vmem>>, vector<32x64xf32>
    %c0_2 = arith.constant 0 : index
    %c0_3 = arith.constant 0 : index
    %4 = vector.load %arg3[%c0_2, %c0_3] : memref<32x512xbf16, #tpu.memory_space<vmem>>, vector<32x512xbf16>
    %c0_4 = arith.constant 0 : index
    %c0_5 = arith.constant 0 : index
    %5 = vector.load %arg4[%c0_4, %c0_5] : memref<512x64xbf16, #tpu.memory_space<vmem>>, vector<512x64xbf16>
    %cst = arith.constant dense<0.000000e+00> : vector<32x64xf32>
    %6 = tpu.matmul %4, %5, %cst {dimension_numbers = #tpu.dot_dimension_numbers<[1], [0], [0], [1], [0, 0, 1, 1], [], []>} : vector<32x512xbf16>, vector<512x64xbf16>, vector<32x64xf32> -> vector<32x64xf32>
    %7 = arith.addf %3, %6 : vector<32x64xf32>
    %c0_6 = arith.constant 0 : index
    %c0_7 = arith.constant 0 : index
    %8 = vector.load %arg8[%c0_6, %c0_7] : memref<32x64xf32, #tpu.memory_space<vmem>>, vector<32x64xf32>
    tpu.vector_store %arg8[%c0_6, %c0_7], %7 {strides = array<i32>} : memref<32x64xf32, #tpu.memory_space<vmem>>, vector<32x64xf32>,
    %c0_i32_8 = arith.constant 0 : i32
    %9 = arith.cmpi eq, %arg2, %c0_i32_8 : i32
    %10 = arith.extui %9 : i1 to i32
    %c0_i32_9 = arith.constant 0 : i32
    %11 = arith.cmpi ne, %10, %c0_i32_9 : i32
    scf.if %11 {
      %c0_10 = arith.constant 0 : index
      %c0_11 = arith.constant 0 : index
      %12 = vector.load %arg8[%c0_10, %c0_11] : memref<32x64xf32, #tpu.memory_space<vmem>>, vector<32x64xf32>
      %c0_12 = arith.constant 0 : index
      %c0_13 = arith.constant 0 : index
      %13 = vector.load %arg5[%c0_12, %c0_13] : memref<1x64xf32, #tpu.memory_space<vmem>>, vector<1x64xf32>
      %14 = vector.broadcast %13 : vector<1x64xf32> to vector<32x64xf32>
      %15 = arith.addf %12, %14 : vector<32x64xf32>
      %c0_14 = arith.constant 0 : index
      %c0_15 = arith.constant 0 : index
      %16 = vector.load %arg6[%c0_14, %c0_15] : memref<32x64xf32, #tpu.memory_space<vmem>>, vector<32x64xf32>
      %17 = arith.addf %15, %16 : vector<32x64xf32>
      %c0_16 = arith.constant 0 : index
      %c0_17 = arith.constant 0 : index
      %18 = vector.load %arg7[%c0_16, %c0_17] : memref<32x64xf32, #tpu.memory_space<vmem>>, vector<32x64xf32>
      tpu.vector_store %arg7[%c0_16, %c0_17], %17 {strides = array<i32>} : memref<32x64xf32, #tpu.memory_space<vmem>>, vector<32x64xf32>,
    } else {
    }
    return
  }
  func.func @transform_0(%arg0: i32, %arg1: i32, %arg2: i32) -> (i32, i32) {
    %c0_i32 = arith.constant 0 : i32
    return %arg0, %arg2 : i32, i32
  }
  func.func @transform_1(%arg0: i32, %arg1: i32, %arg2: i32) -> (i32, i32) {
    %c0_i32 = arith.constant 0 : i32
    return %arg2, %arg1 : i32, i32
  }
  func.func @transform_2(%arg0: i32, %arg1: i32, %arg2: i32) -> (i32, i32) {
    %c0_i32 = arith.constant 0 : i32
    %c0_i32_0 = arith.constant 0 : i32
    return %c0_i32, %arg1 : i32, i32
  }
  func.func @transform_3(%arg0: i32, %arg1: i32, %arg2: i32) -> (i32, i32) {
    %c0_i32 = arith.constant 0 : i32
    return %arg0, %arg1 : i32, i32
  }
  func.func @transform_4(%arg0: i32, %arg1: i32, %arg2: i32) -> (i32, i32) {
    %c0_i32 = arith.constant 0 : i32
    return %arg0, %arg1 : i32, i32
  }
}

module attributes {stable_mosaic.version = 11 : i64} {
  func.func @_mlp_kernel(%arg0: i32, %arg1: i32, %arg2: memref<32x64xf32, #tpu.memory_space<vmem>>, %arg3: memref<1x64xf32, #tpu.memory_space<vmem>>, %arg4: memref<1x64xf32, #tpu.memory_space<vmem>>, %arg5: memref<64x256xbf16, #tpu.memory_space<vmem>>, %arg6: memref<1x256xf32, #tpu.memory_space<vmem>>, %arg7: memref<256x64xbf16, #tpu.memory_space<vmem>>, %arg8: memref<1x64xf32, #tpu.memory_space<vmem>>, %arg9: memref<32x64xf32, #tpu.memory_space<vmem>>, %arg10: memref<32x64xbf16, #tpu.memory_space<vmem>>, %arg11: memref<32x64xf32, #tpu.memory_space<vmem>>) attributes {dimension_semantics = [#tpu.dimension_semantics<parallel>, #tpu.dimension_semantics<arbitrary>], iteration_bounds = array<i64: 1, 1>, scalar_prefetch = 0 : i64, scratch_operands = 2 : i64, tpu.core_type = #tpu.core_type<tc>, window_params = [{transform_indices = @transform_0, window_bounds = array<i64: 32, 64>}, {pipeline_mode = #tpu.pipeline_mode<synchronous>, transform_indices = @transform_1, window_bounds = array<i64: 1, 64>}, {pipeline_mode = #tpu.pipeline_mode<synchronous>, transform_indices = @transform_2, window_bounds = array<i64: 1, 64>}, {transform_indices = @transform_3, window_bounds = array<i64: 64, 256>}, {transform_indices = @transform_4, window_bounds = array<i64: 1, 256>}, {transform_indices = @transform_5, window_bounds = array<i64: 256, 64>}, {pipeline_mode = #tpu.pipeline_mode<synchronous>, transform_indices = @transform_6, window_bounds = array<i64: 1, 64>}, {transform_indices = @transform_7, window_bounds = array<i64: 32, 64>}]} {
    %c0_i32 = arith.constant 0 : i32
    %0 = arith.cmpi eq, %arg1, %c0_i32 : i32
    %1 = arith.extui %0 : i1 to i32
    %c0_i32_0 = arith.constant 0 : i32
    %2 = arith.cmpi ne, %1, %c0_i32_0 : i32
    scf.if %2 {
      %c0_19 = arith.constant 0 : index
      %c0_20 = arith.constant 0 : index
      %31 = vector.load %arg2[%c0_19, %c0_20] : memref<32x64xf32, #tpu.memory_space<vmem>>, vector<32x64xf32>
      %cst_21 = arith.constant dense<0.000000e+00> : vector<32xf32>
      %32 = vector.multi_reduction <add>, %31, %cst_21 [1] : vector<32x64xf32> to vector<32xf32>
      %33 = vector.shape_cast %32 : vector<32xf32> to vector<32x1xf32>
      %cst_22 = arith.constant 6.400000e+01 : f32
      %34 = vector.broadcast %cst_22 : f32 to vector<32x1xf32>
      %35 = arith.divf %33, %34 : vector<32x1xf32>
      %36 = vector.broadcast %35 : vector<32x1xf32> to vector<32x64xf32>
      %37 = arith.subf %31, %36 : vector<32x64xf32>
      %38 = arith.mulf %37, %37 : vector<32x64xf32>
      %cst_23 = arith.constant dense<0.000000e+00> : vector<32xf32>
      %39 = vector.multi_reduction <add>, %38, %cst_23 [1] : vector<32x64xf32> to vector<32xf32>
      %40 = vector.shape_cast %39 : vector<32xf32> to vector<32x1xf32>
      %cst_24 = arith.constant 6.400000e+01 : f32
      %41 = vector.broadcast %cst_24 : f32 to vector<32x1xf32>
      %42 = arith.divf %40, %41 : vector<32x1xf32>
      %43 = vector.broadcast %35 : vector<32x1xf32> to vector<32x64xf32>
      %44 = arith.subf %31, %43 : vector<32x64xf32>
      %cst_25 = arith.constant 9.99999997E-7 : f32
      %45 = vector.broadcast %cst_25 : f32 to vector<32x1xf32>
      %46 = arith.addf %42, %45 : vector<32x1xf32>
      %47 = math.rsqrt %46 : vector<32x1xf32>
      %48 = vector.broadcast %47 : vector<32x1xf32> to vector<32x64xf32>
      %49 = arith.mulf %44, %48 : vector<32x64xf32>
      %c0_26 = arith.constant 0 : index
      %c0_27 = arith.constant 0 : index
      %50 = vector.load %arg3[%c0_26, %c0_27] : memref<1x64xf32, #tpu.memory_space<vmem>>, vector<1x64xf32>
      %51 = vector.broadcast %50 : vector<1x64xf32> to vector<32x64xf32>
      %52 = arith.mulf %49, %51 : vector<32x64xf32>
      %c0_28 = arith.constant 0 : index
      %c0_29 = arith.constant 0 : index
      %53 = vector.load %arg4[%c0_28, %c0_29] : memref<1x64xf32, #tpu.memory_space<vmem>>, vector<1x64xf32>
      %54 = vector.broadcast %53 : vector<1x64xf32> to vector<32x64xf32>
      %55 = arith.addf %52, %54 : vector<32x64xf32>
      %56 = arith.truncf %55 : vector<32x64xf32> to vector<32x64xbf16>
      %c0_30 = arith.constant 0 : index
      %c0_31 = arith.constant 0 : index
      %57 = vector.load %arg10[%c0_30, %c0_31] : memref<32x64xbf16, #tpu.memory_space<vmem>>, vector<32x64xbf16>
      tpu.vector_store %arg10[%c0_30, %c0_31], %56 {strides = array<i32>} : memref<32x64xbf16, #tpu.memory_space<vmem>>, vector<32x64xbf16>,
      %cst_32 = arith.constant 0.000000e+00 : f32
      %58 = vector.broadcast %cst_32 : f32 to vector<32x64xf32>
      %c0_33 = arith.constant 0 : index
      %c0_34 = arith.constant 0 : index
      %59 = vector.load %arg11[%c0_33, %c0_34] : memref<32x64xf32, #tpu.memory_space<vmem>>, vector<32x64xf32>
      tpu.vector_store %arg11[%c0_33, %c0_34], %58 {strides = array<i32>} : memref<32x64xf32, #tpu.memory_space<vmem>>, vector<32x64xf32>,
    } else {
    }
    %c0 = arith.constant 0 : index
    %c0_1 = arith.constant 0 : index
    %3 = vector.load %arg10[%c0, %c0_1] : memref<32x64xbf16, #tpu.memory_space<vmem>>, vector<32x64xbf16>
    %c0_2 = arith.constant 0 : index
    %c0_3 = arith.constant 0 : index
    %4 = vector.load %arg5[%c0_2, %c0_3] : memref<64x256xbf16, #tpu.memory_space<vmem>>, vector<64x256xbf16>
    %cst = arith.constant dense<0.000000e+00> : vector<32x256xf32>
    %5 = tpu.matmul %3, %4, %cst {dimension_numbers = #tpu.dot_dimension_numbers<[1], [0], [0], [1], [0, 0, 1, 1], [], []>} : vector<32x64xbf16>, vector<64x256xbf16>, vector<32x256xf32> -> vector<32x256xf32>
    %c0_4 = arith.constant 0 : index
    %c0_5 = arith.constant 0 : index
    %6 = vector.load %arg6[%c0_4, %c0_5] : memref<1x256xf32, #tpu.memory_space<vmem>>, vector<1x256xf32>
    %7 = vector.broadcast %6 : vector<1x256xf32> to vector<32x256xf32>
    %8 = arith.addf %5, %7 : vector<32x256xf32>
    %cst_6 = arith.constant 5.000000e-01 : f32
    %9 = vector.broadcast %cst_6 : f32 to vector<32x256xf32>
    %10 = arith.mulf %9, %8 : vector<32x256xf32>
    %cst_7 = arith.constant 4.471500e-02 : f32
    %11 = vector.broadcast %cst_7 : f32 to vector<32x256xf32>
    %12 = arith.mulf %11, %8 : vector<32x256xf32>
    %13 = arith.mulf %12, %8 : vector<32x256xf32>
    %14 = arith.mulf %13, %8 : vector<32x256xf32>
    %15 = arith.addf %8, %14 : vector<32x256xf32>
    %cst_8 = arith.constant 0.797884583 : f32
    %16 = vector.broadcast %cst_8 : f32 to vector<32x256xf32>
    %17 = arith.mulf %16, %15 : vector<32x256xf32>
    %18 = math.tanh %17 : vector<32x256xf32>
    %cst_9 = arith.constant 1.000000e+00 : f32
    %19 = vector.broadcast %cst_9 : f32 to vector<32x256xf32>
    %20 = arith.addf %19, %18 : vector<32x256xf32>
    %21 = arith.mulf %10, %20 : vector<32x256xf32>
    %c0_10 = arith.constant 0 : index
    %c0_11 = arith.constant 0 : index
    %22 = vector.load %arg11[%c0_10, %c0_11] : memref<32x64xf32, #tpu.memory_space<vmem>>, vector<32x64xf32>
    %23 = arith.truncf %21 : vector<32x256xf32> to vector<32x256xbf16>
    %c0_12 = arith.constant 0 : index
    %c0_13 = arith.constant 0 : index
    %24 = vector.load %arg7[%c0_12, %c0_13] : memref<256x64xbf16, #tpu.memory_space<vmem>>, vector<256x64xbf16>
    %cst_14 = arith.constant dense<0.000000e+00> : vector<32x64xf32>
    %25 = tpu.matmul %23, %24, %cst_14 {dimension_numbers = #tpu.dot_dimension_numbers<[1], [0], [0], [1], [0, 0, 1, 1], [], []>} : vector<32x256xbf16>, vector<256x64xbf16>, vector<32x64xf32> -> vector<32x64xf32>
    %26 = arith.addf %22, %25 : vector<32x64xf32>
    %c0_15 = arith.constant 0 : index
    %c0_16 = arith.constant 0 : index
    %27 = vector.load %arg11[%c0_15, %c0_16] : memref<32x64xf32, #tpu.memory_space<vmem>>, vector<32x64xf32>
    tpu.vector_store %arg11[%c0_15, %c0_16], %26 {strides = array<i32>} : memref<32x64xf32, #tpu.memory_space<vmem>>, vector<32x64xf32>,
    %c0_i32_17 = arith.constant 0 : i32
    %28 = arith.cmpi eq, %arg1, %c0_i32_17 : i32
    %29 = arith.extui %28 : i1 to i32
    %c0_i32_18 = arith.constant 0 : i32
    %30 = arith.cmpi ne, %29, %c0_i32_18 : i32
    scf.if %30 {
      %c0_19 = arith.constant 0 : index
      %c0_20 = arith.constant 0 : index
      %31 = vector.load %arg11[%c0_19, %c0_20] : memref<32x64xf32, #tpu.memory_space<vmem>>, vector<32x64xf32>
      %c0_21 = arith.constant 0 : index
      %c0_22 = arith.constant 0 : index
      %32 = vector.load %arg8[%c0_21, %c0_22] : memref<1x64xf32, #tpu.memory_space<vmem>>, vector<1x64xf32>
      %33 = vector.broadcast %32 : vector<1x64xf32> to vector<32x64xf32>
      %34 = arith.addf %31, %33 : vector<32x64xf32>
      %c0_23 = arith.constant 0 : index
      %c0_24 = arith.constant 0 : index
      %35 = vector.load %arg2[%c0_23, %c0_24] : memref<32x64xf32, #tpu.memory_space<vmem>>, vector<32x64xf32>
      %36 = arith.addf %34, %35 : vector<32x64xf32>
      %c0_25 = arith.constant 0 : index
      %c0_26 = arith.constant 0 : index
      %37 = vector.load %arg9[%c0_25, %c0_26] : memref<32x64xf32, #tpu.memory_space<vmem>>, vector<32x64xf32>
      tpu.vector_store %arg9[%c0_25, %c0_26], %36 {strides = array<i32>} : memref<32x64xf32, #tpu.memory_space<vmem>>, vector<32x64xf32>,
    } else {
    }
    return
  }
  func.func @transform_0(%arg0: i32, %arg1: i32) -> (i32, i32) {
    %c0_i32 = arith.constant 0 : i32
    %c0_i32_0 = arith.constant 0 : i32
    return %arg0, %c0_i32 : i32, i32
  }
  func.func @transform_1(%arg0: i32, %arg1: i32) -> (i32, i32) {
    %c0_i32 = arith.constant 0 : i32
    %c0_i32_0 = arith.constant 0 : i32
    %c0_i32_1 = arith.constant 0 : i32
    return %c0_i32, %c0_i32_0 : i32, i32
  }
  func.func @transform_2(%arg0: i32, %arg1: i32) -> (i32, i32) {
    %c0_i32 = arith.constant 0 : i32
    %c0_i32_0 = arith.constant 0 : i32
    %c0_i32_1 = arith.constant 0 : i32
    return %c0_i32, %c0_i32_0 : i32, i32
  }
  func.func @transform_3(%arg0: i32, %arg1: i32) -> (i32, i32) {
    %c0_i32 = arith.constant 0 : i32
    %c0_i32_0 = arith.constant 0 : i32
    return %c0_i32, %arg1 : i32, i32
  }
  func.func @transform_4(%arg0: i32, %arg1: i32) -> (i32, i32) {
    %c0_i32 = arith.constant 0 : i32
    %c0_i32_0 = arith.constant 0 : i32
    return %c0_i32, %arg1 : i32, i32
  }
  func.func @transform_5(%arg0: i32, %arg1: i32) -> (i32, i32) {
    %c0_i32 = arith.constant 0 : i32
    %c0_i32_0 = arith.constant 0 : i32
    return %arg1, %c0_i32 : i32, i32
  }
  func.func @transform_6(%arg0: i32, %arg1: i32) -> (i32, i32) {
    %c0_i32 = arith.constant 0 : i32
    %c0_i32_0 = arith.constant 0 : i32
    %c0_i32_1 = arith.constant 0 : i32
    return %c0_i32, %c0_i32_0 : i32, i32
  }
  func.func @transform_7(%arg0: i32, %arg1: i32) -> (i32, i32) {
    %c0_i32 = arith.constant 0 : i32
    %c0_i32_0 = arith.constant 0 : i32
    return %arg0, %c0_i32 : i32, i32
  }
}

module attributes {stable_mosaic.version = 11 : i64} {
  func.func @_layernorm_kernel(%arg0: i32, %arg1: memref<32x64xf32, #tpu.memory_space<vmem>>, %arg2: memref<1x64xf32, #tpu.memory_space<vmem>>, %arg3: memref<1x64xf32, #tpu.memory_space<vmem>>, %arg4: memref<32x64xf32, #tpu.memory_space<vmem>>) attributes {dimension_semantics = [#tpu.dimension_semantics<parallel>], iteration_bounds = array<i64: 1>, scalar_prefetch = 0 : i64, scratch_operands = 0 : i64, tpu.core_type = #tpu.core_type<tc>, window_params = [{transform_indices = @transform_0, window_bounds = array<i64: 32, 64>}, {pipeline_mode = #tpu.pipeline_mode<synchronous>, transform_indices = @transform_1, window_bounds = array<i64: 1, 64>}, {pipeline_mode = #tpu.pipeline_mode<synchronous>, transform_indices = @transform_2, window_bounds = array<i64: 1, 64>}, {transform_indices = @transform_3, window_bounds = array<i64: 32, 64>}]} {
    %c0 = arith.constant 0 : index
    %c0_0 = arith.constant 0 : index
    %0 = vector.load %arg1[%c0, %c0_0] : memref<32x64xf32, #tpu.memory_space<vmem>>, vector<32x64xf32>
    %cst = arith.constant dense<0.000000e+00> : vector<32xf32>
    %1 = vector.multi_reduction <add>, %0, %cst [1] : vector<32x64xf32> to vector<32xf32>
    %2 = vector.shape_cast %1 : vector<32xf32> to vector<32x1xf32>
    %cst_1 = arith.constant 6.400000e+01 : f32
    %3 = vector.broadcast %cst_1 : f32 to vector<32x1xf32>
    %4 = arith.divf %2, %3 : vector<32x1xf32>
    %5 = vector.broadcast %4 : vector<32x1xf32> to vector<32x64xf32>
    %6 = arith.subf %0, %5 : vector<32x64xf32>
    %7 = arith.mulf %6, %6 : vector<32x64xf32>
    %cst_2 = arith.constant dense<0.000000e+00> : vector<32xf32>
    %8 = vector.multi_reduction <add>, %7, %cst_2 [1] : vector<32x64xf32> to vector<32xf32>
    %9 = vector.shape_cast %8 : vector<32xf32> to vector<32x1xf32>
    %cst_3 = arith.constant 6.400000e+01 : f32
    %10 = vector.broadcast %cst_3 : f32 to vector<32x1xf32>
    %11 = arith.divf %9, %10 : vector<32x1xf32>
    %12 = vector.broadcast %4 : vector<32x1xf32> to vector<32x64xf32>
    %13 = arith.subf %0, %12 : vector<32x64xf32>
    %cst_4 = arith.constant 9.99999997E-7 : f32
    %14 = vector.broadcast %cst_4 : f32 to vector<32x1xf32>
    %15 = arith.addf %11, %14 : vector<32x1xf32>
    %16 = math.rsqrt %15 : vector<32x1xf32>
    %17 = vector.broadcast %16 : vector<32x1xf32> to vector<32x64xf32>
    %18 = arith.mulf %13, %17 : vector<32x64xf32>
    %c0_5 = arith.constant 0 : index
    %c0_6 = arith.constant 0 : index
    %19 = vector.load %arg2[%c0_5, %c0_6] : memref<1x64xf32, #tpu.memory_space<vmem>>, vector<1x64xf32>
    %20 = vector.broadcast %19 : vector<1x64xf32> to vector<32x64xf32>
    %21 = arith.mulf %18, %20 : vector<32x64xf32>
    %c0_7 = arith.constant 0 : index
    %c0_8 = arith.constant 0 : index
    %22 = vector.load %arg3[%c0_7, %c0_8] : memref<1x64xf32, #tpu.memory_space<vmem>>, vector<1x64xf32>
    %23 = vector.broadcast %22 : vector<1x64xf32> to vector<32x64xf32>
    %24 = arith.addf %21, %23 : vector<32x64xf32>
    %c0_9 = arith.constant 0 : index
    %c0_10 = arith.constant 0 : index
    %25 = vector.load %arg4[%c0_9, %c0_10] : memref<32x64xf32, #tpu.memory_space<vmem>>, vector<32x64xf32>
    tpu.vector_store %arg4[%c0_9, %c0_10], %24 {strides = array<i32>} : memref<32x64xf32, #tpu.memory_space<vmem>>, vector<32x64xf32>,
    return
  }
  func.func @transform_0(%arg0: i32) -> (i32, i32) {
    %c0_i32 = arith.constant 0 : i32
    %c0_i32_0 = arith.constant 0 : i32
    return %arg0, %c0_i32 : i32, i32
  }
  func.func @transform_1(%arg0: i32) -> (i32, i32) {
    %c0_i32 = arith.constant 0 : i32
    %c0_i32_0 = arith.constant 0 : i32
    %c0_i32_1 = arith.constant 0 : i32
    return %c0_i32, %c0_i32_0 : i32, i32
  }
  func.func @transform_2(%arg0: i32) -> (i32, i32) {
    %c0_i32 = arith.constant 0 : i32
    %c0_i32_0 = arith.constant 0 : i32
    %c0_i32_1 = arith.constant 0 : i32
    return %c0_i32, %c0_i32_0 : i32, i32
  }
  func.func @transform_3(%arg0: i32) -> (i32, i32) {
    %c0_i32 = arith.constant 0 : i32
    %c0_i32_0 = arith.constant 0 : i32
    return %arg0, %c0_i32 : i32, i32
  }
}

</mosaic_0001>

<llo_original>
// kernel: cradio_v2_forward.10
$region0: #{cradio_v2_forward.10}
  #allocation0 [shape = 'u32[]', space=smem, size = 0x4, offset = 0x4, fixed_abs, tag = 'smem constant byte address 0x4 - core index']
  #allocation1 [shape = 'u32[144,128]{1,0:T(1,128)}', space=vmem, size = 0x12000, scoped, tag = 'internal scratch']
  #allocation2 [shape = 'f32[16,64]{1,0:T(8,128)}', space=vmem, size = 0x2000, scoped, tag = 'scratch operand']
  %s0 = inlined_call_operand.vmem [shape: f32[16,768], index: 0, kind: input, shape index: {}]
  %s1 = inlined_call_operand.vmem [shape: bf16[768,64], index: 1, kind: input, shape index: {}]
  %s2 = inlined_call_operand.vmem [shape: f32[1,64], index: 2, kind: input, shape index: {}]
  %s3 = inlined_call_operand.vmem [shape: f32[16,64], index: 3, kind: output, shape index: {}]
  %s4 = sld [smem:[#allocation0]]
  $region76: #{cradio_v2_forward.10} parent=0
    _
  %s6 = ssub.s32 1, %s4
  %s7 = scalar_select 0, %s6, %s4
  $region1: #{cradio_v2_forward.10} parent=0
    #allocation3 [shape = 'u8[49152]{0}', space=vmem, size = 0xc000, scoped, tag = 'input window, operand 0']
    loop: start=0, step=1, limit=4
    $region2: #{cradio_v2_forward.10} parent=1 // loop_pre_header
      _
    $region3: #{cradio_v2_forward.10} parent=1 // loop_header
      %s9 = sphi 0, %s13
      %p10 = scmp.ge.s32.totalorder %s9, 4
      %s16 = sphi 0, %s35
      %s17 = sphi 0, %s31
      %s18 = sphi 0, %s27
      %s19 = sphi 0, %s16
      %s20 = sphi 0, %s17
      %s21 = sphi 0, %s18
      %s22 = sphi 0, %s19
      %s23 = sphi 0, %s20
      %s24 = sphi 0, %s21
      %s40 = sphi 0, %s42
      %s43 = sphi 0, %s40
      %s44 = sphi 0, %s43
      %s60 = sphi 0, %s44
      %s68 = sphi 0, %s70
      %s71 = sphi 0, %s68
      %s72 = sphi 0, %s71
      %s88 = sphi 0, %s72
      %s94 = sphi 0, %s96
      %s97 = sphi 0, %s94
      %s98 = sphi 0, %s97
      %s114 = sphi 0, %s98
      %s122 = sphi 0, %s124
      %s125 = sphi 0, %s122
      %s126 = sphi 0, %s125
      %s142 = sphi 0, %s126
    $region4: #{cradio_v2_forward.10} parent=1 // loop_header_branch
      %12 = sbr.rel (%p10) target = $region8
    $region5: #{cradio_v2_forward.10} parent=1 // loop_body
      %s14 = ssub.s32 %s9, 1
      %s15 = ssub.s32 %s9, 2
      %s25 = sadd.s32 1, %s18
      %p26 = scmp.ge.s32.totalorder %s25, 2
      %s27 = scalar_select %p26, 0, %s25
      %s28 = sadd.s32 1, %s17
      %s29 = scalar_select %p26, %s28, %s17
      %p30 = scmp.ge.s32.totalorder %s29, 1
      %s31 = scalar_select %p30, 0, %s29
      %s32 = sadd.s32 1, %s16
      %s33 = scalar_select %p30, %s32, %s16
      %p34 = scmp.ge.s32.totalorder %s33, 1
      %s35 = scalar_select %p34, 0, %s33
      %s36 = ssub.s32 %s16, %s35
      %s37 = ssub.s32 %s18, %s27
      %s38 = sor.u32 %s36, %s37
      %p39 = scmp.eq.s32.totalorder %s38, 0
      %s41 = sadd.s32 %s40, 1
      %s42 = scalar_select %p39, %s40, %s41
      %p45 = pneg %p39
      %p46 = scmp.eq.s32.totalorder %s9, 1
      %p47 = por %p45, %p46
      %p48 = scmp.ne.s32.totalorder %s40, %s43
      %p49 = scmp.eq.s32.totalorder %s9, 0
      %p50 = por %p48, %p49
      %p51 = scmp.ne.s32.totalorder %s40, %s43
      %p52 = scmp.eq.s32.totalorder %s14, 1
      %p53 = por %p51, %p52
      %p54 = scmp.ne.s32.totalorder %s43, %s44
      %p55 = scmp.eq.s32.totalorder %s14, 0
      %p56 = por %p54, %p55
      %p57 = scmp.ne.s32.totalorder %s43, %s44
      %p58 = scmp.eq.s32.totalorder %s15, 1
      %p59 = por %p57, %p58
      %p61 = scmp.ne.s32.totalorder %s44, %s60
      %p62 = scmp.eq.s32.totalorder %s15, 0
      %p63 = por %p61, %p62
      %s64 = ssub.s32 %s18, %s27
      %s65 = ssub.s32 %s17, %s31
      %s66 = sor.u32 %s64, %s65
      %p67 = scmp.eq.s32.totalorder %s66, 0
      %s69 = sadd.s32 %s68, 1
      %s70 = scalar_select %p67, %s68, %s69
      %p73 = pneg %p67
      %p74 = scmp.eq.s32.totalorder %s9, 1
      %p75 = por %p73, %p74
      %p76 = scmp.ne.s32.totalorder %s68, %s71
      %p77 = scmp.eq.s32.totalorder %s9, 0
      %p78 = por %p76, %p77
      %p79 = scmp.ne.s32.totalorder %s68, %s71
      %p80 = scmp.eq.s32.totalorder %s14, 1
      %p81 = por %p79, %p80
      %p82 = scmp.ne.s32.totalorder %s71, %s72
      %p83 = scmp.eq.s32.totalorder %s14, 0
      %p84 = por %p82, %p83
      %p85 = scmp.ne.s32.totalorder %s71, %s72
      %p86 = scmp.eq.s32.totalorder %s15, 1
      %p87 = por %p85, %p86
      %p89 = scmp.ne.s32.totalorder %s72, %s88
      %p90 = scmp.eq.s32.totalorder %s15, 0
      %p91 = por %p89, %p90
      %s92 = ssub.s32 %s17, %s31
      %p93 = scmp.eq.s32.totalorder %s92, 0
      %s95 = sadd.s32 %s94, 1
      %s96 = scalar_select %p93, %s94, %s95
      %p99 = pneg %p93
      %p100 = scmp.eq.s32.totalorder %s9, 1
      %p101 = por %p99, %p100
      %p102 = scmp.ne.s32.totalorder %s94, %s97
      %p103 = scmp.eq.s32.totalorder %s9, 0
      %p104 = por %p102, %p103
      %p105 = scmp.ne.s32.totalorder %s94, %s97
      %p106 = scmp.eq.s32.totalorder %s14, 1
      %p107 = por %p105, %p106
      %p108 = scmp.ne.s32.totalorder %s97, %s98
      %p109 = scmp.eq.s32.totalorder %s14, 0
      %p110 = por %p108, %p109
      %p111 = scmp.ne.s32.totalorder %s97, %s98
      %p112 = scmp.eq.s32.totalorder %s15, 1
      %p113 = por %p111, %p112
      %p115 = scmp.ne.s32.totalorder %s98, %s114
      %p116 = scmp.eq.s32.totalorder %s15, 0
      %p117 = por %p115, %p116
      %s118 = ssub.s32 %s16, %s35
      %s119 = ssub.s32 %s17, %s31
      %s120 = sor.u32 %s118, %s119
      %p121 = scmp.eq.s32.totalorder %s120, 0
      %s123 = sadd.s32 %s122, 1
      %s124 = scalar_select %p121, %s122, %s123
      %p127 = pneg %p121
      %p128 = scmp.eq.s32.totalorder %s9, 1
      %p129 = por %p127, %p128
      %p130 = scmp.ne.s32.totalorder %s122, %s125
      %p131 = scmp.eq.s32.totalorder %s9, 0
      %p132 = por %p130, %p131
      %p133 = scmp.ne.s32.totalorder %s122, %s125
      %p134 = scmp.eq.s32.totalorder %s14, 1
      %p135 = por %p133, %p134
      %p136 = scmp.ne.s32.totalorder %s125, %s126
      %p137 = scmp.eq.s32.totalorder %s14, 0
      %p138 = por %p136, %p137
      %p139 = scmp.ne.s32.totalorder %s125, %s126
      %p140 = scmp.eq.s32.totalorder %s15, 1
      %p141 = por %p139, %p140
      %p143 = scmp.ne.s32.totalorder %s126, %s142
      %p144 = scmp.eq.s32.totalorder %s15, 0
      %p145 = por %p143, %p144
      %p146 = scmp.le.s32.totalorder 1, %s9
      %p147 = scmp.lt.s32.totalorder %s9, 3
      %p148 = pnand %p146, %p147
      %p149 = pneg %p148
      // Predicated region
      $region9: #{cradio_v2_forward.10} parent=5 // pred_check
        _
      $region10: #{cradio_v2_forward.10} parent=5 // pred_check_branch
        %151 = sbr.rel (%p148) target = $region12
      $region11: #{cradio_v2_forward.10} parent=5 // pred_region
        %s152 = ssub.s32 %s9, 1
        // Predicated region
        $region13: #{cradio_v2_forward.10} parent=11 // pred_check
          %p153 = pneg %p110
        $region14: #{cradio_v2_forward.10} parent=11 // pred_check_branch
          %155 = sbr.rel (%p153) target = $region16
        $region15: #{cradio_v2_forward.10} parent=11 // pred_region
          %p156 = scmp.lt.s32.totalorder %s20, 0
          %s157 = scalar_select %p156, %s20, 0
          %s158 = scalar_lea.vmem %s2, %s157
        $region16: #{cradio_v2_forward.10} parent=11 // pred_fallthru
          _
      $region12: #{cradio_v2_forward.10} parent=5 // pred_fallthru
        _
      %p159 = scmp.lt.s32.totalorder %s9, 2
      // Predicated region
      $region17: #{cradio_v2_forward.10} parent=5 // pred_check
        %p160 = pneg %p159
      $region18: #{cradio_v2_forward.10} parent=5 // pred_check_branch
        %162 = sbr.rel (%p160) target = $region20
      $region19: #{cradio_v2_forward.10} parent=5 // pred_region
        // Predicated region
        $region21: #{cradio_v2_forward.10} parent=19 // pred_check
          %p163 = pneg %p50
        $region22: #{cradio_v2_forward.10} parent=19 // pred_check_branch
          %165 = sbr.rel (%p163) target = $region24
        $region23: #{cradio_v2_forward.10} parent=19 // pred_region
          %s166 = sand.u32 %s40, 1
          %s167 = sand.u32 %s40, 1
          %s168 = smul.addr %s167, 48
          %s169 = scalar_lea.vmem [#allocation3], %s168
          %s170 = smul.u32 2, %s16
          %s171 = smul.u32 3, %s18
          %s172 = smul.addr %s170, 6
          %s173 = sadd.s32 %s171, %s172
          %s174 = smul.addr %s173, 8
          %s175 = scalar_lea.vmem %s0, %s174
          // Predicated region
          $region25: #{cradio_v2_forward.10} parent=23 // pred_check
            _
          $region26: #{cradio_v2_forward.10} parent=23 // pred_check_branch
            %177 = sbr.rel (0) target = $region28
          $region27: #{cradio_v2_forward.10} parent=23 // pred_region
            // Predicated region
            $region29: #{cradio_v2_forward.10} parent=27 // pred_check
              _
            $region30: #{cradio_v2_forward.10} parent=27 // pred_check_branch
              %179 = sbr.rel (0) target = $region32
            $region31: #{cradio_v2_forward.10} parent=27 // pred_region
              loop: start=0, step=1, limit=1
              $region33: #{cradio_v2_forward.10} parent=31 // loop_pre_header
                _
              $region34: #{cradio_v2_forward.10} parent=31 // loop_header
                %s181 = sphi 0, %s185
                %p182 = scmp.ge.s32.totalorder %s181, 1
                %s186 = sphi %s175, %s175
                %s187 = sphi %s169, %s169
              $region35: #{cradio_v2_forward.10} parent=31 // loop_header_branch
                %184 = sbr.rel (%p182) target = $region39
              $region36: #{cradio_v2_forward.10} parent=31 // loop_body
                %v188 = vld [vmem:[%s186] sm:$0xff]
                %189 = vst [vmem:[%s187] sm:$0xff] %v188
                %v190 = vld [vmem:[%s186 + $0x8] sm:$0xff]
                %191 = vst [vmem:[%s187 + $0x8] sm:$0xff] %v190
                %v192 = vld [vmem:[%s186 + $0x10] sm:$0xff]
                %193 = vst [vmem:[%s187 + $0x10] sm:$0xff] %v192
                %v194 = vld [vmem:[%s186 + $0x30] sm:$0xff]
                %195 = vst [vmem:[%s187 + $0x18] sm:$0xff] %v194
                %v196 = vld [vmem:[%s186 + $0x38] sm:$0xff]
                %197 = vst [vmem:[%s187 + $0x20] sm:$0xff] %v196
                %v198 = vld [vmem:[%s186 + $0x40] sm:$0xff]
                %199 = vst [vmem:[%s187 + $0x28] sm:$0xff] %v198
              $region37: #{cradio_v2_forward.10} parent=31 // loop_footer
                %s185 = sadd.s32 1, %s181
              $region38: #{cradio_v2_forward.10} parent=31 // loop_footer_branch
                %180 = sbr.rel target = $region34
              $region39: #{cradio_v2_forward.10} parent=31 // loop_exit
                _
            $region32: #{cradio_v2_forward.10} parent=27 // pred_fallthru
              _
            // Predicated region
            $region40: #{cradio_v2_forward.10} parent=27 // pred_check
              _
            $region41: #{cradio_v2_forward.10} parent=27 // pred_check_branch
              %201 = sbr.rel target = $region43
            $region42: #{cradio_v2_forward.10} parent=27 // pred_region
              _
            $region43: #{cradio_v2_forward.10} parent=27 // pred_fallthru
              _
          $region28: #{cradio_v2_forward.10} parent=23 // pred_fallthru
            _
          %202 = vnop
        $region24: #{cradio_v2_forward.10} parent=19 // pred_fallthru
          _
        // Predicated region
        $region44: #{cradio_v2_forward.10} parent=19 // pred_check
          %p203 = pneg %p78
        $region45: #{cradio_v2_forward.10} parent=19 // pred_check_branch
          %205 = sbr.rel (%p203) target = $region47
        $region46: #{cradio_v2_forward.10} parent=19 // pred_region
          %s206 = smul.u32 48, %s18
          %p207 = scmp.lt.s32.totalorder %s206, 95
          %s208 = scalar_select %p207, %s206, 95
          %p209 = scmp.lt.s32.totalorder %s17, 0
          %s210 = scalar_select %p209, %s17, 0
          %s211 = sadd.s32 %s210, %s208
          %s212 = smul.addr %s211, 4
          %s213 = scalar_lea.vmem %s1, %s212
          %s214 = smul.u32 48, %s18
        $region47: #{cradio_v2_forward.10} parent=19 // pred_fallthru
          _
      $region20: #{cradio_v2_forward.10} parent=5 // pred_fallthru
        _
      %p215 = scmp.le.s32.totalorder 1, %s9
      %p216 = scmp.lt.s32.totalorder %s9, 3
      %p217 = pnand %p215, %p216
      %p218 = pneg %p217
      // Predicated region
      $region48: #{cradio_v2_forward.10} parent=5 // pred_check
        _
      $region49: #{cradio_v2_forward.10} parent=5 // pred_check_branch
        %220 = sbr.rel (%p217) target = $region51
      $region50: #{cradio_v2_forward.10} parent=5 // pred_region
        %s221 = ssub.s32 %s9, 1
        %s222 = sand.u32 %s43, 1
        %s223 = sand.u32 %s43, 1
        %s224 = smul.addr %s223, 48
        %s225 = scalar_lea.vmem [#allocation3], %s224
        // Predicated region
        $region52: #{cradio_v2_forward.10} parent=50 // pred_check
          %p226 = pneg %p56
        $region53: #{cradio_v2_forward.10} parent=50 // pred_check_branch
          %228 = sbr.rel (%p226) target = $region55
        $region54: #{cradio_v2_forward.10} parent=50 // pred_region
          _
        $region55: #{cradio_v2_forward.10} parent=50 // pred_fallthru
          _
        %s229 = sand.u32 %s43, 1
        %s230 = sand.u32 %s43, 1
        %s231 = smul.addr %s230, 48
        %s232 = scalar_lea.vmem [#allocation3], %s231
        %p233 = pneg %p56
        %p234 = pneg %p53
        %s235 = smul.u32 48, %s21
        %p236 = scmp.lt.s32.totalorder %s235, 95
        %s237 = scalar_select %p236, %s235, 95
        %p238 = scmp.lt.s32.totalorder %s20, 0
        %s239 = scalar_select %p238, %s20, 0
        %s240 = sadd.s32 %s239, %s237
        %s241 = smul.addr %s240, 4
        %s242 = scalar_lea.vmem %s1, %s241
        %p243 = pneg %p84
        %p244 = pneg %p81
        %p245 = scmp.lt.s32.totalorder %s20, 0
        %s246 = scalar_select %p245, %s20, 0
        %s247 = scalar_lea.vmem %s2, %s246
        %p248 = pneg %p110
        %p249 = pneg %p107
        %p250 = pneg %p138
        %p251 = pneg %p135
        %s252 = smul.u32 2, %s19
        %p253 = scmp.lt.s32.totalorder %s252, 1
        %s254 = scalar_select %p253, %s252, 1
        %p255 = scmp.lt.s32.totalorder %s20, 0
        %s256 = scalar_select %p255, %s20, 0
        %s257 = sadd.s32 %s256, %s254
        %s258 = smul.addr %s257, 8
        %s259 = scalar_lea.vmem %s3, %s258
        %s260 = smul.u32 2, %s19
        %s261 = smul.u32 3, %s21
        %s262 = smul.u32 48, %s21
        %p263 = scmp.lt.s32.totalorder %s262, 95
        %s264 = scalar_select %p263, %s262, 95
        %p265 = scmp.lt.s32.totalorder %s20, 0
        %s266 = scalar_select %p265, %s20, 0
        %s267 = sadd.s32 %s266, %s264
        %s268 = smul.addr %s267, 4
        %s269 = scalar_lea.vmem %s1, %s268
        %s270 = smul.u32 48, %s21
        %p271 = scmp.lt.s32.totalorder %s20, 0
        %s272 = scalar_select %p271, %s20, 0
        %s273 = scalar_lea.vmem %s2, %s272
        %s274 = smul.u32 2, %s19
        %p275 = scmp.lt.s32.totalorder %s274, 1
        %s276 = scalar_select %p275, %s274, 1
        %p277 = scmp.lt.s32.totalorder %s20, 0
        %s278 = scalar_select %p277, %s20, 0
        %s279 = sadd.s32 %s278, %s276
        %s280 = smul.addr %s279, 8
        %s281 = scalar_lea.vmem %s3, %s280
        %s282 = smul.u32 2, %s19
        %p284 = scmp.eq.s32.totalorder %s21, 0
        // Predicated region
        $region56: #{cradio_v2_forward.10} parent=50 // pred_check
          %p285 = pneg %p284
        $region57: #{cradio_v2_forward.10} parent=50 // pred_check_branch
          %287 = sbr.rel (%p285) target = $region59
        $region58: #{cradio_v2_forward.10} parent=50 // pred_region
          %vm288 = vcmask 523264
          %289 = vst.msk [vmem:[#allocation2] sm:$0xff] %vm288, 0.0
          %290 = vst.msk [vmem:[#allocation2 + $0x8] sm:$0xff] %vm288, 0.0
        $region59: #{cradio_v2_forward.10} parent=50 // pred_fallthru
          _
        %v291 = vld [vmem:[#allocation2] sm:$0xff]
        %v292 = vld [vmem:[#allocation2 + $0x8] sm:$0xff]
        %v293 = vld [vmem:[%s225] sm:$0xff]
        %v294 = vld [vmem:[%s225 + $0x8] sm:$0xff]
        %v295 = vld [vmem:[%s225 + $0x10] sm:$0xff]
        %v296 = vld [vmem:[%s225 + $0x18] sm:$0xff]
        %v297 = vld [vmem:[%s225 + $0x20] sm:$0xff]
        %v298 = vld [vmem:[%s225 + $0x28] sm:$0xff]
        %v299 = vpack.c.bf16 %v296, %v293
        %v300 = vpack.c.bf16 %v297, %v294
        %v301 = vpack.c.bf16 %v298, %v295
        %v302 = vld [vmem:[%s269] sm:$0xf]
        %v303 = vld [vmem:[%s269 + $0x4] sm:$0xf]
        %v304 = vld [vmem:[%s269 + $0x8] sm:$0xf]
        %v305 = vld [vmem:[%s269 + $0xc] sm:$0xf]
        %v306 = vld [vmem:[%s269 + $0x10] sm:$0xf]
        %v307 = vld [vmem:[%s269 + $0x14] sm:$0xf]
        %v308 = vld [vmem:[%s269 + $0x18] sm:$0xf]
        %v309 = vld [vmem:[%s269 + $0x1c] sm:$0xf]
        %v310 = vld [vmem:[%s269 + $0x20] sm:$0xf]
        %v311 = vld [vmem:[%s269 + $0x24] sm:$0xf]
        %v312 = vld [vmem:[%s269 + $0x28] sm:$0xf]
        %v313 = vld [vmem:[%s269 + $0x2c] sm:$0xf]
        %v314 = vld [vmem:[%s269 + $0x30] sm:$0xf]
        %v315 = vld [vmem:[%s269 + $0x34] sm:$0xf]
        %v316 = vld [vmem:[%s269 + $0x38] sm:$0xf]
        %v317 = vld [vmem:[%s269 + $0x3c] sm:$0xf]
        %v318 = vld [vmem:[%s269 + $0x40] sm:$0xf]
        %v319 = vld [vmem:[%s269 + $0x44] sm:$0xf]
        %v320 = vld [vmem:[%s269 + $0x48] sm:$0xf]
        %v321 = vld [vmem:[%s269 + $0x4c] sm:$0xf]
        %v322 = vld [vmem:[%s269 + $0x50] sm:$0xf]
        %v323 = vld [vmem:[%s269 + $0x54] sm:$0xf]
        %v324 = vld [vmem:[%s269 + $0x58] sm:$0xf]
        %v325 = vld [vmem:[%s269 + $0x5c] sm:$0xf]
        %v326 = vld [vmem:[%s269 + $0x60] sm:$0xf]
        %v327 = vld [vmem:[%s269 + $0x64] sm:$0xf]
        %v328 = vld [vmem:[%s269 + $0x68] sm:$0xf]
        %v329 = vld [vmem:[%s269 + $0x6c] sm:$0xf]
        %v330 = vld [vmem:[%s269 + $0x70] sm:$0xf]
        %v331 = vld [vmem:[%s269 + $0x74] sm:$0xf]
        %v332 = vld [vmem:[%s269 + $0x78] sm:$0xf]
        %v333 = vld [vmem:[%s269 + $0x7c] sm:$0xf]
        %v334 = vld [vmem:[%s269 + $0x80] sm:$0xf]
        %v335 = vld [vmem:[%s269 + $0x84] sm:$0xf]
        %v336 = vld [vmem:[%s269 + $0x88] sm:$0xf]
        %v337 = vld [vmem:[%s269 + $0x8c] sm:$0xf]
        %v338 = vld [vmem:[%s269 + $0x90] sm:$0xf]
        %v339 = vld [vmem:[%s269 + $0x94] sm:$0xf]
        %v340 = vld [vmem:[%s269 + $0x98] sm:$0xf]
        %v341 = vld [vmem:[%s269 + $0x9c] sm:$0xf]
        %v342 = vld [vmem:[%s269 + $0xa0] sm:$0xf]
        %v343 = vld [vmem:[%s269 + $0xa4] sm:$0xf]
        %v344 = vld [vmem:[%s269 + $0xa8] sm:$0xf]
        %v345 = vld [vmem:[%s269 + $0xac] sm:$0xf]
        %v346 = vld [vmem:[%s269 + $0xb0] sm:$0xf]
        %v347 = vld [vmem:[%s269 + $0xb4] sm:$0xf]
        %v348 = vld [vmem:[%s269 + $0xb8] sm:$0xf]
        %v349 = vld [vmem:[%s269 + $0xbc] sm:$0xf]
        %v398 = vunpack.c.l.b16 %v302
        %v399 = vunpack.c.l.b16 %v303
        %v400 = vunpack.c.l.b16 %v304
        %v401 = vunpack.c.l.b16 %v305
        %v402 = vunpack.c.l.b16 %v306
        %v403 = vunpack.c.l.b16 %v307
        %v404 = vunpack.c.l.b16 %v308
        %v405 = vunpack.c.l.b16 %v309
        %v406 = vunpack.c.l.b16 %v310
        %v407 = vunpack.c.l.b16 %v311
        %v408 = vunpack.c.l.b16 %v312
        %v409 = vunpack.c.l.b16 %v313
        %v410 = vunpack.c.l.b16 %v314
        %v411 = vunpack.c.l.b16 %v315
        %v412 = vunpack.c.l.b16 %v316
        %v413 = vunpack.c.l.b16 %v317
        %v414 = vunpack.c.l.b16 %v318
        %v415 = vunpack.c.l.b16 %v319
        %v416 = vunpack.c.l.b16 %v320
        %v417 = vunpack.c.l.b16 %v321
        %v418 = vunpack.c.l.b16 %v322
        %v419 = vunpack.c.l.b16 %v323
        %v420 = vunpack.c.l.b16 %v324
        %v421 = vunpack.c.l.b16 %v325
        %v422 = vunpack.c.l.b16 %v326
        %v423 = vunpack.c.l.b16 %v327
        %v424 = vunpack.c.l.b16 %v328
        %v425 = vunpack.c.l.b16 %v329
        %v426 = vunpack.c.l.b16 %v330
        %v427 = vunpack.c.l.b16 %v331
        %v428 = vunpack.c.l.b16 %v332
        %v429 = vunpack.c.l.b16 %v333
        %v430 = vunpack.c.l.b16 %v334
        %v431 = vunpack.c.l.b16 %v335
        %v432 = vunpack.c.l.b16 %v336
        %v433 = vunpack.c.l.b16 %v337
        %v434 = vunpack.c.l.b16 %v338
        %v435 = vunpack.c.l.b16 %v339
        %v436 = vunpack.c.l.b16 %v340
        %v437 = vunpack.c.l.b16 %v341
        %v438 = vunpack.c.l.b16 %v342
        %v439 = vunpack.c.l.b16 %v343
        %v440 = vunpack.c.l.b16 %v344
        %v441 = vunpack.c.l.b16 %v345
        %v442 = vunpack.c.l.b16 %v346
        %v443 = vunpack.c.l.b16 %v347
        %v444 = vunpack.c.l.b16 %v348
        %v445 = vunpack.c.l.b16 %v349
        %v446 = vpack.c.b16 %v399, %v398
        %v447 = vpack.c.b16 %v401, %v400
        %v448 = vpack.c.b16 %v403, %v402
        %v449 = vpack.c.b16 %v405, %v404
        %v450 = vpack.c.b16 %v407, %v406
        %v451 = vpack.c.b16 %v409, %v408
        %v452 = vpack.c.b16 %v411, %v410
        %v453 = vpack.c.b16 %v413, %v412
        %v454 = vpack.c.b16 %v415, %v414
        %v455 = vpack.c.b16 %v417, %v416
        %v456 = vpack.c.b16 %v419, %v418
        %v457 = vpack.c.b16 %v421, %v420
        %v458 = vpack.c.b16 %v423, %v422
        %v459 = vpack.c.b16 %v425, %v424
        %v460 = vpack.c.b16 %v427, %v426
        %v461 = vpack.c.b16 %v429, %v428
        %v462 = vpack.c.b16 %v431, %v430
        %v463 = vpack.c.b16 %v433, %v432
        %v464 = vpack.c.b16 %v435, %v434
        %v465 = vpack.c.b16 %v437, %v436
        %v466 = vpack.c.b16 %v439, %v438
        %v467 = vpack.c.b16 %v441, %v440
        %v468 = vpack.c.b16 %v443, %v442
        %v469 = vpack.c.b16 %v445, %v444
        %494 = vmatprep.subr.bf16.mxu0 0
        %495 = vmatpush1.bf16.msra.mxu0 %v453
        %496 = vmatprep.subr.bf16.mxu0 0
        %497 = vmatpush1.bf16.msra.mxu0 %v452
        %498 = vmatprep.subr.bf16.mxu0 0
        %499 = vmatpush1.bf16.msra.mxu0 %v451
        %500 = vmatprep.subr.bf16.mxu0 0
        %501 = vmatpush1.bf16.msra.mxu0 %v450
        %502 = vmatprep.subr.bf16.mxu0 0
        %503 = vmatpush1.bf16.msra.mxu0 %v449
        %504 = vmatprep.subr.bf16.mxu0 0
        %505 = vmatpush1.bf16.msra.mxu0 %v448
        %506 = vmatprep.subr.bf16.mxu0 0
        %507 = vmatpush1.bf16.msra.mxu0 %v447
        %508 = vmatprep.subr.bf16.mxu0 0
        %509 = vmatpush1.bf16.msra.mxu0 %v446
        %510 = vmatprep.subr.bf16.mxu0 0
        %511 = vmatpush2.bf16.msra.mxu0 %v461
        %512 = vmatprep.subr.bf16.mxu0 0
        %513 = vmatpush2.bf16.msra.mxu0 %v460
        %514 = vmatprep.subr.bf16.mxu0 0
        %515 = vmatpush2.bf16.msra.mxu0 %v459
        %516 = vmatprep.subr.bf16.mxu0 0
        %517 = vmatpush2.bf16.msra.mxu0 %v458
        %518 = vmatprep.subr.bf16.mxu0 0
        %519 = vmatpush2.bf16.msra.mxu0 %v457
        %520 = vmatprep.subr.bf16.mxu0 0
        %521 = vmatpush2.bf16.msra.mxu0 %v456
        %522 = vmatprep.subr.bf16.mxu0 0
        %523 = vmatpush2.bf16.msra.mxu0 %v455
        %524 = vmatprep.subr.bf16.mxu0 0
        %525 = vmatpush2.bf16.msra.mxu0 %v454
        %526 = vmatprep.mubr.bf16.mxu0 %v300
        %527 = vmatmul.mubr.bf16.gmra.mxu0 %v299
        %v528 = vpop.f32.mrf.mxu0
        %v529 = vadd.f32 0.0, %v528
        %v530 = vpop.f32.mrf.mxu0
        %v531 = vpop.f32.mrf.mxu0
        %v532 = vadd.f32 0.0, %v531
        %v533 = vpop.f32.mrf.mxu0
        %534 = vdwg.mxu0
        %535 = vmatprep.subr.bf16.mxu0 0
        %536 = vmatpush1.bf16.msra.mxu0 %v469
        %537 = vmatprep.subr.bf16.mxu0 0
        %538 = vmatpush1.bf16.msra.mxu0 %v468
        %539 = vmatprep.subr.bf16.mxu0 0
        %540 = vmatpush1.bf16.msra.mxu0 %v467
        %541 = vmatprep.subr.bf16.mxu0 0
        %542 = vmatpush1.bf16.msra.mxu0 %v466
        %543 = vmatprep.subr.bf16.mxu0 0
        %544 = vmatpush1.bf16.msra.mxu0 %v465
        %545 = vmatprep.subr.bf16.mxu0 0
        %546 = vmatpush1.bf16.msra.mxu0 %v464
        %547 = vmatprep.subr.bf16.mxu0 0
        %548 = vmatpush1.bf16.msra.mxu0 %v463
        %549 = vmatprep.subr.bf16.mxu0 0
        %550 = vmatpush1.bf16.msra.mxu0 %v462
        %551 = vmatprep.subr.bf16.mxu0 0
        %552 = vmatpush2.bf16.msra.mxu0 0
        %553 = vmatprep.subr.bf16.mxu0 0
        %554 = vmatpush2.bf16.msra.mxu0 0
        %555 = vmatprep.subr.bf16.mxu0 0
        %556 = vmatpush2.bf16.msra.mxu0 0
        %557 = vmatprep.subr.bf16.mxu0 0
        %558 = vmatpush2.bf16.msra.mxu0 0
        %559 = vmatprep.subr.bf16.mxu0 0
        %560 = vmatpush2.bf16.msra.mxu0 0
        %561 = vmatprep.subr.bf16.mxu0 0
        %562 = vmatpush2.bf16.msra.mxu0 0
        %563 = vmatprep.subr.bf16.mxu0 0
        %564 = vmatpush2.bf16.msra.mxu0 0
        %565 = vmatprep.subr.bf16.mxu0 0
        %566 = vmatpush2.bf16.msra.mxu0 0
        %567 = vmatprep.mubr.bf16.mxu0 0
        %568 = vmatmul.mubr.bf16.gmra.mxu0 %v301
        %v569 = vpop.f32.mrf.mxu0
        %v570 = vadd.f32 %v529, %v569
        %v571 = vpop.f32.mrf.mxu0
        %v572 = vpop.f32.mrf.mxu0
        %v573 = vadd.f32 %v532, %v572
        %v574 = vpop.f32.mrf.mxu0
        %575 = vdwg.mxu0
        %v576 = vadd.f32 %v291, %v570
        %v577 = vadd.f32 %v292, %v573
        %vm578 = vcmask 523264
        %579 = vst.msk [vmem:[#allocation2] sm:$0xff] %vm578, %v576
        %580 = vst.msk [vmem:[#allocation2 + $0x8] sm:$0xff] %vm578, %v577
        %p581 = scmp.eq.s32.totalorder %s21, 1
        // Predicated region
        $region60: #{cradio_v2_forward.10} parent=50 // pred_check
          %p582 = pneg %p581
        $region61: #{cradio_v2_forward.10} parent=50 // pred_check_branch
          %584 = sbr.rel (%p582) target = $region63
        $region62: #{cradio_v2_forward.10} parent=50 // pred_region
          %v585 = vld [vmem:[#allocation2] sm:$0xff]
          %v586 = vld [vmem:[#allocation2 + $0x8] sm:$0xff]
          %v587 = vld [vmem:[%s273] sm:$0x1]
          %v589 = vlaneseq
          %v590 = vshrl.u32 %v589, 7
          %v591 = vsub.s32 0, %v590
          %v592 = vrot.slane %v587, %v591
          %v594 = vadd.f32 %v585, %v592
          %v595 = vadd.f32 %v586, %v592
          %596 = vst.msk [vmem:[%s281] sm:$0xff] %vm578, %v594
          %597 = vst.msk [vmem:[%s281 + $0x8] sm:$0xff] %vm578, %v595
        $region63: #{cradio_v2_forward.10} parent=50 // pred_fallthru
          _
        %s598 = smul.u32 2, %s19
        %p599 = scmp.lt.s32.totalorder %s598, 1
        %s600 = scalar_select %p599, %s598, 1
        %p601 = scmp.lt.s32.totalorder %s20, 0
        %s602 = scalar_select %p601, %s20, 0
        %s603 = sadd.s32 %s602, %s600
        %s604 = smul.addr %s603, 8
        %s605 = scalar_lea.vmem %s3, %s604
        // Predicated region
        $region64: #{cradio_v2_forward.10} parent=50 // pred_check
          %p606 = pneg %p135
        $region65: #{cradio_v2_forward.10} parent=50 // pred_check_branch
          %608 = sbr.rel (%p606) target = $region67
        $region66: #{cradio_v2_forward.10} parent=50 // pred_region
          %s609 = smul.u32 2, %s19
        $region67: #{cradio_v2_forward.10} parent=50 // pred_fallthru
          _
        // Predicated region
        $region68: #{cradio_v2_forward.10} parent=50 // pred_check
          %p610 = pneg %p135
        $region69: #{cradio_v2_forward.10} parent=50 // pred_check_branch
          %612 = sbr.rel (%p610) target = $region71
        $region70: #{cradio_v2_forward.10} parent=50 // pred_region
          %s613 = smul.u32 2, %s19
          %p614 = scmp.lt.s32.totalorder %s613, 1
          %s615 = scalar_select %p614, %s613, 1
          %p616 = scmp.lt.s32.totalorder %s20, 0
          %s617 = scalar_select %p616, %s20, 0
          %s618 = sadd.s32 %s617, %s615
          %s619 = smul.addr %s618, 8
          %s620 = scalar_lea.vmem %s3, %s619
        $region71: #{cradio_v2_forward.10} parent=50 // pred_fallthru
          _
      $region51: #{cradio_v2_forward.10} parent=5 // pred_fallthru
        _
      %p621 = scmp.le.s32.totalorder 2, %s9
      // Predicated region
      $region72: #{cradio_v2_forward.10} parent=5 // pred_check
        %p622 = pneg %p621
      $region73: #{cradio_v2_forward.10} parent=5 // pred_check_branch
        %624 = sbr.rel (%p622) target = $region75
      $region74: #{cradio_v2_forward.10} parent=5 // pred_region
        %s625 = ssub.s32 %s9, 2
      $region75: #{cradio_v2_forward.10} parent=5 // pred_fallthru
        _
    $region6: #{cradio_v2_forward.10} parent=1 // loop_footer
      %s13 = sadd.s32 1, %s9
    $region7: #{cradio_v2_forward.10} parent=1 // loop_footer_branch
      %8 = sbr.rel target = $region3
    $region8: #{cradio_v2_forward.10} parent=1 // loop_exit
      _

// kernel: cradio_v2_forward.12
$region0: #{cradio_v2_forward.12}
  #allocation0 [shape = 'u32[]', space=smem, size = 0x4, offset = 0x4, fixed_abs, tag = 'smem constant byte address 0x4 - core index']
  #allocation1 [shape = 'u32[144,128]{1,0:T(1,128)}', space=vmem, size = 0x12000, scoped, tag = 'internal scratch']
  #allocation2 [shape = 'f32[16,1]{1,0:T(8,128)}', space=vmem, size = 0x2000, scoped, tag = 'scratch operand']
  #allocation3 [shape = 'f32[16,1]{1,0:T(8,128)}', space=vmem, size = 0x2000, scoped, tag = 'scratch operand']
  #allocation4 [shape = 'f32[16,128]{1,0:T(8,128)}', space=vmem, size = 0x2000, scoped, tag = 'scratch operand']
  %s0 = inlined_call_operand.vmem [shape: bf16[32,1536], index: 0, kind: input, shape index: {}, may-alias: {0,1,2}]
  %s1 = inlined_call_operand.vmem [shape: bf16[32,1536], index: 1, kind: input, shape index: {}, may-alias: {0,1,2}]
  %s2 = inlined_call_operand.vmem [shape: bf16[32,1536], index: 2, kind: input, shape index: {}, may-alias: {0,1,2}]
  %s3 = inlined_call_operand.vmem [shape: bf16[32,512], index: 3, kind: output, shape index: {}]
  %s4 = sld [smem:[#allocation0]]
  $region213: #{cradio_v2_forward.12} parent=0
    _
  %s6 = ssub.s32 1, %s4
  %s7 = scalar_select 0, %s6, %s4
  $region1: #{cradio_v2_forward.12} parent=0
    #allocation5 [shape = 'u8[8192]{0}', space=vmem, size = 0x2000, scoped, tag = 'input window, operand 0']
    #allocation6 [shape = 'u8[8192]{0}', space=vmem, size = 0x2000, scoped, tag = 'input window, operand 1']
    #allocation7 [shape = 'u8[8192]{0}', space=vmem, size = 0x2000, scoped, tag = 'input window, operand 2']
    #allocation8 [shape = 'u8[8192]{0}', space=vmem, size = 0x2000, scoped, tag = 'output window, operand 0']
    loop: start=0, step=1, limit=10
    $region2: #{cradio_v2_forward.12} parent=1 // loop_pre_header
      _
    $region3: #{cradio_v2_forward.12} parent=1 // loop_header
      %s9 = sphi 0, %s13
      %p10 = scmp.ge.s32.totalorder %s9, 10
      %s16 = sphi 0, %s42
      %s17 = sphi 0, %s38
      %s18 = sphi 0, %s34
      %s19 = sphi 0, %s30
      %s20 = sphi 0, %s16
      %s21 = sphi 0, %s17
      %s22 = sphi 0, %s18
      %s23 = sphi 0, %s19
      %s24 = sphi 0, %s20
      %s25 = sphi 0, %s21
      %s26 = sphi 0, %s22
      %s27 = sphi 0, %s23
      %s49 = sphi 0, %s51
      %s52 = sphi 0, %s49
      %s53 = sphi 0, %s52
      %s69 = sphi 0, %s53
      %s81 = sphi 0, %s83
      %s84 = sphi 0, %s81
      %s85 = sphi 0, %s84
      %s101 = sphi 0, %s85
      %s113 = sphi 0, %s115
      %s116 = sphi 0, %s113
      %s117 = sphi 0, %s116
      %s133 = sphi 0, %s117
      %s143 = sphi 0, %s145
      %s146 = sphi 0, %s143
      %s147 = sphi 0, %s146
      %s163 = sphi 0, %s147
    $region4: #{cradio_v2_forward.12} parent=1 // loop_header_branch
      %12 = sbr.rel (%p10) target = $region8
    $region5: #{cradio_v2_forward.12} parent=1 // loop_body
      %s14 = ssub.s32 %s9, 1
      %s15 = ssub.s32 %s9, 2
      %s28 = sadd.s32 1, %s19
      %p29 = scmp.ge.s32.totalorder %s28, 1
      %s30 = scalar_select %p29, 0, %s28
      %s31 = sadd.s32 1, %s18
      %s32 = scalar_select %p29, %s31, %s18
      %p33 = scmp.ge.s32.totalorder %s32, 1
      %s34 = scalar_select %p33, 0, %s32
      %s35 = sadd.s32 1, %s17
      %s36 = scalar_select %p33, %s35, %s17
      %p37 = scmp.ge.s32.totalorder %s36, 4
      %s38 = scalar_select %p37, 0, %s36
      %s39 = sadd.s32 1, %s16
      %s40 = scalar_select %p37, %s39, %s16
      %p41 = scmp.ge.s32.totalorder %s40, 2
      %s42 = scalar_select %p41, 0, %s40
      %s43 = sadd.s32 %s16, %s18
      %s44 = sadd.s32 %s42, %s34
      %s45 = ssub.s32 %s43, %s44
      %s46 = ssub.s32 %s17, %s38
      %s47 = sor.u32 %s45, %s46
      %p48 = scmp.eq.s32.totalorder %s47, 0
      %s50 = sadd.s32 %s49, 1
      %s51 = scalar_select %p48, %s49, %s50
      %p54 = pneg %p48
      %p55 = scmp.eq.s32.totalorder %s9, 7
      %p56 = por %p54, %p55
      %p57 = scmp.ne.s32.totalorder %s49, %s52
      %p58 = scmp.eq.s32.totalorder %s9, 0
      %p59 = por %p57, %p58
      %p60 = scmp.ne.s32.totalorder %s49, %s52
      %p61 = scmp.eq.s32.totalorder %s14, 7
      %p62 = por %p60, %p61
      %p63 = scmp.ne.s32.totalorder %s52, %s53
      %p64 = scmp.eq.s32.totalorder %s14, 0
      %p65 = por %p63, %p64
      %p66 = scmp.ne.s32.totalorder %s52, %s53
      %p67 = scmp.eq.s32.totalorder %s15, 7
      %p68 = por %p66, %p67
      %p70 = scmp.ne.s32.totalorder %s53, %s69
      %p71 = scmp.eq.s32.totalorder %s15, 0
      %p72 = por %p70, %p71
      %s73 = sadd.s32 %s16, %s19
      %s74 = sadd.s32 %s17, 4
      %s75 = sadd.s32 %s42, %s30
      %s76 = sadd.s32 %s38, 4
      %s77 = ssub.s32 %s73, %s75
      %s78 = ssub.s32 %s74, %s76
      %s79 = sor.u32 %s77, %s78
      %p80 = scmp.eq.s32.totalorder %s79, 0
      %s82 = sadd.s32 %s81, 1
      %s83 = scalar_select %p80, %s81, %s82
      %p86 = pneg %p80
      %p87 = scmp.eq.s32.totalorder %s9, 7
      %p88 = por %p86, %p87
      %p89 = scmp.ne.s32.totalorder %s81, %s84
      %p90 = scmp.eq.s32.totalorder %s9, 0
      %p91 = por %p89, %p90
      %p92 = scmp.ne.s32.totalorder %s81, %s84
      %p93 = scmp.eq.s32.totalorder %s14, 7
      %p94 = por %p92, %p93
      %p95 = scmp.ne.s32.totalorder %s84, %s85
      %p96 = scmp.eq.s32.totalorder %s14, 0
      %p97 = por %p95, %p96
      %p98 = scmp.ne.s32.totalorder %s84, %s85
      %p99 = scmp.eq.s32.totalorder %s15, 7
      %p100 = por %p98, %p99
      %p102 = scmp.ne.s32.totalorder %s85, %s101
      %p103 = scmp.eq.s32.totalorder %s15, 0
      %p104 = por %p102, %p103
      %s105 = sadd.s32 %s16, %s19
      %s106 = sadd.s32 %s17, 8
      %s107 = sadd.s32 %s42, %s30
      %s108 = sadd.s32 %s38, 8
      %s109 = ssub.s32 %s105, %s107
      %s110 = ssub.s32 %s106, %s108
      %s111 = sor.u32 %s109, %s110
      %p112 = scmp.eq.s32.totalorder %s111, 0
      %s114 = sadd.s32 %s113, 1
      %s115 = scalar_select %p112, %s113, %s114
      %p118 = pneg %p112
      %p119 = scmp.eq.s32.totalorder %s9, 7
      %p120 = por %p118, %p119
      %p121 = scmp.ne.s32.totalorder %s113, %s116
      %p122 = scmp.eq.s32.totalorder %s9, 0
      %p123 = por %p121, %p122
      %p124 = scmp.ne.s32.totalorder %s113, %s116
      %p125 = scmp.eq.s32.totalorder %s14, 7
      %p126 = por %p124, %p125
      %p127 = scmp.ne.s32.totalorder %s116, %s117
      %p128 = scmp.eq.s32.totalorder %s14, 0
      %p129 = por %p127, %p128
      %p130 = scmp.ne.s32.totalorder %s116, %s117
      %p131 = scmp.eq.s32.totalorder %s15, 7
      %p132 = por %p130, %p131
      %p134 = scmp.ne.s32.totalorder %s117, %s133
      %p135 = scmp.eq.s32.totalorder %s15, 0
      %p136 = por %p134, %p135
      %s137 = sadd.s32 %s16, %s18
      %s138 = sadd.s32 %s42, %s34
      %s139 = ssub.s32 %s137, %s138
      %s140 = ssub.s32 %s17, %s38
      %s141 = sor.u32 %s139, %s140
      %p142 = scmp.eq.s32.totalorder %s141, 0
      %s144 = sadd.s32 %s143, 1
      %s145 = scalar_select %p142, %s143, %s144
      %p148 = pneg %p142
      %p149 = scmp.eq.s32.totalorder %s9, 7
      %p150 = por %p148, %p149
      %p151 = scmp.ne.s32.totalorder %s143, %s146
      %p152 = scmp.eq.s32.totalorder %s9, 0
      %p153 = por %p151, %p152
      %p154 = scmp.ne.s32.totalorder %s143, %s146
      %p155 = scmp.eq.s32.totalorder %s14, 7
      %p156 = por %p154, %p155
      %p157 = scmp.ne.s32.totalorder %s146, %s147
      %p158 = scmp.eq.s32.totalorder %s14, 0
      %p159 = por %p157, %p158
      %p160 = scmp.ne.s32.totalorder %s146, %s147
      %p161 = scmp.eq.s32.totalorder %s15, 7
      %p162 = por %p160, %p161
      %p164 = scmp.ne.s32.totalorder %s147, %s163
      %p165 = scmp.eq.s32.totalorder %s15, 0
      %p166 = por %p164, %p165
      %p167 = scmp.le.s32.totalorder 1, %s9
      %p168 = scmp.lt.s32.totalorder %s9, 9
      %p169 = pnand %p167, %p168
      %p170 = pneg %p169
      // Predicated region
      $region9: #{cradio_v2_forward.12} parent=5 // pred_check
        _
      $region10: #{cradio_v2_forward.12} parent=5 // pred_check_branch
        %172 = sbr.rel (%p169) target = $region12
      $region11: #{cradio_v2_forward.12} parent=5 // pred_region
        %s173 = ssub.s32 %s9, 1
      $region12: #{cradio_v2_forward.12} parent=5 // pred_fallthru
        _
      %p174 = scmp.lt.s32.totalorder %s9, 8
      // Predicated region
      $region13: #{cradio_v2_forward.12} parent=5 // pred_check
        %p175 = pneg %p174
      $region14: #{cradio_v2_forward.12} parent=5 // pred_check_branch
        %177 = sbr.rel (%p175) target = $region16
      $region15: #{cradio_v2_forward.12} parent=5 // pred_region
        // Predicated region
        $region17: #{cradio_v2_forward.12} parent=15 // pred_check
          %p178 = pneg %p59
        $region18: #{cradio_v2_forward.12} parent=15 // pred_check_branch
          %180 = sbr.rel (%p178) target = $region20
        $region19: #{cradio_v2_forward.12} parent=15 // pred_region
          %s181 = sand.u32 %s49, 1
          %s182 = sand.u32 %s49, 1
          %s183 = smul.addr %s182, 8
          %s184 = scalar_lea.vmem [#allocation5], %s183
          %s185 = sadd.s32 %s16, %s18
          %s186 = smul.u32 2, %s185
          %s187 = smul.addr %s186, 12
          %s188 = sadd.s32 %s17, %s187
          %s189 = smul.addr %s188, 4
          %s190 = scalar_lea.vmem %s0, %s189
          // Predicated region
          $region21: #{cradio_v2_forward.12} parent=19 // pred_check
            _
          $region22: #{cradio_v2_forward.12} parent=19 // pred_check_branch
            %192 = sbr.rel (0) target = $region24
          $region23: #{cradio_v2_forward.12} parent=19 // pred_region
            // Predicated region
            $region25: #{cradio_v2_forward.12} parent=23 // pred_check
              _
            $region26: #{cradio_v2_forward.12} parent=23 // pred_check_branch
              %194 = sbr.rel target = $region28
            $region27: #{cradio_v2_forward.12} parent=23 // pred_region
              // Predicated region
              $region40: #{cradio_v2_forward.12} parent=27 // pred_check
                _
              $region41: #{cradio_v2_forward.12} parent=27 // pred_check_branch
                %212 = sbr.rel (0) target = $region43
              $region42: #{cradio_v2_forward.12} parent=27 // pred_region
                loop: start=0, step=1, limit=1
                $region44: #{cradio_v2_forward.12} parent=42 // loop_pre_header
                  _
                $region45: #{cradio_v2_forward.12} parent=42 // loop_header
                  %s214 = sphi 0, %s218
                  %p215 = scmp.ge.s32.totalorder %s214, 1
                  %s219 = sphi %s190, %s190
                  %s220 = sphi %s184, %s184
                $region46: #{cradio_v2_forward.12} parent=42 // loop_header_branch
                  %217 = sbr.rel (%p215) target = $region50
                $region47: #{cradio_v2_forward.12} parent=42 // loop_body
                  _
                $region48: #{cradio_v2_forward.12} parent=42 // loop_footer
                  %s218 = sadd.s32 1, %s214
                $region49: #{cradio_v2_forward.12} parent=42 // loop_footer_branch
                  %213 = sbr.rel target = $region45
                $region50: #{cradio_v2_forward.12} parent=42 // loop_exit
                  _
                %s222 = ssub.s32 16, 1
                loop: start=0, step=1, limit=1
                $region51: #{cradio_v2_forward.12} parent=42 // loop_pre_header
                  _
                $region52: #{cradio_v2_forward.12} parent=42 // loop_header
                  %s224 = sphi 0, %s228
                  %p225 = scmp.ge.s32.totalorder %s224, 1
                  %s229 = sphi %s190, %s190
                  %s230 = sphi %s184, %s184
                $region53: #{cradio_v2_forward.12} parent=42 // loop_header_branch
                  %227 = sbr.rel (%p225) target = $region57
                $region54: #{cradio_v2_forward.12} parent=42 // loop_body
                  %v231 = vld [vmem:[%s229] sm:%s222]
                  %232 = vst [vmem:[%s230] sm:%s222] %v231
                  %v233 = vld [vmem:[%s229 + $0x30] sm:%s222]
                  %234 = vst [vmem:[%s230 + $0x4] sm:%s222] %v233
                $region55: #{cradio_v2_forward.12} parent=42 // loop_footer
                  %s228 = sadd.s32 1, %s224
                $region56: #{cradio_v2_forward.12} parent=42 // loop_footer_branch
                  %223 = sbr.rel target = $region52
                $region57: #{cradio_v2_forward.12} parent=42 // loop_exit
                  _
              $region43: #{cradio_v2_forward.12} parent=27 // pred_fallthru
                _
            $region28: #{cradio_v2_forward.12} parent=23 // pred_fallthru
              _
            // Predicated region
            $region29: #{cradio_v2_forward.12} parent=23 // pred_check
              _
            $region30: #{cradio_v2_forward.12} parent=23 // pred_check_branch
              %196 = sbr.rel (0) target = $region32
            $region31: #{cradio_v2_forward.12} parent=23 // pred_region
              %s198 = ssub.s32 16, 1
              loop: start=0, step=1, limit=1
              $region33: #{cradio_v2_forward.12} parent=31 // loop_pre_header
                _
              $region34: #{cradio_v2_forward.12} parent=31 // loop_header
                %s200 = sphi 0, %s204
                %p201 = scmp.ge.s32.totalorder %s200, 1
                %s205 = sphi %s190, %s190
                %s206 = sphi %s184, %s184
              $region35: #{cradio_v2_forward.12} parent=31 // loop_header_branch
                %203 = sbr.rel (%p201) target = $region39
              $region36: #{cradio_v2_forward.12} parent=31 // loop_body
                %v207 = vld [vmem:[%s205] sm:%s198]
                %208 = vst [vmem:[%s206] sm:%s198] %v207
                %v209 = vld [vmem:[%s205 + $0x30] sm:%s198]
                %210 = vst [vmem:[%s206 + $0x4] sm:%s198] %v209
              $region37: #{cradio_v2_forward.12} parent=31 // loop_footer
                %s204 = sadd.s32 1, %s200
              $region38: #{cradio_v2_forward.12} parent=31 // loop_footer_branch
                %199 = sbr.rel target = $region34
              $region39: #{cradio_v2_forward.12} parent=31 // loop_exit
                _
            $region32: #{cradio_v2_forward.12} parent=23 // pred_fallthru
              _
          $region24: #{cradio_v2_forward.12} parent=19 // pred_fallthru
            _
          %235 = vnop
        $region20: #{cradio_v2_forward.12} parent=15 // pred_fallthru
          _
        // Predicated region
        $region58: #{cradio_v2_forward.12} parent=15 // pred_check
          %p236 = pneg %p91
        $region59: #{cradio_v2_forward.12} parent=15 // pred_check_branch
          %238 = sbr.rel (%p236) target = $region61
        $region60: #{cradio_v2_forward.12} parent=15 // pred_region
          %s239 = sand.u32 %s81, 1
          %s240 = sand.u32 %s81, 1
          %s241 = smul.addr %s240, 8
          %s242 = scalar_lea.vmem [#allocation6], %s241
          %s243 = sadd.s32 %s16, %s19
          %s244 = sadd.s32 %s17, 4
          %s245 = smul.u32 2, %s243
          %s246 = smul.addr %s245, 12
          %s247 = sadd.s32 %s244, %s246
          %s248 = smul.addr %s247, 4
          %s249 = scalar_lea.vmem %s1, %s248
          // Predicated region
          $region62: #{cradio_v2_forward.12} parent=60 // pred_check
            _
          $region63: #{cradio_v2_forward.12} parent=60 // pred_check_branch
            %251 = sbr.rel (0) target = $region65
          $region64: #{cradio_v2_forward.12} parent=60 // pred_region
            // Predicated region
            $region66: #{cradio_v2_forward.12} parent=64 // pred_check
              _
            $region67: #{cradio_v2_forward.12} parent=64 // pred_check_branch
              %253 = sbr.rel target = $region69
            $region68: #{cradio_v2_forward.12} parent=64 // pred_region
              // Predicated region
              $region81: #{cradio_v2_forward.12} parent=68 // pred_check
                _
              $region82: #{cradio_v2_forward.12} parent=68 // pred_check_branch
                %271 = sbr.rel (0) target = $region84
              $region83: #{cradio_v2_forward.12} parent=68 // pred_region
                loop: start=0, step=1, limit=1
                $region85: #{cradio_v2_forward.12} parent=83 // loop_pre_header
                  _
                $region86: #{cradio_v2_forward.12} parent=83 // loop_header
                  %s273 = sphi 0, %s277
                  %p274 = scmp.ge.s32.totalorder %s273, 1
                  %s278 = sphi %s249, %s249
                  %s279 = sphi %s242, %s242
                $region87: #{cradio_v2_forward.12} parent=83 // loop_header_branch
                  %276 = sbr.rel (%p274) target = $region91
                $region88: #{cradio_v2_forward.12} parent=83 // loop_body
                  _
                $region89: #{cradio_v2_forward.12} parent=83 // loop_footer
                  %s277 = sadd.s32 1, %s273
                $region90: #{cradio_v2_forward.12} parent=83 // loop_footer_branch
                  %272 = sbr.rel target = $region86
                $region91: #{cradio_v2_forward.12} parent=83 // loop_exit
                  _
                %s281 = ssub.s32 16, 1
                loop: start=0, step=1, limit=1
                $region92: #{cradio_v2_forward.12} parent=83 // loop_pre_header
                  _
                $region93: #{cradio_v2_forward.12} parent=83 // loop_header
                  %s283 = sphi 0, %s287
                  %p284 = scmp.ge.s32.totalorder %s283, 1
                  %s288 = sphi %s249, %s249
                  %s289 = sphi %s242, %s242
                $region94: #{cradio_v2_forward.12} parent=83 // loop_header_branch
                  %286 = sbr.rel (%p284) target = $region98
                $region95: #{cradio_v2_forward.12} parent=83 // loop_body
                  %v290 = vld [vmem:[%s288] sm:%s281]
                  %291 = vst [vmem:[%s289] sm:%s281] %v290
                  %v292 = vld [vmem:[%s288 + $0x30] sm:%s281]
                  %293 = vst [vmem:[%s289 + $0x4] sm:%s281] %v292
                $region96: #{cradio_v2_forward.12} parent=83 // loop_footer
                  %s287 = sadd.s32 1, %s283
                $region97: #{cradio_v2_forward.12} parent=83 // loop_footer_branch
                  %282 = sbr.rel target = $region93
                $region98: #{cradio_v2_forward.12} parent=83 // loop_exit
                  _
              $region84: #{cradio_v2_forward.12} parent=68 // pred_fallthru
                _
            $region69: #{cradio_v2_forward.12} parent=64 // pred_fallthru
              _
            // Predicated region
            $region70: #{cradio_v2_forward.12} parent=64 // pred_check
              _
            $region71: #{cradio_v2_forward.12} parent=64 // pred_check_branch
              %255 = sbr.rel (0) target = $region73
            $region72: #{cradio_v2_forward.12} parent=64 // pred_region
              %s257 = ssub.s32 16, 1
              loop: start=0, step=1, limit=1
              $region74: #{cradio_v2_forward.12} parent=72 // loop_pre_header
                _
              $region75: #{cradio_v2_forward.12} parent=72 // loop_header
                %s259 = sphi 0, %s263
                %p260 = scmp.ge.s32.totalorder %s259, 1
                %s264 = sphi %s249, %s249
                %s265 = sphi %s242, %s242
              $region76: #{cradio_v2_forward.12} parent=72 // loop_header_branch
                %262 = sbr.rel (%p260) target = $region80
              $region77: #{cradio_v2_forward.12} parent=72 // loop_body
                %v266 = vld [vmem:[%s264] sm:%s257]
                %267 = vst [vmem:[%s265] sm:%s257] %v266
                %v268 = vld [vmem:[%s264 + $0x30] sm:%s257]
                %269 = vst [vmem:[%s265 + $0x4] sm:%s257] %v268
              $region78: #{cradio_v2_forward.12} parent=72 // loop_footer
                %s263 = sadd.s32 1, %s259
              $region79: #{cradio_v2_forward.12} parent=72 // loop_footer_branch
                %258 = sbr.rel target = $region75
              $region80: #{cradio_v2_forward.12} parent=72 // loop_exit
                _
            $region73: #{cradio_v2_forward.12} parent=64 // pred_fallthru
              _
          $region65: #{cradio_v2_forward.12} parent=60 // pred_fallthru
            _
          %294 = vnop
        $region61: #{cradio_v2_forward.12} parent=15 // pred_fallthru
          _
        // Predicated region
        $region99: #{cradio_v2_forward.12} parent=15 // pred_check
          %p295 = pneg %p123
        $region100: #{cradio_v2_forward.12} parent=15 // pred_check_branch
          %297 = sbr.rel (%p295) target = $region102
        $region101: #{cradio_v2_forward.12} parent=15 // pred_region
          %s298 = sand.u32 %s113, 1
          %s299 = sand.u32 %s113, 1
          %s300 = smul.addr %s299, 8
          %s301 = scalar_lea.vmem [#allocation7], %s300
          %s302 = sadd.s32 %s16, %s19
          %s303 = sadd.s32 %s17, 8
          %s304 = smul.u32 2, %s302
          %s305 = smul.addr %s304, 12
          %s306 = sadd.s32 %s303, %s305
          %s307 = smul.addr %s306, 4
          %s308 = scalar_lea.vmem %s2, %s307
          // Predicated region
          $region103: #{cradio_v2_forward.12} parent=101 // pred_check
            _
          $region104: #{cradio_v2_forward.12} parent=101 // pred_check_branch
            %310 = sbr.rel (0) target = $region106
          $region105: #{cradio_v2_forward.12} parent=101 // pred_region
            // Predicated region
            $region107: #{cradio_v2_forward.12} parent=105 // pred_check
              _
            $region108: #{cradio_v2_forward.12} parent=105 // pred_check_branch
              %312 = sbr.rel target = $region110
            $region109: #{cradio_v2_forward.12} parent=105 // pred_region
              // Predicated region
              $region122: #{cradio_v2_forward.12} parent=109 // pred_check
                _
              $region123: #{cradio_v2_forward.12} parent=109 // pred_check_branch
                %330 = sbr.rel (0) target = $region125
              $region124: #{cradio_v2_forward.12} parent=109 // pred_region
                loop: start=0, step=1, limit=1
                $region126: #{cradio_v2_forward.12} parent=124 // loop_pre_header
                  _
                $region127: #{cradio_v2_forward.12} parent=124 // loop_header
                  %s332 = sphi 0, %s336
                  %p333 = scmp.ge.s32.totalorder %s332, 1
                  %s337 = sphi %s308, %s308
                  %s338 = sphi %s301, %s301
                $region128: #{cradio_v2_forward.12} parent=124 // loop_header_branch
                  %335 = sbr.rel (%p333) target = $region132
                $region129: #{cradio_v2_forward.12} parent=124 // loop_body
                  _
                $region130: #{cradio_v2_forward.12} parent=124 // loop_footer
                  %s336 = sadd.s32 1, %s332
                $region131: #{cradio_v2_forward.12} parent=124 // loop_footer_branch
                  %331 = sbr.rel target = $region127
                $region132: #{cradio_v2_forward.12} parent=124 // loop_exit
                  _
                %s340 = ssub.s32 16, 1
                loop: start=0, step=1, limit=1
                $region133: #{cradio_v2_forward.12} parent=124 // loop_pre_header
                  _
                $region134: #{cradio_v2_forward.12} parent=124 // loop_header
                  %s342 = sphi 0, %s346
                  %p343 = scmp.ge.s32.totalorder %s342, 1
                  %s347 = sphi %s308, %s308
                  %s348 = sphi %s301, %s301
                $region135: #{cradio_v2_forward.12} parent=124 // loop_header_branch
                  %345 = sbr.rel (%p343) target = $region139
                $region136: #{cradio_v2_forward.12} parent=124 // loop_body
                  %v349 = vld [vmem:[%s347] sm:%s340]
                  %350 = vst [vmem:[%s348] sm:%s340] %v349
                  %v351 = vld [vmem:[%s347 + $0x30] sm:%s340]
                  %352 = vst [vmem:[%s348 + $0x4] sm:%s340] %v351
                $region137: #{cradio_v2_forward.12} parent=124 // loop_footer
                  %s346 = sadd.s32 1, %s342
                $region138: #{cradio_v2_forward.12} parent=124 // loop_footer_branch
                  %341 = sbr.rel target = $region134
                $region139: #{cradio_v2_forward.12} parent=124 // loop_exit
                  _
              $region125: #{cradio_v2_forward.12} parent=109 // pred_fallthru
                _
            $region110: #{cradio_v2_forward.12} parent=105 // pred_fallthru
              _
            // Predicated region
            $region111: #{cradio_v2_forward.12} parent=105 // pred_check
              _
            $region112: #{cradio_v2_forward.12} parent=105 // pred_check_branch
              %314 = sbr.rel (0) target = $region114
            $region113: #{cradio_v2_forward.12} parent=105 // pred_region
              %s316 = ssub.s32 16, 1
              loop: start=0, step=1, limit=1
              $region115: #{cradio_v2_forward.12} parent=113 // loop_pre_header
                _
              $region116: #{cradio_v2_forward.12} parent=113 // loop_header
                %s318 = sphi 0, %s322
                %p319 = scmp.ge.s32.totalorder %s318, 1
                %s323 = sphi %s308, %s308
                %s324 = sphi %s301, %s301
              $region117: #{cradio_v2_forward.12} parent=113 // loop_header_branch
                %321 = sbr.rel (%p319) target = $region121
              $region118: #{cradio_v2_forward.12} parent=113 // loop_body
                %v325 = vld [vmem:[%s323] sm:%s316]
                %326 = vst [vmem:[%s324] sm:%s316] %v325
                %v327 = vld [vmem:[%s323 + $0x30] sm:%s316]
                %328 = vst [vmem:[%s324 + $0x4] sm:%s316] %v327
              $region119: #{cradio_v2_forward.12} parent=113 // loop_footer
                %s322 = sadd.s32 1, %s318
              $region120: #{cradio_v2_forward.12} parent=113 // loop_footer_branch
                %317 = sbr.rel target = $region116
              $region121: #{cradio_v2_forward.12} parent=113 // loop_exit
                _
            $region114: #{cradio_v2_forward.12} parent=105 // pred_fallthru
              _
          $region106: #{cradio_v2_forward.12} parent=101 // pred_fallthru
            _
          %353 = vnop
        $region102: #{cradio_v2_forward.12} parent=15 // pred_fallthru
          _
      $region16: #{cradio_v2_forward.12} parent=5 // pred_fallthru
        _
      %p354 = scmp.le.s32.totalorder 1, %s9
      %p355 = scmp.lt.s32.totalorder %s9, 9
      %p356 = pnand %p354, %p355
      %p357 = pneg %p356
      // Predicated region
      $region140: #{cradio_v2_forward.12} parent=5 // pred_check
        _
      $region141: #{cradio_v2_forward.12} parent=5 // pred_check_branch
        %359 = sbr.rel (%p356) target = $region143
      $region142: #{cradio_v2_forward.12} parent=5 // pred_region
        %s360 = ssub.s32 %s9, 1
        %s361 = sand.u32 %s52, 1
        %s362 = sand.u32 %s52, 1
        %s363 = smul.addr %s362, 8
        %s364 = scalar_lea.vmem [#allocation5], %s363
        // Predicated region
        $region144: #{cradio_v2_forward.12} parent=142 // pred_check
          %p365 = pneg %p65
        $region145: #{cradio_v2_forward.12} parent=142 // pred_check_branch
          %367 = sbr.rel (%p365) target = $region147
        $region146: #{cradio_v2_forward.12} parent=142 // pred_region
          _
        $region147: #{cradio_v2_forward.12} parent=142 // pred_fallthru
          _
        %s368 = sand.u32 %s84, 1
        %s369 = sand.u32 %s84, 1
        %s370 = smul.addr %s369, 8
        %s371 = scalar_lea.vmem [#allocation6], %s370
        // Predicated region
        $region148: #{cradio_v2_forward.12} parent=142 // pred_check
          %p372 = pneg %p97
        $region149: #{cradio_v2_forward.12} parent=142 // pred_check_branch
          %374 = sbr.rel (%p372) target = $region151
        $region150: #{cradio_v2_forward.12} parent=142 // pred_region
          _
        $region151: #{cradio_v2_forward.12} parent=142 // pred_fallthru
          _
        %s375 = sand.u32 %s116, 1
        %s376 = sand.u32 %s116, 1
        %s377 = smul.addr %s376, 8
        %s378 = scalar_lea.vmem [#allocation7], %s377
        // Predicated region
        $region152: #{cradio_v2_forward.12} parent=142 // pred_check
          %p379 = pneg %p129
        $region153: #{cradio_v2_forward.12} parent=142 // pred_check_branch
          %381 = sbr.rel (%p379) target = $region155
        $region154: #{cradio_v2_forward.12} parent=142 // pred_region
          _
        $region155: #{cradio_v2_forward.12} parent=142 // pred_fallthru
          _
        %s382 = sand.u32 %s52, 1
        %s383 = sand.u32 %s52, 1
        %s384 = smul.addr %s383, 8
        %s385 = scalar_lea.vmem [#allocation5], %s384
        %p386 = pneg %p65
        %p387 = pneg %p62
        %s388 = sand.u32 %s84, 1
        %s389 = sand.u32 %s84, 1
        %s390 = smul.addr %s389, 8
        %s391 = scalar_lea.vmem [#allocation6], %s390
        %p392 = pneg %p97
        %p393 = pneg %p94
        %s394 = sand.u32 %s116, 1
        %s395 = sand.u32 %s116, 1
        %s396 = smul.addr %s395, 8
        %s397 = scalar_lea.vmem [#allocation7], %s396
        %p398 = pneg %p129
        %p399 = pneg %p126
        %p400 = pneg %p159
        %p401 = pneg %p156
        %s402 = sand.u32 %s146, 1
        %s403 = sand.u32 %s146, 1
        %s404 = smul.addr %s403, 8
        %s405 = scalar_lea.vmem [#allocation8], %s404
        %s406 = sadd.s32 %s20, %s22
        %s407 = smul.u32 2, %s406
        %s408 = sadd.s32 %s20, %s23
        %s409 = sadd.s32 %s21, 4
        %s410 = smul.u32 2, %s408
        %s411 = sadd.s32 %s20, %s23
        %s412 = sadd.s32 %s21, 8
        %s413 = smul.u32 2, %s411
        %s414 = sadd.s32 %s20, %s22
        %s415 = smul.u32 2, %s414
        %p417 = scmp.eq.s32.totalorder %s23, 0
        // Predicated region
        $region156: #{cradio_v2_forward.12} parent=142 // pred_check
          %p418 = pneg %p417
        $region157: #{cradio_v2_forward.12} parent=142 // pred_check_branch
          %420 = sbr.rel (%p418) target = $region159
        $region158: #{cradio_v2_forward.12} parent=142 // pred_region
          %vm421 = vcmask 7168
          %422 = vst.msk [vmem:[#allocation2] sm:$0xff] %vm421, -inf
          %423 = vst.msk [vmem:[#allocation2 + $0x8] sm:$0xff] %vm421, -inf
          %424 = vst.msk [vmem:[#allocation3] sm:$0xff] %vm421, 0.0
          %425 = vst.msk [vmem:[#allocation3 + $0x8] sm:$0xff] %vm421, 0.0
          %426 = vst [vmem:[#allocation4] sm:$0xff] 0.0
          %427 = vst [vmem:[#allocation4 + $0x8] sm:$0xff] 0.0
        $region159: #{cradio_v2_forward.12} parent=142 // pred_fallthru
          _
        %v428 = vld [vmem:[%s364] sm:$0xf]
        %v429 = vld [vmem:[%s364 + $0x4] sm:$0xf]
        %v430 = vld [vmem:[%s371] sm:$0xf]
        %v431 = vld [vmem:[%s371 + $0x4] sm:$0xf]
        %v434 = vunpack.c.l.b16 %v428
        %v435 = vunpack.c.l.b16 %v429
        %v436 = vpack.c.b16 %v435, %v434
        %v440 = vunpack.c.l.b16 %v430
        %v441 = vunpack.c.l.b16 %v431
        %v442 = vpack.c.b16 %v441, %v440
        %444 = vmatprep.subr.bf16.mxu0 0
        %445 = vmatpush1.bf16.xpose.msra.mxu0 0
        %446 = vmatprep.subr.bf16.mxu0 0
        %447 = vmatpush1.bf16.xpose.msra.mxu0 0
        %448 = vmatprep.subr.bf16.mxu0 0
        %449 = vmatpush1.bf16.xpose.msra.mxu0 0
        %450 = vmatprep.subr.bf16.mxu0 0
        %451 = vmatpush1.bf16.xpose.msra.mxu0 0
        %452 = vmatprep.subr.bf16.mxu0 0
        %453 = vmatpush1.bf16.xpose.msra.mxu0 0
        %454 = vmatprep.subr.bf16.mxu0 0
        %455 = vmatpush1.bf16.xpose.msra.mxu0 0
        %456 = vmatprep.subr.bf16.mxu0 0
        %457 = vmatpush1.bf16.xpose.msra.mxu0 0
        %458 = vmatprep.subr.bf16.mxu0 0
        %459 = vmatpush1.bf16.xpose.msra.mxu0 %v442
        %460 = vmatprep.subr.bf16.mxu0 0
        %461 = vmatpush2.bf16.xpose.msra.mxu0 0
        %462 = vmatprep.subr.bf16.mxu0 0
        %463 = vmatpush2.bf16.xpose.msra.mxu0 0
        %464 = vmatprep.subr.bf16.mxu0 0
        %465 = vmatpush2.bf16.xpose.msra.mxu0 0
        %466 = vmatprep.subr.bf16.mxu0 0
        %467 = vmatpush2.bf16.xpose.msra.mxu0 0
        %468 = vmatprep.subr.bf16.mxu0 0
        %469 = vmatpush2.bf16.xpose.msra.mxu0 0
        %470 = vmatprep.subr.bf16.mxu0 0
        %471 = vmatpush2.bf16.xpose.msra.mxu0 0
        %472 = vmatprep.subr.bf16.mxu0 0
        %473 = vmatpush2.bf16.xpose.msra.mxu0 0
        %474 = vmatprep.subr.bf16.mxu0 0
        %475 = vmatpush2.bf16.xpose.msra.mxu0 0
        %476 = vmatprep.mubr.bf16.mxu0 0
        %477 = vmatmul.mubr.bf16.gmra.mxu0 %v436
        %v478 = vpop.f32.mrf.mxu0
        %v479 = vadd.f32 0.0, %v478
        %v480 = vpop.f32.mrf.mxu0
        %v481 = vpop.f32.mrf.mxu0
        %v482 = vadd.f32 0.0, %v481
        %v483 = vpop.f32.mrf.mxu0
        %484 = vdwg.mxu0
        %s485 = smul.u32 %s23, 16
        %v486 = vlaneseq
        %v487 = vand.u32 %v486, 127
        %v488 = vstv %s485
        %v489 = vadd.s32 %v488, %v487
        %vm490 = vcmp.lt.s32.totalorder %v489, 5
        %v491 = vsel %vm490, %v479, -1e+30
        %v492 = vsel %vm490, %v482, -1e+30
        %v493 = vld [vmem:[#allocation2] sm:$0xff]
        %v494 = vld [vmem:[#allocation2 + $0x8] sm:$0xff]
        %vm495 = vcmask 130048
        %v496 = vsel %vm495, %v491, -inf
        %497 = vmax.xlane.f32.xlu0 %v496
        %v498 = vpop.xlane.xlu0 %497
        %v499 = vsel %vm495, %v492, -inf
        %500 = vmax.xlane.f32.xlu0 %v499
        %v501 = vpop.xlane.xlu0 %500
        %v502 = vmax.f32 %v493, %v498
        %v503 = vmax.f32 %v494, %v501
        %v504 = vsub.f32 %v493, %v502
        %v505 = vsub.f32 %v494, %v503
        %v506 = vmul.f32 %v504, 1.442695
        %v507 = vpow.pop %v506
        %v508 = vmul.f32 %v505, 1.442695
        %v509 = vpow.pop %v508
        %511 = vset.pattern.permute.xlu0 0
        %512 = vperm.xlu0 %511, %v502
        %v513 = vpop.permute.xlu0 %512
        %516 = vset.pattern.permute.xlu0 0
        %517 = vperm.xlu0 %516, %v503
        %v518 = vpop.permute.xlu0 %517
        %v520 = vsub.f32 %v491, %v513
        %v521 = vsub.f32 %v492, %v518
        %v522 = vmul.f32 %v520, 1.442695
        %v523 = vpow.pop %v522
        %v524 = vmul.f32 %v521, 1.442695
        %v525 = vpow.pop %v524
        %v526 = vld [vmem:[#allocation3] sm:$0xff]
        %v527 = vld [vmem:[#allocation3 + $0x8] sm:$0xff]
        %v528 = vmul.f32 %v507, %v526
        %v529 = vmul.f32 %v509, %v527
        %v530 = vsel %vm495, %v523, 0.0
        %531 = vadd.xlane.f32.xlu0 %v530
        %v532 = vpop.xlane.xlu0 %531
        %v533 = vsel %vm495, %v525, 0.0
        %534 = vadd.xlane.f32.xlu0 %v533
        %v535 = vpop.xlane.xlu0 %534
        %v536 = vadd.f32 %v528, %v532
        %v537 = vadd.f32 %v529, %v535
        %vm538 = vcmask 7168
        %539 = vst.msk [vmem:[#allocation3] sm:$0xff] %vm538, %v536
        %540 = vst.msk [vmem:[#allocation3 + $0x8] sm:$0xff] %vm538, %v537
        %v541 = vld [vmem:[#allocation4] sm:$0xff]
        %v542 = vld [vmem:[#allocation4 + $0x8] sm:$0xff]
        %544 = vset.pattern.permute.xlu0 0
        %545 = vperm.xlu0 %544, %v507
        %v546 = vpop.permute.xlu0 %545
        %549 = vset.pattern.permute.xlu0 0
        %550 = vperm.xlu0 %549, %v509
        %v551 = vpop.permute.xlu0 %550
        %v553 = vmul.f32 %v546, %v541
        %v554 = vmul.f32 %v551, %v542
        %v555 = vpack.c.bf16 %v525, %v523
        %v556 = vld [vmem:[%s378] sm:$0xf]
        %v557 = vld [vmem:[%s378 + $0x4] sm:$0xf]
        %v560 = vunpack.c.l.b16 %v556
        %v561 = vunpack.c.l.b16 %v557
        %v562 = vpack.c.b16 %v561, %v560
        %v565 = vsel %vm495, %v555, 0
        %567 = vmatprep.subr.bf16.mxu0 0
        %568 = vmatpush1.bf16.msra.mxu0 0
        %569 = vmatprep.subr.bf16.mxu0 0
        %570 = vmatpush1.bf16.msra.mxu0 0
        %571 = vmatprep.subr.bf16.mxu0 0
        %572 = vmatpush1.bf16.msra.mxu0 0
        %573 = vmatprep.subr.bf16.mxu0 0
        %574 = vmatpush1.bf16.msra.mxu0 0
        %575 = vmatprep.subr.bf16.mxu0 0
        %576 = vmatpush1.bf16.msra.mxu0 0
        %577 = vmatprep.subr.bf16.mxu0 0
        %578 = vmatpush1.bf16.msra.mxu0 0
        %579 = vmatprep.subr.bf16.mxu0 0
        %580 = vmatpush1.bf16.msra.mxu0 0
        %581 = vmatprep.subr.bf16.mxu0 0
        %582 = vmatpush1.bf16.msra.mxu0 %v562
        %583 = vmatprep.subr.bf16.mxu0 0
        %584 = vmatpush2.bf16.msra.mxu0 0
        %585 = vmatprep.subr.bf16.mxu0 0
        %586 = vmatpush2.bf16.msra.mxu0 0
        %587 = vmatprep.subr.bf16.mxu0 0
        %588 = vmatpush2.bf16.msra.mxu0 0
        %589 = vmatprep.subr.bf16.mxu0 0
        %590 = vmatpush2.bf16.msra.mxu0 0
        %591 = vmatprep.subr.bf16.mxu0 0
        %592 = vmatpush2.bf16.msra.mxu0 0
        %593 = vmatprep.subr.bf16.mxu0 0
        %594 = vmatpush2.bf16.msra.mxu0 0
        %595 = vmatprep.subr.bf16.mxu0 0
        %596 = vmatpush2.bf16.msra.mxu0 0
        %597 = vmatprep.subr.bf16.mxu0 0
        %598 = vmatpush2.bf16.msra.mxu0 0
        %599 = vmatprep.mubr.bf16.mxu0 0
        %600 = vmatmul.mubr.bf16.gmra.mxu0 %v565
        %v601 = vpop.f32.mrf.mxu0
        %v602 = vadd.f32 0.0, %v601
        %v603 = vpop.f32.mrf.mxu0
        %v604 = vpop.f32.mrf.mxu0
        %v605 = vadd.f32 0.0, %v604
        %v606 = vpop.f32.mrf.mxu0
        %607 = vdwg.mxu0
        %v608 = vadd.f32 %v553, %v602
        %v609 = vadd.f32 %v554, %v605
        %610 = vst [vmem:[#allocation4] sm:$0xff] %v608
        %611 = vst [vmem:[#allocation4 + $0x8] sm:$0xff] %v609
        %612 = vst.msk [vmem:[#allocation2] sm:$0xff] %vm538, %v502
        %613 = vst.msk [vmem:[#allocation2 + $0x8] sm:$0xff] %vm538, %v503
        // Predicated region
        $region160: #{cradio_v2_forward.12} parent=142 // pred_check
          %p614 = pneg %p417
        $region161: #{cradio_v2_forward.12} parent=142 // pred_check_branch
          %616 = sbr.rel (%p614) target = $region163
        $region162: #{cradio_v2_forward.12} parent=142 // pred_region
          %v617 = vld [vmem:[#allocation4] sm:$0xff]
          %v618 = vld [vmem:[#allocation4 + $0x8] sm:$0xff]
          %v619 = vld [vmem:[#allocation3] sm:$0xff]
          %v620 = vld [vmem:[#allocation3 + $0x8] sm:$0xff]
          %v621 = vrcp.pop %v619
          %v622 = vrcp.pop %v620
          %624 = vset.pattern.permute.xlu0 0
          %625 = vperm.xlu0 %624, %v621
          %v626 = vpop.permute.xlu0 %625
          %629 = vset.pattern.permute.xlu0 0
          %630 = vperm.xlu0 %629, %v622
          %v631 = vpop.permute.xlu0 %630
          %v633 = vmul.f32 %v617, %v626
          %v634 = vmul.f32 %v618, %v631
          %v635 = vpack.c.bf16 %v634, %v633
          %v637 = vunpack.c.l.b16 %v635
          %v638 = vunpack.c.h.b16 %v635
          %v639 = vpack.c.b16 %v637, %v637
          %v640 = vpack.c.b16 %v638, %v638
          %643 = vst [vmem:[%s405] sm:$0xf] %v639
          %644 = vst [vmem:[%s405 + $0x4] sm:$0xf] %v640
        $region163: #{cradio_v2_forward.12} parent=142 // pred_fallthru
          _
        %s645 = sand.u32 %s146, 1
        %s646 = sand.u32 %s146, 1
        %s647 = smul.addr %s646, 8
        %s648 = scalar_lea.vmem [#allocation8], %s647
        // Predicated region
        $region164: #{cradio_v2_forward.12} parent=142 // pred_check
          %p649 = pneg %p156
        $region165: #{cradio_v2_forward.12} parent=142 // pred_check_branch
          %651 = sbr.rel (%p649) target = $region167
        $region166: #{cradio_v2_forward.12} parent=142 // pred_region
          %s652 = sadd.s32 %s20, %s22
          %s653 = smul.u32 2, %s652
          %s654 = smul.addr %s653, 4
          %s655 = sadd.s32 %s21, %s654
          %s656 = smul.addr %s655, 4
          %s657 = scalar_lea.vmem %s3, %s656
          // Predicated region
          $region168: #{cradio_v2_forward.12} parent=166 // pred_check
            _
          $region169: #{cradio_v2_forward.12} parent=166 // pred_check_branch
            %659 = sbr.rel (0) target = $region171
          $region170: #{cradio_v2_forward.12} parent=166 // pred_region
            // Predicated region
            $region172: #{cradio_v2_forward.12} parent=170 // pred_check
              _
            $region173: #{cradio_v2_forward.12} parent=170 // pred_check_branch
              %661 = sbr.rel target = $region175
            $region174: #{cradio_v2_forward.12} parent=170 // pred_region
              // Predicated region
              $region187: #{cradio_v2_forward.12} parent=174 // pred_check
                _
              $region188: #{cradio_v2_forward.12} parent=174 // pred_check_branch
                %679 = sbr.rel (0) target = $region190
              $region189: #{cradio_v2_forward.12} parent=174 // pred_region
                loop: start=0, step=1, limit=1
                $region191: #{cradio_v2_forward.12} parent=189 // loop_pre_header
                  _
                $region192: #{cradio_v2_forward.12} parent=189 // loop_header
                  %s681 = sphi 0, %s685
                  %p682 = scmp.ge.s32.totalorder %s681, 1
                  %s686 = sphi %s648, %s648
                  %s687 = sphi %s657, %s657
                $region193: #{cradio_v2_forward.12} parent=189 // loop_header_branch
                  %684 = sbr.rel (%p682) target = $region197
                $region194: #{cradio_v2_forward.12} parent=189 // loop_body
                  _
                $region195: #{cradio_v2_forward.12} parent=189 // loop_footer
                  %s685 = sadd.s32 1, %s681
                $region196: #{cradio_v2_forward.12} parent=189 // loop_footer_branch
                  %680 = sbr.rel target = $region192
                $region197: #{cradio_v2_forward.12} parent=189 // loop_exit
                  _
                %s689 = ssub.s32 16, 1
                loop: start=0, step=1, limit=1
                $region198: #{cradio_v2_forward.12} parent=189 // loop_pre_header
                  _
                $region199: #{cradio_v2_forward.12} parent=189 // loop_header
                  %s691 = sphi 0, %s695
                  %p692 = scmp.ge.s32.totalorder %s691, 1
                  %s696 = sphi %s648, %s648
                  %s697 = sphi %s657, %s657
                $region200: #{cradio_v2_forward.12} parent=189 // loop_header_branch
                  %694 = sbr.rel (%p692) target = $region204
                $region201: #{cradio_v2_forward.12} parent=189 // loop_body
                  %v698 = vld [vmem:[%s696] sm:%s689]
                  %699 = vst [vmem:[%s697] sm:%s689] %v698
                  %v700 = vld [vmem:[%s696 + $0x4] sm:%s689]
                  %701 = vst [vmem:[%s697 + $0x10] sm:%s689] %v700
                $region202: #{cradio_v2_forward.12} parent=189 // loop_footer
                  %s695 = sadd.s32 1, %s691
                $region203: #{cradio_v2_forward.12} parent=189 // loop_footer_branch
                  %690 = sbr.rel target = $region199
                $region204: #{cradio_v2_forward.12} parent=189 // loop_exit
                  _
              $region190: #{cradio_v2_forward.12} parent=174 // pred_fallthru
                _
            $region175: #{cradio_v2_forward.12} parent=170 // pred_fallthru
              _
            // Predicated region
            $region176: #{cradio_v2_forward.12} parent=170 // pred_check
              _
            $region177: #{cradio_v2_forward.12} parent=170 // pred_check_branch
              %663 = sbr.rel (0) target = $region179
            $region178: #{cradio_v2_forward.12} parent=170 // pred_region
              %s665 = ssub.s32 16, 1
              loop: start=0, step=1, limit=1
              $region180: #{cradio_v2_forward.12} parent=178 // loop_pre_header
                _
              $region181: #{cradio_v2_forward.12} parent=178 // loop_header
                %s667 = sphi 0, %s671
                %p668 = scmp.ge.s32.totalorder %s667, 1
                %s672 = sphi %s648, %s648
                %s673 = sphi %s657, %s657
              $region182: #{cradio_v2_forward.12} parent=178 // loop_header_branch
                %670 = sbr.rel (%p668) target = $region186
              $region183: #{cradio_v2_forward.12} parent=178 // loop_body
                %v674 = vld [vmem:[%s672] sm:%s665]
                %675 = vst [vmem:[%s673] sm:%s665] %v674
                %v676 = vld [vmem:[%s672 + $0x4] sm:%s665]
                %677 = vst [vmem:[%s673 + $0x10] sm:%s665] %v676
              $region184: #{cradio_v2_forward.12} parent=178 // loop_footer
                %s671 = sadd.s32 1, %s667
              $region185: #{cradio_v2_forward.12} parent=178 // loop_footer_branch
                %666 = sbr.rel target = $region181
              $region186: #{cradio_v2_forward.12} parent=178 // loop_exit
                _
            $region179: #{cradio_v2_forward.12} parent=170 // pred_fallthru
              _
          $region171: #{cradio_v2_forward.12} parent=166 // pred_fallthru
            _
          %702 = vnop
        $region167: #{cradio_v2_forward.12} parent=142 // pred_fallthru
          _
      $region143: #{cradio_v2_forward.12} parent=5 // pred_fallthru
        _
      %p703 = scmp.le.s32.totalorder 2, %s9
      // Predicated region
      $region205: #{cradio_v2_forward.12} parent=5 // pred_check
        %p704 = pneg %p703
      $region206: #{cradio_v2_forward.12} parent=5 // pred_check_branch
        %706 = sbr.rel (%p704) target = $region208
      $region207: #{cradio_v2_forward.12} parent=5 // pred_region
        %s707 = ssub.s32 %s9, 2
        // Predicated region
        $region209: #{cradio_v2_forward.12} parent=207 // pred_check
          %p708 = pneg %p162
        $region210: #{cradio_v2_forward.12} parent=207 // pred_check_branch
          %710 = sbr.rel (%p708) target = $region212
        $region211: #{cradio_v2_forward.12} parent=207 // pred_region
          %s711 = sand.u32 %s147, 1
          %s712 = sand.u32 %s147, 1
          %s713 = smul.addr %s712, 8
          %s714 = scalar_lea.vmem [#allocation8], %s713
        $region212: #{cradio_v2_forward.12} parent=207 // pred_fallthru
          _
      $region208: #{cradio_v2_forward.12} parent=5 // pred_fallthru
        _
    $region6: #{cradio_v2_forward.12} parent=1 // loop_footer
      %s13 = sadd.s32 1, %s9
    $region7: #{cradio_v2_forward.12} parent=1 // loop_footer_branch
      %8 = sbr.rel target = $region3
    $region8: #{cradio_v2_forward.12} parent=1 // loop_exit
      _

// kernel: cradio_v2_forward.11
$region0: #{cradio_v2_forward.11}
  #allocation0 [shape = 'u32[]', space=smem, size = 0x4, offset = 0x4, fixed_abs, tag = 'smem constant byte address 0x4 - core index']
  #allocation1 [shape = 'u32[144,128]{1,0:T(1,128)}', space=vmem, size = 0x12000, scoped, tag = 'internal scratch']
  #allocation2 [shape = 'bf16[32,64]{1,0:T(8,128)(2,1)}', space=vmem, size = 0x2000, scoped, tag = 'scratch operand']
  %s0 = inlined_call_operand.vmem [shape: f32[32,64], index: 0, kind: input, shape index: {}]
  %s1 = inlined_call_operand.vmem [shape: f32[1,64], index: 1, kind: input, shape index: {}]
  %s2 = inlined_call_operand.vmem [shape: f32[1,64], index: 2, kind: input, shape index: {}]
  %s3 = inlined_call_operand.vmem [shape: bf16[64,1536], index: 3, kind: input, shape index: {}]
  %s4 = inlined_call_operand.vmem [shape: f32[1,1536], index: 4, kind: input, shape index: {}]
  %s5 = inlined_call_operand.vmem [shape: bf16[32,1536], index: 5, kind: output, shape index: {}]
  %s6 = sld [smem:[#allocation0]]
  $region99: #{cradio_v2_forward.11} parent=0
    _
  %s8 = ssub.s32 1, %s6
  %s9 = scalar_select 0, %s8, %s6
  $region1: #{cradio_v2_forward.11} parent=0
    #allocation3 [shape = 'u8[196608]{0}', space=vmem, size = 0x30000, scoped, tag = 'input window, operand 3']
    #allocation4 [shape = 'u8[98304]{0}', space=vmem, size = 0x18000, scoped, tag = 'output window, operand 0']
    loop: start=0, step=1, limit=4
    $region2: #{cradio_v2_forward.11} parent=1 // loop_pre_header
      _
    $region3: #{cradio_v2_forward.11} parent=1 // loop_header
      %s11 = sphi 0, %s15
      %p12 = scmp.ge.s32.totalorder %s11, 4
      %s18 = sphi 0, %s30
      %s19 = sphi 0, %s26
      %s20 = sphi 0, %s18
      %s21 = sphi 0, %s19
      %s22 = sphi 0, %s20
      %s23 = sphi 0, %s21
      %s33 = sphi 0, %s35
      %s36 = sphi 0, %s33
      %s37 = sphi 0, %s36
      %s53 = sphi 0, %s37
      %s57 = sphi 0, %s57
      %s59 = sphi 0, %s57
      %s60 = sphi 0, %s59
      %s74 = sphi 0, %s60
      %s78 = sphi 0, %s78
      %s80 = sphi 0, %s78
      %s81 = sphi 0, %s80
      %s95 = sphi 0, %s81
      %s101 = sphi 0, %s103
      %s104 = sphi 0, %s101
      %s105 = sphi 0, %s104
      %s121 = sphi 0, %s105
      %s127 = sphi 0, %s129
      %s130 = sphi 0, %s127
      %s131 = sphi 0, %s130
      %s147 = sphi 0, %s131
      %s155 = sphi 0, %s157
      %s158 = sphi 0, %s155
      %s159 = sphi 0, %s158
      %s175 = sphi 0, %s159
    $region4: #{cradio_v2_forward.11} parent=1 // loop_header_branch
      %14 = sbr.rel (%p12) target = $region8
    $region5: #{cradio_v2_forward.11} parent=1 // loop_body
      %s16 = ssub.s32 %s11, 1
      %s17 = ssub.s32 %s11, 2
      %s24 = sadd.s32 1, %s19
      %p25 = scmp.ge.s32.totalorder %s24, 2
      %s26 = scalar_select %p25, 0, %s24
      %s27 = sadd.s32 1, %s18
      %s28 = scalar_select %p25, %s27, %s18
      %p29 = scmp.ge.s32.totalorder %s28, 1
      %s30 = scalar_select %p29, 0, %s28
      %s31 = ssub.s32 %s18, %s30
      %p32 = scmp.eq.s32.totalorder %s31, 0
      %s34 = sadd.s32 %s33, 1
      %s35 = scalar_select %p32, %s33, %s34
      %p38 = pneg %p32
      %p39 = scmp.eq.s32.totalorder %s11, 1
      %p40 = por %p38, %p39
      %p41 = scmp.ne.s32.totalorder %s33, %s36
      %p42 = scmp.eq.s32.totalorder %s11, 0
      %p43 = por %p41, %p42
      %p44 = scmp.ne.s32.totalorder %s33, %s36
      %p45 = scmp.eq.s32.totalorder %s16, 1
      %p46 = por %p44, %p45
      %p47 = scmp.ne.s32.totalorder %s36, %s37
      %p48 = scmp.eq.s32.totalorder %s16, 0
      %p49 = por %p47, %p48
      %p50 = scmp.ne.s32.totalorder %s36, %s37
      %p51 = scmp.eq.s32.totalorder %s17, 1
      %p52 = por %p50, %p51
      %p54 = scmp.ne.s32.totalorder %s37, %s53
      %p55 = scmp.eq.s32.totalorder %s17, 0
      %p56 = por %p54, %p55
      %s58 = sadd.s32 %s57, 1
      %p61 = scmp.eq.s32.totalorder %s11, 1
      %p62 = scmp.ne.s32.totalorder %s57, %s59
      %p63 = scmp.eq.s32.totalorder %s11, 0
      %p64 = por %p62, %p63
      %p65 = scmp.ne.s32.totalorder %s57, %s59
      %p66 = scmp.eq.s32.totalorder %s16, 1
      %p67 = por %p65, %p66
      %p68 = scmp.ne.s32.totalorder %s59, %s60
      %p69 = scmp.eq.s32.totalorder %s16, 0
      %p70 = por %p68, %p69
      %p71 = scmp.ne.s32.totalorder %s59, %s60
      %p72 = scmp.eq.s32.totalorder %s17, 1
      %p73 = por %p71, %p72
      %p75 = scmp.ne.s32.totalorder %s60, %s74
      %p76 = scmp.eq.s32.totalorder %s17, 0
      %p77 = por %p75, %p76
      %s79 = sadd.s32 %s78, 1
      %p82 = scmp.eq.s32.totalorder %s11, 1
      %p83 = scmp.ne.s32.totalorder %s78, %s80
      %p84 = scmp.eq.s32.totalorder %s11, 0
      %p85 = por %p83, %p84
      %p86 = scmp.ne.s32.totalorder %s78, %s80
      %p87 = scmp.eq.s32.totalorder %s16, 1
      %p88 = por %p86, %p87
      %p89 = scmp.ne.s32.totalorder %s80, %s81
      %p90 = scmp.eq.s32.totalorder %s16, 0
      %p91 = por %p89, %p90
      %p92 = scmp.ne.s32.totalorder %s80, %s81
      %p93 = scmp.eq.s32.totalorder %s17, 1
      %p94 = por %p92, %p93
      %p96 = scmp.ne.s32.totalorder %s81, %s95
      %p97 = scmp.eq.s32.totalorder %s17, 0
      %p98 = por %p96, %p97
      %s99 = ssub.s32 %s19, %s26
      %p100 = scmp.eq.s32.totalorder %s99, 0
      %s102 = sadd.s32 %s101, 1
      %s103 = scalar_select %p100, %s101, %s102
      %p106 = pneg %p100
      %p107 = scmp.eq.s32.totalorder %s11, 1
      %p108 = por %p106, %p107
      %p109 = scmp.ne.s32.totalorder %s101, %s104
      %p110 = scmp.eq.s32.totalorder %s11, 0
      %p111 = por %p109, %p110
      %p112 = scmp.ne.s32.totalorder %s101, %s104
      %p113 = scmp.eq.s32.totalorder %s16, 1
      %p114 = por %p112, %p113
      %p115 = scmp.ne.s32.totalorder %s104, %s105
      %p116 = scmp.eq.s32.totalorder %s16, 0
      %p117 = por %p115, %p116
      %p118 = scmp.ne.s32.totalorder %s104, %s105
      %p119 = scmp.eq.s32.totalorder %s17, 1
      %p120 = por %p118, %p119
      %p122 = scmp.ne.s32.totalorder %s105, %s121
      %p123 = scmp.eq.s32.totalorder %s17, 0
      %p124 = por %p122, %p123
      %s125 = ssub.s32 %s19, %s26
      %p126 = scmp.eq.s32.totalorder %s125, 0
      %s128 = sadd.s32 %s127, 1
      %s129 = scalar_select %p126, %s127, %s128
      %p132 = pneg %p126
      %p133 = scmp.eq.s32.totalorder %s11, 1
      %p134 = por %p132, %p133
      %p135 = scmp.ne.s32.totalorder %s127, %s130
      %p136 = scmp.eq.s32.totalorder %s11, 0
      %p137 = por %p135, %p136
      %p138 = scmp.ne.s32.totalorder %s127, %s130
      %p139 = scmp.eq.s32.totalorder %s16, 1
      %p140 = por %p138, %p139
      %p141 = scmp.ne.s32.totalorder %s130, %s131
      %p142 = scmp.eq.s32.totalorder %s16, 0
      %p143 = por %p141, %p142
      %p144 = scmp.ne.s32.totalorder %s130, %s131
      %p145 = scmp.eq.s32.totalorder %s17, 1
      %p146 = por %p144, %p145
      %p148 = scmp.ne.s32.totalorder %s131, %s147
      %p149 = scmp.eq.s32.totalorder %s17, 0
      %p150 = por %p148, %p149
      %s151 = ssub.s32 %s18, %s30
      %s152 = ssub.s32 %s19, %s26
      %s153 = sor.u32 %s151, %s152
      %p154 = scmp.eq.s32.totalorder %s153, 0
      %s156 = sadd.s32 %s155, 1
      %s157 = scalar_select %p154, %s155, %s156
      %p160 = pneg %p154
      %p161 = scmp.eq.s32.totalorder %s11, 1
      %p162 = por %p160, %p161
      %p163 = scmp.ne.s32.totalorder %s155, %s158
      %p164 = scmp.eq.s32.totalorder %s11, 0
      %p165 = por %p163, %p164
      %p166 = scmp.ne.s32.totalorder %s155, %s158
      %p167 = scmp.eq.s32.totalorder %s16, 1
      %p168 = por %p166, %p167
      %p169 = scmp.ne.s32.totalorder %s158, %s159
      %p170 = scmp.eq.s32.totalorder %s16, 0
      %p171 = por %p169, %p170
      %p172 = scmp.ne.s32.totalorder %s158, %s159
      %p173 = scmp.eq.s32.totalorder %s17, 1
      %p174 = por %p172, %p173
      %p176 = scmp.ne.s32.totalorder %s159, %s175
      %p177 = scmp.eq.s32.totalorder %s17, 0
      %p178 = por %p176, %p177
      %p179 = scmp.le.s32.totalorder 1, %s11
      %p180 = scmp.lt.s32.totalorder %s11, 3
      %p181 = pnand %p179, %p180
      %p182 = pneg %p181
      // Predicated region
      $region9: #{cradio_v2_forward.11} parent=5 // pred_check
        _
      $region10: #{cradio_v2_forward.11} parent=5 // pred_check_branch
        %184 = sbr.rel (%p181) target = $region12
      $region11: #{cradio_v2_forward.11} parent=5 // pred_region
        %s185 = ssub.s32 %s11, 1
        // Predicated region
        $region13: #{cradio_v2_forward.11} parent=11 // pred_check
          %p186 = pneg %p49
        $region14: #{cradio_v2_forward.11} parent=11 // pred_check_branch
          %188 = sbr.rel (%p186) target = $region16
        $region15: #{cradio_v2_forward.11} parent=11 // pred_region
          %s189 = smul.u32 4, %s20
          %p190 = scmp.lt.s32.totalorder %s189, 3
          %s191 = scalar_select %p190, %s189, 3
          %s192 = smul.addr %s191, 8
          %s193 = scalar_lea.vmem %s0, %s192
          %s194 = smul.u32 4, %s20
        $region16: #{cradio_v2_forward.11} parent=11 // pred_fallthru
          _
        // Predicated region
        $region17: #{cradio_v2_forward.11} parent=11 // pred_check
          %p195 = pneg %p70
        $region18: #{cradio_v2_forward.11} parent=11 // pred_check_branch
          %197 = sbr.rel (%p195) target = $region20
        $region19: #{cradio_v2_forward.11} parent=11 // pred_region
          _
        $region20: #{cradio_v2_forward.11} parent=11 // pred_fallthru
          _
        // Predicated region
        $region21: #{cradio_v2_forward.11} parent=11 // pred_check
          %p198 = pneg %p91
        $region22: #{cradio_v2_forward.11} parent=11 // pred_check_branch
          %200 = sbr.rel (%p198) target = $region24
        $region23: #{cradio_v2_forward.11} parent=11 // pred_region
          _
        $region24: #{cradio_v2_forward.11} parent=11 // pred_fallthru
          _
      $region12: #{cradio_v2_forward.11} parent=5 // pred_fallthru
        _
      %p201 = scmp.lt.s32.totalorder %s11, 2
      // Predicated region
      $region25: #{cradio_v2_forward.11} parent=5 // pred_check
        %p202 = pneg %p201
      $region26: #{cradio_v2_forward.11} parent=5 // pred_check_branch
        %204 = sbr.rel (%p202) target = $region28
      $region27: #{cradio_v2_forward.11} parent=5 // pred_region
        // Predicated region
        $region29: #{cradio_v2_forward.11} parent=27 // pred_check
          %p205 = pneg %p111
        $region30: #{cradio_v2_forward.11} parent=27 // pred_check_branch
          %207 = sbr.rel (%p205) target = $region32
        $region31: #{cradio_v2_forward.11} parent=27 // pred_region
          %s208 = sand.u32 %s101, 1
          %s209 = sand.u32 %s101, 1
          %s210 = smul.addr %s209, 192
          %s211 = scalar_lea.vmem [#allocation3], %s210
          %s212 = smul.u32 6, %s19
          %s213 = smul.addr %s212, 4
          %s214 = scalar_lea.vmem %s3, %s213
          // Predicated region
          $region33: #{cradio_v2_forward.11} parent=31 // pred_check
            _
          $region34: #{cradio_v2_forward.11} parent=31 // pred_check_branch
            %216 = sbr.rel (0) target = $region36
          $region35: #{cradio_v2_forward.11} parent=31 // pred_region
            // Predicated region
            $region37: #{cradio_v2_forward.11} parent=35 // pred_check
              _
            $region38: #{cradio_v2_forward.11} parent=35 // pred_check_branch
              %218 = sbr.rel (0) target = $region40
            $region39: #{cradio_v2_forward.11} parent=35 // pred_region
              loop: start=0, step=1, limit=1
              $region41: #{cradio_v2_forward.11} parent=39 // loop_pre_header
                _
              $region42: #{cradio_v2_forward.11} parent=39 // loop_header
                %s220 = sphi 0, %s224
                %p221 = scmp.ge.s32.totalorder %s220, 1
                %s225 = sphi %s214, %s214
                %s226 = sphi %s211, %s211
              $region43: #{cradio_v2_forward.11} parent=39 // loop_header_branch
                %223 = sbr.rel (%p221) target = $region47
              $region44: #{cradio_v2_forward.11} parent=39 // loop_body
                %v227 = vld [vmem:[%s225] sm:$0xff]
                %228 = vst [vmem:[%s226] sm:$0xff] %v227
                %v229 = vld [vmem:[%s225 + $0x8] sm:$0xff]
                %230 = vst [vmem:[%s226 + $0x8] sm:$0xff] %v229
                %v231 = vld [vmem:[%s225 + $0x10] sm:$0xff]
                %232 = vst [vmem:[%s226 + $0x10] sm:$0xff] %v231
                %v233 = vld [vmem:[%s225 + $0x30] sm:$0xff]
                %234 = vst [vmem:[%s226 + $0x18] sm:$0xff] %v233
                %v235 = vld [vmem:[%s225 + $0x38] sm:$0xff]
                %236 = vst [vmem:[%s226 + $0x20] sm:$0xff] %v235
                %v237 = vld [vmem:[%s225 + $0x40] sm:$0xff]
                %238 = vst [vmem:[%s226 + $0x28] sm:$0xff] %v237
                %v239 = vld [vmem:[%s225 + $0x60] sm:$0xff]
                %240 = vst [vmem:[%s226 + $0x30] sm:$0xff] %v239
                %v241 = vld [vmem:[%s225 + $0x68] sm:$0xff]
                %242 = vst [vmem:[%s226 + $0x38] sm:$0xff] %v241
                %v243 = vld [vmem:[%s225 + $0x70] sm:$0xff]
                %244 = vst [vmem:[%s226 + $0x40] sm:$0xff] %v243
                %v245 = vld [vmem:[%s225 + $0x90] sm:$0xff]
                %246 = vst [vmem:[%s226 + $0x48] sm:$0xff] %v245
                %v247 = vld [vmem:[%s225 + $0x98] sm:$0xff]
                %248 = vst [vmem:[%s226 + $0x50] sm:$0xff] %v247
                %v249 = vld [vmem:[%s225 + $0xa0] sm:$0xff]
                %250 = vst [vmem:[%s226 + $0x58] sm:$0xff] %v249
                %v251 = vld [vmem:[%s225 + $0xc0] sm:$0xff]
                %252 = vst [vmem:[%s226 + $0x60] sm:$0xff] %v251
                %v253 = vld [vmem:[%s225 + $0xc8] sm:$0xff]
                %254 = vst [vmem:[%s226 + $0x68] sm:$0xff] %v253
                %v255 = vld [vmem:[%s225 + $0xd0] sm:$0xff]
                %256 = vst [vmem:[%s226 + $0x70] sm:$0xff] %v255
                %v257 = vld [vmem:[%s225 + $0xf0] sm:$0xff]
                %258 = vst [vmem:[%s226 + $0x78] sm:$0xff] %v257
                %v259 = vld [vmem:[%s225 + $0xf8] sm:$0xff]
                %260 = vst [vmem:[%s226 + $0x80] sm:$0xff] %v259
                %v261 = vld [vmem:[%s225 + $0x100] sm:$0xff]
                %262 = vst [vmem:[%s226 + $0x88] sm:$0xff] %v261
                %v263 = vld [vmem:[%s225 + $0x120] sm:$0xff]
                %264 = vst [vmem:[%s226 + $0x90] sm:$0xff] %v263
                %v265 = vld [vmem:[%s225 + $0x128] sm:$0xff]
                %266 = vst [vmem:[%s226 + $0x98] sm:$0xff] %v265
                %v267 = vld [vmem:[%s225 + $0x130] sm:$0xff]
                %268 = vst [vmem:[%s226 + $0xa0] sm:$0xff] %v267
                %v269 = vld [vmem:[%s225 + $0x150] sm:$0xff]
                %270 = vst [vmem:[%s226 + $0xa8] sm:$0xff] %v269
                %v271 = vld [vmem:[%s225 + $0x158] sm:$0xff]
                %272 = vst [vmem:[%s226 + $0xb0] sm:$0xff] %v271
                %v273 = vld [vmem:[%s225 + $0x160] sm:$0xff]
                %274 = vst [vmem:[%s226 + $0xb8] sm:$0xff] %v273
              $region45: #{cradio_v2_forward.11} parent=39 // loop_footer
                %s224 = sadd.s32 1, %s220
              $region46: #{cradio_v2_forward.11} parent=39 // loop_footer_branch
                %219 = sbr.rel target = $region42
              $region47: #{cradio_v2_forward.11} parent=39 // loop_exit
                _
            $region40: #{cradio_v2_forward.11} parent=35 // pred_fallthru
              _
            // Predicated region
            $region48: #{cradio_v2_forward.11} parent=35 // pred_check
              _
            $region49: #{cradio_v2_forward.11} parent=35 // pred_check_branch
              %276 = sbr.rel target = $region51
            $region50: #{cradio_v2_forward.11} parent=35 // pred_region
              _
            $region51: #{cradio_v2_forward.11} parent=35 // pred_fallthru
              _
          $region36: #{cradio_v2_forward.11} parent=31 // pred_fallthru
            _
          %277 = vnop
        $region32: #{cradio_v2_forward.11} parent=27 // pred_fallthru
          _
        // Predicated region
        $region52: #{cradio_v2_forward.11} parent=27 // pred_check
          %p278 = pneg %p137
        $region53: #{cradio_v2_forward.11} parent=27 // pred_check_branch
          %280 = sbr.rel (%p278) target = $region55
        $region54: #{cradio_v2_forward.11} parent=27 // pred_region
          %s281 = smul.u32 6, %s19
          %p282 = scmp.lt.s32.totalorder %s281, 11
          %s283 = scalar_select %p282, %s281, 11
          %s284 = scalar_lea.vmem %s4, %s283
          %s285 = smul.u32 6, %s19
        $region55: #{cradio_v2_forward.11} parent=27 // pred_fallthru
          _
      $region28: #{cradio_v2_forward.11} parent=5 // pred_fallthru
        _
      %p286 = scmp.le.s32.totalorder 1, %s11
      %p287 = scmp.lt.s32.totalorder %s11, 3
      %p288 = pnand %p286, %p287
      %p289 = pneg %p288
      // Predicated region
      $region56: #{cradio_v2_forward.11} parent=5 // pred_check
        _
      $region57: #{cradio_v2_forward.11} parent=5 // pred_check_branch
        %291 = sbr.rel (%p288) target = $region59
      $region58: #{cradio_v2_forward.11} parent=5 // pred_region
        %s292 = ssub.s32 %s11, 1
        %s293 = sand.u32 %s104, 1
        %s294 = sand.u32 %s104, 1
        %s295 = smul.addr %s294, 192
        %s296 = scalar_lea.vmem [#allocation3], %s295
        // Predicated region
        $region60: #{cradio_v2_forward.11} parent=58 // pred_check
          %p297 = pneg %p117
        $region61: #{cradio_v2_forward.11} parent=58 // pred_check_branch
          %299 = sbr.rel (%p297) target = $region63
        $region62: #{cradio_v2_forward.11} parent=58 // pred_region
          _
        $region63: #{cradio_v2_forward.11} parent=58 // pred_fallthru
          _
        %s300 = smul.u32 4, %s20
        %p301 = scmp.lt.s32.totalorder %s300, 3
        %s302 = scalar_select %p301, %s300, 3
        %s303 = smul.addr %s302, 8
        %s304 = scalar_lea.vmem %s0, %s303
        %p305 = pneg %p49
        %p306 = pneg %p46
        %p307 = pneg %p70
        %p308 = pneg %p67
        %p309 = pneg %p91
        %p310 = pneg %p88
        %s311 = sand.u32 %s104, 1
        %s312 = sand.u32 %s104, 1
        %s313 = smul.addr %s312, 192
        %s314 = scalar_lea.vmem [#allocation3], %s313
        %p315 = pneg %p117
        %p316 = pneg %p114
        %s317 = smul.u32 6, %s21
        %p318 = scmp.lt.s32.totalorder %s317, 11
        %s319 = scalar_select %p318, %s317, 11
        %s320 = scalar_lea.vmem %s4, %s319
        %p321 = pneg %p143
        %p322 = pneg %p140
        %p323 = pneg %p171
        %p324 = pneg %p168
        %s325 = sand.u32 %s158, 1
        %s326 = sand.u32 %s158, 1
        %s327 = smul.addr %s326, 96
        %s328 = scalar_lea.vmem [#allocation4], %s327
        %s329 = smul.u32 4, %s20
        %p330 = scmp.lt.s32.totalorder %s329, 3
        %s331 = scalar_select %p330, %s329, 3
        %s332 = smul.addr %s331, 8
        %s333 = scalar_lea.vmem %s0, %s332
        %s334 = smul.u32 4, %s20
        %s335 = smul.u32 6, %s21
        %s336 = smul.u32 6, %s21
        %p337 = scmp.lt.s32.totalorder %s336, 11
        %s338 = scalar_select %p337, %s336, 11
        %s339 = scalar_lea.vmem %s4, %s338
        %s340 = smul.u32 6, %s21
        %s341 = smul.u32 4, %s20
        %s342 = smul.u32 6, %s21
        %p344 = scmp.eq.s32.totalorder %s21, 0
        // Predicated region
        $region64: #{cradio_v2_forward.11} parent=58 // pred_check
          %p345 = pneg %p344
        $region65: #{cradio_v2_forward.11} parent=58 // pred_check_branch
          %347 = sbr.rel (%p345) target = $region67
        $region66: #{cradio_v2_forward.11} parent=58 // pred_region
          %v348 = vld [vmem:[%s333] sm:$0xff]
          %v349 = vld [vmem:[%s333 + $0x8] sm:$0xff]
          %v350 = vld [vmem:[%s333 + $0x10] sm:$0xff]
          %v351 = vld [vmem:[%s333 + $0x18] sm:$0xff]
          %vm352 = vcmask 523264
          %v353 = vsel %vm352, %v348, 0.0
          %354 = vadd.xlane.f32.xlu0 %v353
          %v355 = vpop.xlane.xlu0 %354
          %v356 = vsel %vm352, %v349, 0.0
          %357 = vadd.xlane.f32.xlu0 %v356
          %v358 = vpop.xlane.xlu0 %357
          %v359 = vsel %vm352, %v350, 0.0
          %360 = vadd.xlane.f32.xlu0 %v359
          %v361 = vpop.xlane.xlu0 %360
          %v362 = vsel %vm352, %v351, 0.0
          %363 = vadd.xlane.f32.xlu0 %v362
          %v364 = vpop.xlane.xlu0 %363
          %v365 = vrcp.pop 64.0
          %v366 = vmul.f32 %v355, %v365
          %v367 = vmul.f32 %v358, %v365
          %v368 = vmul.f32 %v361, %v365
          %v369 = vmul.f32 %v364, %v365
          %v370 = vsub.f32 %v348, %v366
          %v371 = vsub.f32 %v349, %v367
          %v372 = vsub.f32 %v350, %v368
          %v373 = vsub.f32 %v351, %v369
          %v374 = vmul.f32 %v370, %v370
          %v375 = vmul.f32 %v371, %v371
          %v376 = vmul.f32 %v372, %v372
          %v377 = vmul.f32 %v373, %v373
          %v378 = vsel %vm352, %v374, 0.0
          %379 = vadd.xlane.f32.xlu0 %v378
          %v380 = vpop.xlane.xlu0 %379
          %v381 = vsel %vm352, %v375, 0.0
          %382 = vadd.xlane.f32.xlu0 %v381
          %v383 = vpop.xlane.xlu0 %382
          %v384 = vsel %vm352, %v376, 0.0
          %385 = vadd.xlane.f32.xlu0 %v384
          %v386 = vpop.xlane.xlu0 %385
          %v387 = vsel %vm352, %v377, 0.0
          %388 = vadd.xlane.f32.xlu0 %v387
          %v389 = vpop.xlane.xlu0 %388
          %v390 = vmul.f32 %v380, %v365
          %v391 = vmul.f32 %v383, %v365
          %v392 = vmul.f32 %v386, %v365
          %v393 = vmul.f32 %v389, %v365
          %v394 = vadd.f32 %v390, 1e-06
          %v395 = vadd.f32 %v391, 1e-06
          %v396 = vadd.f32 %v392, 1e-06
          %v397 = vadd.f32 %v393, 1e-06
          %v398 = vrsqrt.pop %v394
          %v399 = vrsqrt.pop %v395
          %v400 = vrsqrt.pop %v396
          %v401 = vrsqrt.pop %v397
          %v402 = vmul.f32 %v370, %v398
          %v403 = vmul.f32 %v371, %v399
          %v404 = vmul.f32 %v372, %v400
          %v405 = vmul.f32 %v373, %v401
          %v406 = vld [vmem:[%s1] sm:$0x1]
          %v408 = vlaneseq
          %v409 = vshrl.u32 %v408, 7
          %v410 = vsub.s32 0, %v409
          %v411 = vrot.slane %v406, %v410
          %v413 = vmul.f32 %v402, %v411
          %v414 = vmul.f32 %v403, %v411
          %v415 = vmul.f32 %v404, %v411
          %v416 = vmul.f32 %v405, %v411
          %v417 = vld [vmem:[%s2] sm:$0x1]
          %v419 = vlaneseq
          %v420 = vshrl.u32 %v419, 7
          %v421 = vsub.s32 0, %v420
          %v422 = vrot.slane %v417, %v421
          %v424 = vadd.f32 %v413, %v422
          %v425 = vadd.f32 %v414, %v422
          %v426 = vadd.f32 %v415, %v422
          %v427 = vadd.f32 %v416, %v422
          %v428 = vpack.c.bf16 %v425, %v424
          %v429 = vpack.c.bf16 %v427, %v426
          %v432 = vunpack.c.l.b16 %v428
          %v433 = vunpack.c.h.b16 %v428
          %v434 = vunpack.c.l.b16 %v429
          %v435 = vunpack.c.h.b16 %v429
          %v436 = vpack.c.b16 %v432, %v432
          %v437 = vpack.c.b16 %v433, %v433
          %v438 = vpack.c.b16 %v434, %v434
          %v439 = vpack.c.b16 %v435, %v435
          %vm444 = vcmask 519168
          %445 = vst.msk [vmem:[#allocation2] sm:$0xf] %vm444, %v436
          %446 = vst.msk [vmem:[#allocation2 + $0x4] sm:$0xf] %vm444, %v437
          %447 = vst.msk [vmem:[#allocation2 + $0x8] sm:$0xf] %vm444, %v438
          %448 = vst.msk [vmem:[#allocation2 + $0xc] sm:$0xf] %vm444, %v439
        $region67: #{cradio_v2_forward.11} parent=58 // pred_fallthru
          _
        %v449 = vld [vmem:[#allocation2] sm:$0xf]
        %v450 = vld [vmem:[#allocation2 + $0x4] sm:$0xf]
        %v451 = vld [vmem:[#allocation2 + $0x8] sm:$0xf]
        %v452 = vld [vmem:[#allocation2 + $0xc] sm:$0xf]
        %v453 = vld [vmem:[%s296] sm:$0xff]
        %v454 = vld [vmem:[%s296 + $0x8] sm:$0xff]
        %v455 = vld [vmem:[%s296 + $0x10] sm:$0xff]
        %v456 = vld [vmem:[%s296 + $0x18] sm:$0xff]
        %v457 = vld [vmem:[%s296 + $0x20] sm:$0xff]
        %v458 = vld [vmem:[%s296 + $0x28] sm:$0xff]
        %v459 = vld [vmem:[%s296 + $0x30] sm:$0xff]
        %v460 = vld [vmem:[%s296 + $0x38] sm:$0xff]
        %v461 = vld [vmem:[%s296 + $0x40] sm:$0xff]
        %v462 = vld [vmem:[%s296 + $0x48] sm:$0xff]
        %v463 = vld [vmem:[%s296 + $0x50] sm:$0xff]
        %v464 = vld [vmem:[%s296 + $0x58] sm:$0xff]
        %v465 = vld [vmem:[%s296 + $0x60] sm:$0xff]
        %v466 = vld [vmem:[%s296 + $0x68] sm:$0xff]
        %v467 = vld [vmem:[%s296 + $0x70] sm:$0xff]
        %v468 = vld [vmem:[%s296 + $0x78] sm:$0xff]
        %v469 = vld [vmem:[%s296 + $0x80] sm:$0xff]
        %v470 = vld [vmem:[%s296 + $0x88] sm:$0xff]
        %v471 = vld [vmem:[%s296 + $0x90] sm:$0xff]
        %v472 = vld [vmem:[%s296 + $0x98] sm:$0xff]
        %v473 = vld [vmem:[%s296 + $0xa0] sm:$0xff]
        %v474 = vld [vmem:[%s296 + $0xa8] sm:$0xff]
        %v475 = vld [vmem:[%s296 + $0xb0] sm:$0xff]
        %v476 = vld [vmem:[%s296 + $0xb8] sm:$0xff]
        %v477 = vld [vmem:[%s339] sm:$0x3f]
        %v479 = vlaneseq
        %v480 = vshrl.u32 %v479, 7
        %v481 = vsub.s32 0, %v480
        %v482 = vrot.slane %v477, %v481
        %v483 = vlaneseq
        %v484 = vshrl.u32 %v483, 7
        %v485 = vsub.s32 1, %v484
        %v486 = vrot.slane %v477, %v485
        %v487 = vlaneseq
        %v488 = vshrl.u32 %v487, 7
        %v489 = vsub.s32 2, %v488
        %v490 = vrot.slane %v477, %v489
        %v491 = vlaneseq
        %v492 = vshrl.u32 %v491, 7
        %v493 = vsub.s32 3, %v492
        %v494 = vrot.slane %v477, %v493
        %v495 = vlaneseq
        %v496 = vshrl.u32 %v495, 7
        %v497 = vsub.s32 4, %v496
        %v498 = vrot.slane %v477, %v497
        %v499 = vlaneseq
        %v500 = vshrl.u32 %v499, 7
        %v501 = vsub.s32 5, %v500
        %v502 = vrot.slane %v477, %v501
        %v513 = vunpack.c.l.b16 %v449
        %v514 = vunpack.c.l.b16 %v450
        %v515 = vunpack.c.l.b16 %v451
        %v516 = vunpack.c.l.b16 %v452
        %v517 = vpack.c.b16 %v514, %v513
        %v518 = vpack.c.b16 %v516, %v515
        %v543 = vunpack.c.l.b16 %v453
        %v544 = vunpack.c.h.b16 %v453
        %v545 = vunpack.c.l.b16 %v454
        %v546 = vunpack.c.h.b16 %v454
        %v547 = vunpack.c.l.b16 %v455
        %v548 = vunpack.c.h.b16 %v455
        %v549 = vunpack.c.l.b16 %v456
        %v550 = vunpack.c.h.b16 %v456
        %v551 = vunpack.c.l.b16 %v457
        %v552 = vunpack.c.h.b16 %v457
        %v553 = vunpack.c.l.b16 %v458
        %v554 = vunpack.c.h.b16 %v458
        %v555 = vunpack.c.l.b16 %v459
        %v556 = vunpack.c.h.b16 %v459
        %v557 = vunpack.c.l.b16 %v460
        %v558 = vunpack.c.h.b16 %v460
        %v559 = vunpack.c.l.b16 %v461
        %v560 = vunpack.c.h.b16 %v461
        %v561 = vunpack.c.l.b16 %v462
        %v562 = vunpack.c.h.b16 %v462
        %v563 = vunpack.c.l.b16 %v463
        %v564 = vunpack.c.h.b16 %v463
        %v565 = vunpack.c.l.b16 %v464
        %v566 = vunpack.c.h.b16 %v464
        %v567 = vunpack.c.l.b16 %v465
        %v568 = vunpack.c.h.b16 %v465
        %v569 = vunpack.c.l.b16 %v466
        %v570 = vunpack.c.h.b16 %v466
        %v571 = vunpack.c.l.b16 %v467
        %v572 = vunpack.c.h.b16 %v467
        %v573 = vunpack.c.l.b16 %v468
        %v574 = vunpack.c.h.b16 %v468
        %v575 = vunpack.c.l.b16 %v469
        %v576 = vunpack.c.h.b16 %v469
        %v577 = vunpack.c.l.b16 %v470
        %v578 = vunpack.c.h.b16 %v470
        %v579 = vunpack.c.l.b16 %v471
        %v580 = vunpack.c.h.b16 %v471
        %v581 = vunpack.c.l.b16 %v472
        %v582 = vunpack.c.h.b16 %v472
        %v583 = vunpack.c.l.b16 %v473
        %v584 = vunpack.c.h.b16 %v473
        %v585 = vunpack.c.l.b16 %v474
        %v586 = vunpack.c.h.b16 %v474
        %v587 = vunpack.c.l.b16 %v475
        %v588 = vunpack.c.h.b16 %v475
        %v589 = vunpack.c.l.b16 %v476
        %v590 = vunpack.c.h.b16 %v476
        %v591 = vpack.c.b16 %v549, %v543
        %v592 = vpack.c.b16 %v550, %v544
        %v593 = vpack.c.b16 %v551, %v545
        %v594 = vpack.c.b16 %v552, %v546
        %v595 = vpack.c.b16 %v553, %v547
        %v596 = vpack.c.b16 %v554, %v548
        %v597 = vpack.c.b16 %v561, %v555
        %v598 = vpack.c.b16 %v562, %v556
        %v599 = vpack.c.b16 %v563, %v557
        %v600 = vpack.c.b16 %v564, %v558
        %v601 = vpack.c.b16 %v565, %v559
        %v602 = vpack.c.b16 %v566, %v560
        %v603 = vpack.c.b16 %v573, %v567
        %v604 = vpack.c.b16 %v574, %v568
        %v605 = vpack.c.b16 %v575, %v569
        %v606 = vpack.c.b16 %v576, %v570
        %v607 = vpack.c.b16 %v577, %v571
        %v608 = vpack.c.b16 %v578, %v572
        %v609 = vpack.c.b16 %v585, %v579
        %v610 = vpack.c.b16 %v586, %v580
        %v611 = vpack.c.b16 %v587, %v581
        %v612 = vpack.c.b16 %v588, %v582
        %v613 = vpack.c.b16 %v589, %v583
        %v614 = vpack.c.b16 %v590, %v584
        %vm639 = vcmask 523264
        %v641 = vsel %vm639, %v517, 0
        %v644 = vsel %vm639, %v518, 0
        %646 = vmatprep.subr.bf16.mxu0 0
        %647 = vmatpush1.bf16.msra.mxu0 0
        %648 = vmatprep.subr.bf16.mxu0 0
        %649 = vmatpush1.bf16.msra.mxu0 0
        %650 = vmatprep.subr.bf16.mxu0 0
        %651 = vmatpush1.bf16.msra.mxu0 0
        %652 = vmatprep.subr.bf16.mxu0 0
        %653 = vmatpush1.bf16.msra.mxu0 0
        %654 = vmatprep.subr.bf16.mxu0 %v610
        %655 = vmatpush1.bf16.msra.mxu0 %v609
        %656 = vmatprep.subr.bf16.mxu0 %v604
        %657 = vmatpush1.bf16.msra.mxu0 %v603
        %658 = vmatprep.subr.bf16.mxu0 %v598
        %659 = vmatpush1.bf16.msra.mxu0 %v597
        %660 = vmatprep.subr.bf16.mxu0 %v592
        %661 = vmatpush1.bf16.msra.mxu0 %v591
        %662 = vmatprep.subr.bf16.mxu0 0
        %663 = vmatpush2.bf16.msra.mxu0 0
        %664 = vmatprep.subr.bf16.mxu0 0
        %665 = vmatpush2.bf16.msra.mxu0 0
        %666 = vmatprep.subr.bf16.mxu0 0
        %667 = vmatpush2.bf16.msra.mxu0 0
        %668 = vmatprep.subr.bf16.mxu0 0
        %669 = vmatpush2.bf16.msra.mxu0 0
        %670 = vmatprep.subr.bf16.mxu0 0
        %671 = vmatpush2.bf16.msra.mxu0 0
        %672 = vmatprep.subr.bf16.mxu0 0
        %673 = vmatpush2.bf16.msra.mxu0 0
        %674 = vmatprep.subr.bf16.mxu0 0
        %675 = vmatpush2.bf16.msra.mxu0 0
        %676 = vmatprep.subr.bf16.mxu0 0
        %677 = vmatpush2.bf16.msra.mxu0 0
        %678 = vmatprep.mubr.bf16.mxu0 0
        %679 = vmatmul.mubr.bf16.gmra.mxu0 %v641
        %v680 = vpop.f32.mrf.mxu0
        %v681 = vadd.f32 %v482, %v680
        %v682 = vpop.f32.mrf.mxu0
        %v683 = vadd.f32 %v486, %v682
        %v684 = vpop.f32.mrf.mxu0
        %v685 = vadd.f32 %v482, %v684
        %v686 = vpop.f32.mrf.mxu0
        %v687 = vadd.f32 %v486, %v686
        %688 = vmatprep.mubr.bf16.mxu0 0
        %689 = vmatmul.mubr.bf16.gmra.mxu0 %v644
        %v690 = vpop.f32.mrf.mxu0
        %v691 = vadd.f32 %v482, %v690
        %v692 = vpop.f32.mrf.mxu0
        %v693 = vadd.f32 %v486, %v692
        %v694 = vpop.f32.mrf.mxu0
        %v695 = vadd.f32 %v482, %v694
        %v696 = vpop.f32.mrf.mxu0
        %v697 = vadd.f32 %v486, %v696
        %698 = vdwg.mxu0
        %699 = vmatprep.subr.bf16.mxu0 0
        %700 = vmatpush1.bf16.msra.mxu0 0
        %701 = vmatprep.subr.bf16.mxu0 0
        %702 = vmatpush1.bf16.msra.mxu0 0
        %703 = vmatprep.subr.bf16.mxu0 0
        %704 = vmatpush1.bf16.msra.mxu0 0
        %705 = vmatprep.subr.bf16.mxu0 0
        %706 = vmatpush1.bf16.msra.mxu0 0
        %707 = vmatprep.subr.bf16.mxu0 %v612
        %708 = vmatpush1.bf16.msra.mxu0 %v611
        %709 = vmatprep.subr.bf16.mxu0 %v606
        %710 = vmatpush1.bf16.msra.mxu0 %v605
        %711 = vmatprep.subr.bf16.mxu0 %v600
        %712 = vmatpush1.bf16.msra.mxu0 %v599
        %713 = vmatprep.subr.bf16.mxu0 %v594
        %714 = vmatpush1.bf16.msra.mxu0 %v593
        %715 = vmatprep.subr.bf16.mxu0 0
        %716 = vmatpush2.bf16.msra.mxu0 0
        %717 = vmatprep.subr.bf16.mxu0 0
        %718 = vmatpush2.bf16.msra.mxu0 0
        %719 = vmatprep.subr.bf16.mxu0 0
        %720 = vmatpush2.bf16.msra.mxu0 0
        %721 = vmatprep.subr.bf16.mxu0 0
        %722 = vmatpush2.bf16.msra.mxu0 0
        %723 = vmatprep.subr.bf16.mxu0 0
        %724 = vmatpush2.bf16.msra.mxu0 0
        %725 = vmatprep.subr.bf16.mxu0 0
        %726 = vmatpush2.bf16.msra.mxu0 0
        %727 = vmatprep.subr.bf16.mxu0 0
        %728 = vmatpush2.bf16.msra.mxu0 0
        %729 = vmatprep.subr.bf16.mxu0 0
        %730 = vmatpush2.bf16.msra.mxu0 0
        %731 = vmatprep.mubr.bf16.mxu0 0
        %732 = vmatmul.mubr.bf16.gmra.mxu0 %v641
        %v733 = vpop.f32.mrf.mxu0
        %v734 = vadd.f32 %v490, %v733
        %v735 = vpop.f32.mrf.mxu0
        %v736 = vadd.f32 %v494, %v735
        %v737 = vpop.f32.mrf.mxu0
        %v738 = vadd.f32 %v490, %v737
        %v739 = vpop.f32.mrf.mxu0
        %v740 = vadd.f32 %v494, %v739
        %741 = vmatprep.mubr.bf16.mxu0 0
        %742 = vmatmul.mubr.bf16.gmra.mxu0 %v644
        %v743 = vpop.f32.mrf.mxu0
        %v744 = vadd.f32 %v490, %v743
        %v745 = vpop.f32.mrf.mxu0
        %v746 = vadd.f32 %v494, %v745
        %v747 = vpop.f32.mrf.mxu0
        %v748 = vadd.f32 %v490, %v747
        %v749 = vpop.f32.mrf.mxu0
        %v750 = vadd.f32 %v494, %v749
        %751 = vdwg.mxu0
        %752 = vmatprep.subr.bf16.mxu0 0
        %753 = vmatpush1.bf16.msra.mxu0 0
        %754 = vmatprep.subr.bf16.mxu0 0
        %755 = vmatpush1.bf16.msra.mxu0 0
        %756 = vmatprep.subr.bf16.mxu0 0
        %757 = vmatpush1.bf16.msra.mxu0 0
        %758 = vmatprep.subr.bf16.mxu0 0
        %759 = vmatpush1.bf16.msra.mxu0 0
        %760 = vmatprep.subr.bf16.mxu0 %v614
        %761 = vmatpush1.bf16.msra.mxu0 %v613
        %762 = vmatprep.subr.bf16.mxu0 %v608
        %763 = vmatpush1.bf16.msra.mxu0 %v607
        %764 = vmatprep.subr.bf16.mxu0 %v602
        %765 = vmatpush1.bf16.msra.mxu0 %v601
        %766 = vmatprep.subr.bf16.mxu0 %v596
        %767 = vmatpush1.bf16.msra.mxu0 %v595
        %768 = vmatprep.subr.bf16.mxu0 0
        %769 = vmatpush2.bf16.msra.mxu0 0
        %770 = vmatprep.subr.bf16.mxu0 0
        %771 = vmatpush2.bf16.msra.mxu0 0
        %772 = vmatprep.subr.bf16.mxu0 0
        %773 = vmatpush2.bf16.msra.mxu0 0
        %774 = vmatprep.subr.bf16.mxu0 0
        %775 = vmatpush2.bf16.msra.mxu0 0
        %776 = vmatprep.subr.bf16.mxu0 0
        %777 = vmatpush2.bf16.msra.mxu0 0
        %778 = vmatprep.subr.bf16.mxu0 0
        %779 = vmatpush2.bf16.msra.mxu0 0
        %780 = vmatprep.subr.bf16.mxu0 0
        %781 = vmatpush2.bf16.msra.mxu0 0
        %782 = vmatprep.subr.bf16.mxu0 0
        %783 = vmatpush2.bf16.msra.mxu0 0
        %784 = vmatprep.mubr.bf16.mxu0 0
        %785 = vmatmul.mubr.bf16.gmra.mxu0 %v641
        %v786 = vpop.f32.mrf.mxu0
        %v787 = vadd.f32 %v498, %v786
        %v788 = vpop.f32.mrf.mxu0
        %v789 = vadd.f32 %v502, %v788
        %v790 = vpop.f32.mrf.mxu0
        %v791 = vadd.f32 %v498, %v790
        %v792 = vpop.f32.mrf.mxu0
        %v793 = vadd.f32 %v502, %v792
        %794 = vmatprep.mubr.bf16.mxu0 0
        %795 = vmatmul.mubr.bf16.gmra.mxu0 %v644
        %v796 = vpop.f32.mrf.mxu0
        %v797 = vadd.f32 %v498, %v796
        %v798 = vpop.f32.mrf.mxu0
        %v799 = vadd.f32 %v502, %v798
        %v800 = vpop.f32.mrf.mxu0
        %v801 = vadd.f32 %v498, %v800
        %v802 = vpop.f32.mrf.mxu0
        %v803 = vadd.f32 %v502, %v802
        %804 = vdwg.mxu0
        %v805 = vpack.c.bf16 %v685, %v681
        %v806 = vpack.c.bf16 %v687, %v683
        %v807 = vpack.c.bf16 %v738, %v734
        %v808 = vpack.c.bf16 %v740, %v736
        %v809 = vpack.c.bf16 %v791, %v787
        %v810 = vpack.c.bf16 %v793, %v789
        %v811 = vpack.c.bf16 %v695, %v691
        %v812 = vpack.c.bf16 %v697, %v693
        %v813 = vpack.c.bf16 %v748, %v744
        %v814 = vpack.c.bf16 %v750, %v746
        %v815 = vpack.c.bf16 %v801, %v797
        %v816 = vpack.c.bf16 %v803, %v799
        %v829 = vunpack.c.l.b16 %v805
        %v830 = vunpack.c.l.b16 %v806
        %v831 = vunpack.c.l.b16 %v807
        %v832 = vunpack.c.l.b16 %v808
        %v833 = vunpack.c.l.b16 %v809
        %v834 = vunpack.c.l.b16 %v810
        %v835 = vunpack.c.h.b16 %v805
        %v836 = vunpack.c.h.b16 %v806
        %v837 = vunpack.c.h.b16 %v807
        %v838 = vunpack.c.h.b16 %v808
        %v839 = vunpack.c.h.b16 %v809
        %v840 = vunpack.c.h.b16 %v810
        %v841 = vunpack.c.l.b16 %v811
        %v842 = vunpack.c.l.b16 %v812
        %v843 = vunpack.c.l.b16 %v813
        %v844 = vunpack.c.l.b16 %v814
        %v845 = vunpack.c.l.b16 %v815
        %v846 = vunpack.c.l.b16 %v816
        %v847 = vunpack.c.h.b16 %v811
        %v848 = vunpack.c.h.b16 %v812
        %v849 = vunpack.c.h.b16 %v813
        %v850 = vunpack.c.h.b16 %v814
        %v851 = vunpack.c.h.b16 %v815
        %v852 = vunpack.c.h.b16 %v816
        %v853 = vpack.c.b16 %v830, %v829
        %v854 = vpack.c.b16 %v832, %v831
        %v855 = vpack.c.b16 %v834, %v833
        %v856 = vpack.c.b16 %v836, %v835
        %v857 = vpack.c.b16 %v838, %v837
        %v858 = vpack.c.b16 %v840, %v839
        %v859 = vpack.c.b16 %v842, %v841
        %v860 = vpack.c.b16 %v844, %v843
        %v861 = vpack.c.b16 %v846, %v845
        %v862 = vpack.c.b16 %v848, %v847
        %v863 = vpack.c.b16 %v850, %v849
        %v864 = vpack.c.b16 %v852, %v851
        %877 = vst [vmem:[%s328] sm:$0xff] %v853
        %878 = vst [vmem:[%s328 + $0x8] sm:$0xff] %v854
        %879 = vst [vmem:[%s328 + $0x10] sm:$0xff] %v855
        %880 = vst [vmem:[%s328 + $0x18] sm:$0xff] %v856
        %881 = vst [vmem:[%s328 + $0x20] sm:$0xff] %v857
        %882 = vst [vmem:[%s328 + $0x28] sm:$0xff] %v858
        %883 = vst [vmem:[%s328 + $0x30] sm:$0xff] %v859
        %884 = vst [vmem:[%s328 + $0x38] sm:$0xff] %v860
        %885 = vst [vmem:[%s328 + $0x40] sm:$0xff] %v861
        %886 = vst [vmem:[%s328 + $0x48] sm:$0xff] %v862
        %887 = vst [vmem:[%s328 + $0x50] sm:$0xff] %v863
        %888 = vst [vmem:[%s328 + $0x58] sm:$0xff] %v864
        %s889 = sand.u32 %s158, 1
        %s890 = sand.u32 %s158, 1
        %s891 = smul.addr %s890, 96
        %s892 = scalar_lea.vmem [#allocation4], %s891
        // Predicated region
        $region68: #{cradio_v2_forward.11} parent=58 // pred_check
          %p893 = pneg %p168
        $region69: #{cradio_v2_forward.11} parent=58 // pred_check_branch
          %895 = sbr.rel (%p893) target = $region71
        $region70: #{cradio_v2_forward.11} parent=58 // pred_region
          %s896 = smul.u32 4, %s20
          %s897 = smul.u32 6, %s21
          %s898 = smul.addr %s896, 12
          %s899 = sadd.s32 %s897, %s898
          %s900 = smul.addr %s899, 4
          %s901 = scalar_lea.vmem %s5, %s900
          // Predicated region
          $region72: #{cradio_v2_forward.11} parent=70 // pred_check
            _
          $region73: #{cradio_v2_forward.11} parent=70 // pred_check_branch
            %903 = sbr.rel (0) target = $region75
          $region74: #{cradio_v2_forward.11} parent=70 // pred_region
            // Predicated region
            $region76: #{cradio_v2_forward.11} parent=74 // pred_check
              _
            $region77: #{cradio_v2_forward.11} parent=74 // pred_check_branch
              %905 = sbr.rel (0) target = $region79
            $region78: #{cradio_v2_forward.11} parent=74 // pred_region
              loop: start=0, step=1, limit=1
              $region80: #{cradio_v2_forward.11} parent=78 // loop_pre_header
                _
              $region81: #{cradio_v2_forward.11} parent=78 // loop_header
                %s907 = sphi 0, %s911
                %p908 = scmp.ge.s32.totalorder %s907, 1
                %s912 = sphi %s892, %s892
                %s913 = sphi %s901, %s901
              $region82: #{cradio_v2_forward.11} parent=78 // loop_header_branch
                %910 = sbr.rel (%p908) target = $region86
              $region83: #{cradio_v2_forward.11} parent=78 // loop_body
                %v914 = vld [vmem:[%s912] sm:$0xff]
                %915 = vst [vmem:[%s913] sm:$0xff] %v914
                %v916 = vld [vmem:[%s912 + $0x8] sm:$0xff]
                %917 = vst [vmem:[%s913 + $0x8] sm:$0xff] %v916
                %v918 = vld [vmem:[%s912 + $0x10] sm:$0xff]
                %919 = vst [vmem:[%s913 + $0x10] sm:$0xff] %v918
                %v920 = vld [vmem:[%s912 + $0x18] sm:$0xff]
                %921 = vst [vmem:[%s913 + $0x30] sm:$0xff] %v920
                %v922 = vld [vmem:[%s912 + $0x20] sm:$0xff]
                %923 = vst [vmem:[%s913 + $0x38] sm:$0xff] %v922
                %v924 = vld [vmem:[%s912 + $0x28] sm:$0xff]
                %925 = vst [vmem:[%s913 + $0x40] sm:$0xff] %v924
                %v926 = vld [vmem:[%s912 + $0x30] sm:$0xff]
                %927 = vst [vmem:[%s913 + $0x60] sm:$0xff] %v926
                %v928 = vld [vmem:[%s912 + $0x38] sm:$0xff]
                %929 = vst [vmem:[%s913 + $0x68] sm:$0xff] %v928
                %v930 = vld [vmem:[%s912 + $0x40] sm:$0xff]
                %931 = vst [vmem:[%s913 + $0x70] sm:$0xff] %v930
                %v932 = vld [vmem:[%s912 + $0x48] sm:$0xff]
                %933 = vst [vmem:[%s913 + $0x90] sm:$0xff] %v932
                %v934 = vld [vmem:[%s912 + $0x50] sm:$0xff]
                %935 = vst [vmem:[%s913 + $0x98] sm:$0xff] %v934
                %v936 = vld [vmem:[%s912 + $0x58] sm:$0xff]
                %937 = vst [vmem:[%s913 + $0xa0] sm:$0xff] %v936
              $region84: #{cradio_v2_forward.11} parent=78 // loop_footer
                %s911 = sadd.s32 1, %s907
              $region85: #{cradio_v2_forward.11} parent=78 // loop_footer_branch
                %906 = sbr.rel target = $region81
              $region86: #{cradio_v2_forward.11} parent=78 // loop_exit
                _
            $region79: #{cradio_v2_forward.11} parent=74 // pred_fallthru
              _
            // Predicated region
            $region87: #{cradio_v2_forward.11} parent=74 // pred_check
              _
            $region88: #{cradio_v2_forward.11} parent=74 // pred_check_branch
              %939 = sbr.rel target = $region90
            $region89: #{cradio_v2_forward.11} parent=74 // pred_region
              _
            $region90: #{cradio_v2_forward.11} parent=74 // pred_fallthru
              _
          $region75: #{cradio_v2_forward.11} parent=70 // pred_fallthru
            _
          %940 = vnop
        $region71: #{cradio_v2_forward.11} parent=58 // pred_fallthru
          _
      $region59: #{cradio_v2_forward.11} parent=5 // pred_fallthru
        _
      %p941 = scmp.le.s32.totalorder 2, %s11
      // Predicated region
      $region91: #{cradio_v2_forward.11} parent=5 // pred_check
        %p942 = pneg %p941
      $region92: #{cradio_v2_forward.11} parent=5 // pred_check_branch
        %944 = sbr.rel (%p942) target = $region94
      $region93: #{cradio_v2_forward.11} parent=5 // pred_region
        %s945 = ssub.s32 %s11, 2
        // Predicated region
        $region95: #{cradio_v2_forward.11} parent=93 // pred_check
          %p946 = pneg %p174
        $region96: #{cradio_v2_forward.11} parent=93 // pred_check_branch
          %948 = sbr.rel (%p946) target = $region98
        $region97: #{cradio_v2_forward.11} parent=93 // pred_region
          %s949 = sand.u32 %s159, 1
          %s950 = sand.u32 %s159, 1
          %s951 = smul.addr %s950, 96
          %s952 = scalar_lea.vmem [#allocation4], %s951
        $region98: #{cradio_v2_forward.11} parent=93 // pred_fallthru
          _
      $region94: #{cradio_v2_forward.11} parent=5 // pred_fallthru
        _
    $region6: #{cradio_v2_forward.11} parent=1 // loop_footer
      %s15 = sadd.s32 1, %s11
    $region7: #{cradio_v2_forward.11} parent=1 // loop_footer_branch
      %10 = sbr.rel target = $region3
    $region8: #{cradio_v2_forward.11} parent=1 // loop_exit
      _

// kernel: cradio_v2_forward.13
$region0: #{cradio_v2_forward.13}
  #allocation0 [shape = 'u32[]', space=smem, size = 0x4, offset = 0x4, fixed_abs, tag = 'smem constant byte address 0x4 - core index']
  #allocation1 [shape = 'u32[144,128]{1,0:T(1,128)}', space=vmem, size = 0x12000, scoped, tag = 'internal scratch']
  #allocation2 [shape = 'f32[32,64]{1,0:T(8,128)}', space=vmem, size = 0x4000, scoped, tag = 'scratch operand']
  %s0 = inlined_call_operand.vmem [shape: bf16[32,512], index: 0, kind: input, shape index: {}]
  %s1 = inlined_call_operand.vmem [shape: bf16[512,64], index: 1, kind: input, shape index: {}]
  %s2 = inlined_call_operand.vmem [shape: f32[1,64], index: 2, kind: input, shape index: {}]
  %s3 = inlined_call_operand.vmem [shape: f32[32,64], index: 3, kind: input, shape index: {}, may-alias: {3,4}]
  %s4 = inlined_call_operand.vmem [shape: f32[32,64], index: 4, kind: output, shape index: {}, may-alias: {3,4}]
  %s5 = sld [smem:[#allocation0]]
  $region34: #{cradio_v2_forward.13} parent=0
    _
  %s7 = ssub.s32 1, %s5
  %s8 = scalar_select 0, %s7, %s5
  // Predicated region
  $region2: #{cradio_v2_forward.13} parent=0 // pred_check
    _
  $region3: #{cradio_v2_forward.13} parent=0 // pred_check_branch
    %10 = sbr.rel (0) target = $region5
  $region4: #{cradio_v2_forward.13} parent=0 // pred_region
    _
  $region5: #{cradio_v2_forward.13} parent=0 // pred_fallthru
    _
  // Predicated region
  $region6: #{cradio_v2_forward.13} parent=0 // pred_check
    _
  $region7: #{cradio_v2_forward.13} parent=0 // pred_check_branch
    %12 = sbr.rel (0) target = $region9
  $region8: #{cradio_v2_forward.13} parent=0 // pred_region
    _
  $region9: #{cradio_v2_forward.13} parent=0 // pred_fallthru
    _
  // Predicated region
  $region10: #{cradio_v2_forward.13} parent=0 // pred_check
    _
  $region11: #{cradio_v2_forward.13} parent=0 // pred_check_branch
    %14 = sbr.rel (0) target = $region13
  $region12: #{cradio_v2_forward.13} parent=0 // pred_region
    _
  $region13: #{cradio_v2_forward.13} parent=0 // pred_fallthru
    _
  // Predicated region
  $region14: #{cradio_v2_forward.13} parent=0 // pred_check
    _
  $region15: #{cradio_v2_forward.13} parent=0 // pred_check_branch
    %16 = sbr.rel (0) target = $region17
  $region16: #{cradio_v2_forward.13} parent=0 // pred_region
    _
  $region17: #{cradio_v2_forward.13} parent=0 // pred_fallthru
    _
  %p18 = scmp.eq.s32.totalorder 0, 0
  // Predicated region
  $region18: #{cradio_v2_forward.13} parent=0 // pred_check
    %p19 = pneg %p18
  $region19: #{cradio_v2_forward.13} parent=0 // pred_check_branch
    %21 = sbr.rel (%p19) target = $region21
  $region20: #{cradio_v2_forward.13} parent=0 // pred_region
    %vm22 = vcmask 523264
    %23 = vst.msk [vmem:[#allocation2] sm:$0xff] %vm22, 0.0
    %24 = vst.msk [vmem:[#allocation2 + $0x8] sm:$0xff] %vm22, 0.0
    %25 = vst.msk [vmem:[#allocation2 + $0x10] sm:$0xff] %vm22, 0.0
    %26 = vst.msk [vmem:[#allocation2 + $0x18] sm:$0xff] %vm22, 0.0
  $region21: #{cradio_v2_forward.13} parent=0 // pred_fallthru
    _
  %v27 = vld [vmem:[#allocation2] sm:$0xff]
  %v28 = vld [vmem:[#allocation2 + $0x8] sm:$0xff]
  %v29 = vld [vmem:[#allocation2 + $0x10] sm:$0xff]
  %v30 = vld [vmem:[#allocation2 + $0x18] sm:$0xff]
  %v31 = vld [vmem:[%s0] sm:$0xff]
  %v32 = vld [vmem:[%s0 + $0x8] sm:$0xff]
  %v33 = vld [vmem:[%s0 + $0x10] sm:$0xff]
  %v34 = vld [vmem:[%s0 + $0x18] sm:$0xff]
  %v35 = vld [vmem:[%s0 + $0x20] sm:$0xff]
  %v36 = vld [vmem:[%s0 + $0x28] sm:$0xff]
  %v37 = vld [vmem:[%s0 + $0x30] sm:$0xff]
  %v38 = vld [vmem:[%s0 + $0x38] sm:$0xff]
  %v39 = vld [vmem:[%s1] sm:$0xf]
  %v40 = vld [vmem:[%s1 + $0x4] sm:$0xf]
  %v41 = vld [vmem:[%s1 + $0x8] sm:$0xf]
  %v42 = vld [vmem:[%s1 + $0xc] sm:$0xf]
  %v43 = vld [vmem:[%s1 + $0x10] sm:$0xf]
  %v44 = vld [vmem:[%s1 + $0x14] sm:$0xf]
  %v45 = vld [vmem:[%s1 + $0x18] sm:$0xf]
  %v46 = vld [vmem:[%s1 + $0x1c] sm:$0xf]
  %v47 = vld [vmem:[%s1 + $0x20] sm:$0xf]
  %v48 = vld [vmem:[%s1 + $0x24] sm:$0xf]
  %v49 = vld [vmem:[%s1 + $0x28] sm:$0xf]
  %v50 = vld [vmem:[%s1 + $0x2c] sm:$0xf]
  %v51 = vld [vmem:[%s1 + $0x30] sm:$0xf]
  %v52 = vld [vmem:[%s1 + $0x34] sm:$0xf]
  %v53 = vld [vmem:[%s1 + $0x38] sm:$0xf]
  %v54 = vld [vmem:[%s1 + $0x3c] sm:$0xf]
  %v55 = vld [vmem:[%s1 + $0x40] sm:$0xf]
  %v56 = vld [vmem:[%s1 + $0x44] sm:$0xf]
  %v57 = vld [vmem:[%s1 + $0x48] sm:$0xf]
  %v58 = vld [vmem:[%s1 + $0x4c] sm:$0xf]
  %v59 = vld [vmem:[%s1 + $0x50] sm:$0xf]
  %v60 = vld [vmem:[%s1 + $0x54] sm:$0xf]
  %v61 = vld [vmem:[%s1 + $0x58] sm:$0xf]
  %v62 = vld [vmem:[%s1 + $0x5c] sm:$0xf]
  %v63 = vld [vmem:[%s1 + $0x60] sm:$0xf]
  %v64 = vld [vmem:[%s1 + $0x64] sm:$0xf]
  %v65 = vld [vmem:[%s1 + $0x68] sm:$0xf]
  %v66 = vld [vmem:[%s1 + $0x6c] sm:$0xf]
  %v67 = vld [vmem:[%s1 + $0x70] sm:$0xf]
  %v68 = vld [vmem:[%s1 + $0x74] sm:$0xf]
  %v69 = vld [vmem:[%s1 + $0x78] sm:$0xf]
  %v70 = vld [vmem:[%s1 + $0x7c] sm:$0xf]
  %v71 = vld [vmem:[%s1 + $0x80] sm:$0xf]
  %v72 = vld [vmem:[%s1 + $0x84] sm:$0xf]
  %v73 = vld [vmem:[%s1 + $0x88] sm:$0xf]
  %v74 = vld [vmem:[%s1 + $0x8c] sm:$0xf]
  %v75 = vld [vmem:[%s1 + $0x90] sm:$0xf]
  %v76 = vld [vmem:[%s1 + $0x94] sm:$0xf]
  %v77 = vld [vmem:[%s1 + $0x98] sm:$0xf]
  %v78 = vld [vmem:[%s1 + $0x9c] sm:$0xf]
  %v79 = vld [vmem:[%s1 + $0xa0] sm:$0xf]
  %v80 = vld [vmem:[%s1 + $0xa4] sm:$0xf]
  %v81 = vld [vmem:[%s1 + $0xa8] sm:$0xf]
  %v82 = vld [vmem:[%s1 + $0xac] sm:$0xf]
  %v83 = vld [vmem:[%s1 + $0xb0] sm:$0xf]
  %v84 = vld [vmem:[%s1 + $0xb4] sm:$0xf]
  %v85 = vld [vmem:[%s1 + $0xb8] sm:$0xf]
  %v86 = vld [vmem:[%s1 + $0xbc] sm:$0xf]
  %v87 = vld [vmem:[%s1 + $0xc0] sm:$0xf]
  %v88 = vld [vmem:[%s1 + $0xc4] sm:$0xf]
  %v89 = vld [vmem:[%s1 + $0xc8] sm:$0xf]
  %v90 = vld [vmem:[%s1 + $0xcc] sm:$0xf]
  %v91 = vld [vmem:[%s1 + $0xd0] sm:$0xf]
  %v92 = vld [vmem:[%s1 + $0xd4] sm:$0xf]
  %v93 = vld [vmem:[%s1 + $0xd8] sm:$0xf]
  %v94 = vld [vmem:[%s1 + $0xdc] sm:$0xf]
  %v95 = vld [vmem:[%s1 + $0xe0] sm:$0xf]
  %v96 = vld [vmem:[%s1 + $0xe4] sm:$0xf]
  %v97 = vld [vmem:[%s1 + $0xe8] sm:$0xf]
  %v98 = vld [vmem:[%s1 + $0xec] sm:$0xf]
  %v99 = vld [vmem:[%s1 + $0xf0] sm:$0xf]
  %v100 = vld [vmem:[%s1 + $0xf4] sm:$0xf]
  %v101 = vld [vmem:[%s1 + $0xf8] sm:$0xf]
  %v102 = vld [vmem:[%s1 + $0xfc] sm:$0xf]
  %v111 = vunpack.c.l.b16 %v31
  %v112 = vunpack.c.h.b16 %v31
  %v113 = vunpack.c.l.b16 %v32
  %v114 = vunpack.c.h.b16 %v32
  %v115 = vunpack.c.l.b16 %v33
  %v116 = vunpack.c.h.b16 %v33
  %v117 = vunpack.c.l.b16 %v34
  %v118 = vunpack.c.h.b16 %v34
  %v119 = vunpack.c.l.b16 %v35
  %v120 = vunpack.c.h.b16 %v35
  %v121 = vunpack.c.l.b16 %v36
  %v122 = vunpack.c.h.b16 %v36
  %v123 = vunpack.c.l.b16 %v37
  %v124 = vunpack.c.h.b16 %v37
  %v125 = vunpack.c.l.b16 %v38
  %v126 = vunpack.c.h.b16 %v38
  %v127 = vpack.c.b16 %v115, %v111
  %v128 = vpack.c.b16 %v116, %v112
  %v129 = vpack.c.b16 %v117, %v113
  %v130 = vpack.c.b16 %v118, %v114
  %v131 = vpack.c.b16 %v123, %v119
  %v132 = vpack.c.b16 %v124, %v120
  %v133 = vpack.c.b16 %v125, %v121
  %v134 = vpack.c.b16 %v126, %v122
  %v207 = vunpack.c.l.b16 %v39
  %v208 = vunpack.c.l.b16 %v40
  %v209 = vunpack.c.l.b16 %v41
  %v210 = vunpack.c.l.b16 %v42
  %v211 = vunpack.c.l.b16 %v43
  %v212 = vunpack.c.l.b16 %v44
  %v213 = vunpack.c.l.b16 %v45
  %v214 = vunpack.c.l.b16 %v46
  %v215 = vunpack.c.l.b16 %v47
  %v216 = vunpack.c.l.b16 %v48
  %v217 = vunpack.c.l.b16 %v49
  %v218 = vunpack.c.l.b16 %v50
  %v219 = vunpack.c.l.b16 %v51
  %v220 = vunpack.c.l.b16 %v52
  %v221 = vunpack.c.l.b16 %v53
  %v222 = vunpack.c.l.b16 %v54
  %v223 = vunpack.c.l.b16 %v55
  %v224 = vunpack.c.l.b16 %v56
  %v225 = vunpack.c.l.b16 %v57
  %v226 = vunpack.c.l.b16 %v58
  %v227 = vunpack.c.l.b16 %v59
  %v228 = vunpack.c.l.b16 %v60
  %v229 = vunpack.c.l.b16 %v61
  %v230 = vunpack.c.l.b16 %v62
  %v231 = vunpack.c.l.b16 %v63
  %v232 = vunpack.c.l.b16 %v64
  %v233 = vunpack.c.l.b16 %v65
  %v234 = vunpack.c.l.b16 %v66
  %v235 = vunpack.c.l.b16 %v67
  %v236 = vunpack.c.l.b16 %v68
  %v237 = vunpack.c.l.b16 %v69
  %v238 = vunpack.c.l.b16 %v70
  %v239 = vunpack.c.l.b16 %v71
  %v240 = vunpack.c.l.b16 %v72
  %v241 = vunpack.c.l.b16 %v73
  %v242 = vunpack.c.l.b16 %v74
  %v243 = vunpack.c.l.b16 %v75
  %v244 = vunpack.c.l.b16 %v76
  %v245 = vunpack.c.l.b16 %v77
  %v246 = vunpack.c.l.b16 %v78
  %v247 = vunpack.c.l.b16 %v79
  %v248 = vunpack.c.l.b16 %v80
  %v249 = vunpack.c.l.b16 %v81
  %v250 = vunpack.c.l.b16 %v82
  %v251 = vunpack.c.l.b16 %v83
  %v252 = vunpack.c.l.b16 %v84
  %v253 = vunpack.c.l.b16 %v85
  %v254 = vunpack.c.l.b16 %v86
  %v255 = vunpack.c.l.b16 %v87
  %v256 = vunpack.c.l.b16 %v88
  %v257 = vunpack.c.l.b16 %v89
  %v258 = vunpack.c.l.b16 %v90
  %v259 = vunpack.c.l.b16 %v91
  %v260 = vunpack.c.l.b16 %v92
  %v261 = vunpack.c.l.b16 %v93
  %v262 = vunpack.c.l.b16 %v94
  %v263 = vunpack.c.l.b16 %v95
  %v264 = vunpack.c.l.b16 %v96
  %v265 = vunpack.c.l.b16 %v97
  %v266 = vunpack.c.l.b16 %v98
  %v267 = vunpack.c.l.b16 %v99
  %v268 = vunpack.c.l.b16 %v100
  %v269 = vunpack.c.l.b16 %v101
  %v270 = vunpack.c.l.b16 %v102
  %v271 = vpack.c.b16 %v208, %v207
  %v272 = vpack.c.b16 %v210, %v209
  %v273 = vpack.c.b16 %v212, %v211
  %v274 = vpack.c.b16 %v214, %v213
  %v275 = vpack.c.b16 %v216, %v215
  %v276 = vpack.c.b16 %v218, %v217
  %v277 = vpack.c.b16 %v220, %v219
  %v278 = vpack.c.b16 %v222, %v221
  %v279 = vpack.c.b16 %v224, %v223
  %v280 = vpack.c.b16 %v226, %v225
  %v281 = vpack.c.b16 %v228, %v227
  %v282 = vpack.c.b16 %v230, %v229
  %v283 = vpack.c.b16 %v232, %v231
  %v284 = vpack.c.b16 %v234, %v233
  %v285 = vpack.c.b16 %v236, %v235
  %v286 = vpack.c.b16 %v238, %v237
  %v287 = vpack.c.b16 %v240, %v239
  %v288 = vpack.c.b16 %v242, %v241
  %v289 = vpack.c.b16 %v244, %v243
  %v290 = vpack.c.b16 %v246, %v245
  %v291 = vpack.c.b16 %v248, %v247
  %v292 = vpack.c.b16 %v250, %v249
  %v293 = vpack.c.b16 %v252, %v251
  %v294 = vpack.c.b16 %v254, %v253
  %v295 = vpack.c.b16 %v256, %v255
  %v296 = vpack.c.b16 %v258, %v257
  %v297 = vpack.c.b16 %v260, %v259
  %v298 = vpack.c.b16 %v262, %v261
  %v299 = vpack.c.b16 %v264, %v263
  %v300 = vpack.c.b16 %v266, %v265
  %v301 = vpack.c.b16 %v268, %v267
  %v302 = vpack.c.b16 %v270, %v269
  %335 = vmatprep.subr.bf16.mxu0 0
  %336 = vmatpush1.bf16.msra.mxu0 %v278
  %337 = vmatprep.subr.bf16.mxu0 0
  %338 = vmatpush1.bf16.msra.mxu0 %v277
  %339 = vmatprep.subr.bf16.mxu0 0
  %340 = vmatpush1.bf16.msra.mxu0 %v276
  %341 = vmatprep.subr.bf16.mxu0 0
  %342 = vmatpush1.bf16.msra.mxu0 %v275
  %343 = vmatprep.subr.bf16.mxu0 0
  %344 = vmatpush1.bf16.msra.mxu0 %v274
  %345 = vmatprep.subr.bf16.mxu0 0
  %346 = vmatpush1.bf16.msra.mxu0 %v273
  %347 = vmatprep.subr.bf16.mxu0 0
  %348 = vmatpush1.bf16.msra.mxu0 %v272
  %349 = vmatprep.subr.bf16.mxu0 0
  %350 = vmatpush1.bf16.msra.mxu0 %v271
  %351 = vmatprep.subr.bf16.mxu0 0
  %352 = vmatpush2.bf16.msra.mxu0 %v286
  %353 = vmatprep.subr.bf16.mxu0 0
  %354 = vmatpush2.bf16.msra.mxu0 %v285
  %355 = vmatprep.subr.bf16.mxu0 0
  %356 = vmatpush2.bf16.msra.mxu0 %v284
  %357 = vmatprep.subr.bf16.mxu0 0
  %358 = vmatpush2.bf16.msra.mxu0 %v283
  %359 = vmatprep.subr.bf16.mxu0 0
  %360 = vmatpush2.bf16.msra.mxu0 %v282
  %361 = vmatprep.subr.bf16.mxu0 0
  %362 = vmatpush2.bf16.msra.mxu0 %v281
  %363 = vmatprep.subr.bf16.mxu0 0
  %364 = vmatpush2.bf16.msra.mxu0 %v280
  %365 = vmatprep.subr.bf16.mxu0 0
  %366 = vmatpush2.bf16.msra.mxu0 %v279
  %367 = vmatprep.mubr.bf16.mxu0 %v128
  %368 = vmatmul.mubr.bf16.gmra.mxu0 %v127
  %v369 = vpop.f32.mrf.mxu0
  %v370 = vadd.f32 0.0, %v369
  %v371 = vpop.f32.mrf.mxu0
  %v372 = vpop.f32.mrf.mxu0
  %v373 = vadd.f32 0.0, %v372
  %v374 = vpop.f32.mrf.mxu0
  %375 = vmatprep.mubr.bf16.mxu0 %v132
  %376 = vmatmul.mubr.bf16.gmra.mxu0 %v131
  %v377 = vpop.f32.mrf.mxu0
  %v378 = vadd.f32 0.0, %v377
  %v379 = vpop.f32.mrf.mxu0
  %v380 = vpop.f32.mrf.mxu0
  %v381 = vadd.f32 0.0, %v380
  %v382 = vpop.f32.mrf.mxu0
  %383 = vdwg.mxu0
  %384 = vmatprep.subr.bf16.mxu0 0
  %385 = vmatpush1.bf16.msra.mxu0 %v294
  %386 = vmatprep.subr.bf16.mxu0 0
  %387 = vmatpush1.bf16.msra.mxu0 %v293
  %388 = vmatprep.subr.bf16.mxu0 0
  %389 = vmatpush1.bf16.msra.mxu0 %v292
  %390 = vmatprep.subr.bf16.mxu0 0
  %391 = vmatpush1.bf16.msra.mxu0 %v291
  %392 = vmatprep.subr.bf16.mxu0 0
  %393 = vmatpush1.bf16.msra.mxu0 %v290
  %394 = vmatprep.subr.bf16.mxu0 0
  %395 = vmatpush1.bf16.msra.mxu0 %v289
  %396 = vmatprep.subr.bf16.mxu0 0
  %397 = vmatpush1.bf16.msra.mxu0 %v288
  %398 = vmatprep.subr.bf16.mxu0 0
  %399 = vmatpush1.bf16.msra.mxu0 %v287
  %400 = vmatprep.subr.bf16.mxu0 0
  %401 = vmatpush2.bf16.msra.mxu0 %v302
  %402 = vmatprep.subr.bf16.mxu0 0
  %403 = vmatpush2.bf16.msra.mxu0 %v301
  %404 = vmatprep.subr.bf16.mxu0 0
  %405 = vmatpush2.bf16.msra.mxu0 %v300
  %406 = vmatprep.subr.bf16.mxu0 0
  %407 = vmatpush2.bf16.msra.mxu0 %v299
  %408 = vmatprep.subr.bf16.mxu0 0
  %409 = vmatpush2.bf16.msra.mxu0 %v298
  %410 = vmatprep.subr.bf16.mxu0 0
  %411 = vmatpush2.bf16.msra.mxu0 %v297
  %412 = vmatprep.subr.bf16.mxu0 0
  %413 = vmatpush2.bf16.msra.mxu0 %v296
  %414 = vmatprep.subr.bf16.mxu0 0
  %415 = vmatpush2.bf16.msra.mxu0 %v295
  %416 = vmatprep.mubr.bf16.mxu0 %v130
  %417 = vmatmul.mubr.bf16.gmra.mxu0 %v129
  %v418 = vpop.f32.mrf.mxu0
  %v419 = vadd.f32 %v370, %v418
  %v420 = vpop.f32.mrf.mxu0
  %v421 = vpop.f32.mrf.mxu0
  %v422 = vadd.f32 %v373, %v421
  %v423 = vpop.f32.mrf.mxu0
  %424 = vmatprep.mubr.bf16.mxu0 %v134
  %425 = vmatmul.mubr.bf16.gmra.mxu0 %v133
  %v426 = vpop.f32.mrf.mxu0
  %v427 = vadd.f32 %v378, %v426
  %v428 = vpop.f32.mrf.mxu0
  %v429 = vpop.f32.mrf.mxu0
  %v430 = vadd.f32 %v381, %v429
  %v431 = vpop.f32.mrf.mxu0
  %432 = vdwg.mxu0
  %v433 = vadd.f32 %v27, %v419
  %v434 = vadd.f32 %v28, %v422
  %v435 = vadd.f32 %v29, %v427
  %v436 = vadd.f32 %v30, %v430
  %vm437 = vcmask 523264
  %438 = vst.msk [vmem:[#allocation2] sm:$0xff] %vm437, %v433
  %439 = vst.msk [vmem:[#allocation2 + $0x8] sm:$0xff] %vm437, %v434
  %440 = vst.msk [vmem:[#allocation2 + $0x10] sm:$0xff] %vm437, %v435
  %441 = vst.msk [vmem:[#allocation2 + $0x18] sm:$0xff] %vm437, %v436
  // Predicated region
  $region22: #{cradio_v2_forward.13} parent=0 // pred_check
    %p442 = pneg %p18
  $region23: #{cradio_v2_forward.13} parent=0 // pred_check_branch
    %444 = sbr.rel (%p442) target = $region25
  $region24: #{cradio_v2_forward.13} parent=0 // pred_region
    %v445 = vld [vmem:[#allocation2] sm:$0xff]
    %v446 = vld [vmem:[#allocation2 + $0x8] sm:$0xff]
    %v447 = vld [vmem:[#allocation2 + $0x10] sm:$0xff]
    %v448 = vld [vmem:[#allocation2 + $0x18] sm:$0xff]
    %v449 = vld [vmem:[%s2] sm:$0x1]
    %v451 = vlaneseq
    %v452 = vshrl.u32 %v451, 7
    %v453 = vsub.s32 0, %v452
    %v454 = vrot.slane %v449, %v453
    %v456 = vadd.f32 %v445, %v454
    %v457 = vadd.f32 %v446, %v454
    %v458 = vadd.f32 %v447, %v454
    %v459 = vadd.f32 %v448, %v454
    %v460 = vld [vmem:[%s3] sm:$0xff]
    %v461 = vld [vmem:[%s3 + $0x8] sm:$0xff]
    %v462 = vld [vmem:[%s3 + $0x10] sm:$0xff]
    %v463 = vld [vmem:[%s3 + $0x18] sm:$0xff]
    %v464 = vadd.f32 %v456, %v460
    %v465 = vadd.f32 %v457, %v461
    %v466 = vadd.f32 %v458, %v462
    %v467 = vadd.f32 %v459, %v463
    %468 = vst.msk [vmem:[%s4] sm:$0xff] %vm437, %v464
    %469 = vst.msk [vmem:[%s4 + $0x8] sm:$0xff] %vm437, %v465
    %470 = vst.msk [vmem:[%s4 + $0x10] sm:$0xff] %vm437, %v466
    %471 = vst.msk [vmem:[%s4 + $0x18] sm:$0xff] %vm437, %v467
  $region25: #{cradio_v2_forward.13} parent=0 // pred_fallthru
    _
  // Predicated region
  $region26: #{cradio_v2_forward.13} parent=0 // pred_check
    _
  $region27: #{cradio_v2_forward.13} parent=0 // pred_check_branch
    %473 = sbr.rel (0) target = $region29
  $region28: #{cradio_v2_forward.13} parent=0 // pred_region
    _
  $region29: #{cradio_v2_forward.13} parent=0 // pred_fallthru
    _
  // Predicated region
  $region30: #{cradio_v2_forward.13} parent=0 // pred_check
    _
  $region31: #{cradio_v2_forward.13} parent=0 // pred_check_branch
    %475 = sbr.rel (0) target = $region33
  $region32: #{cradio_v2_forward.13} parent=0 // pred_region
    _
  $region33: #{cradio_v2_forward.13} parent=0 // pred_fallthru
    _

// kernel: cradio_v2_forward.19
$region0: #{cradio_v2_forward.19}
  #allocation0 [shape = 'u32[]', space=smem, size = 0x4, offset = 0x4, fixed_abs, tag = 'smem constant byte address 0x4 - core index']
  #allocation1 [shape = 'u32[144,128]{1,0:T(1,128)}', space=vmem, size = 0x12000, scoped, tag = 'internal scratch']
  %s0 = inlined_call_operand.vmem [shape: f32[32,64], index: 0, kind: input, shape index: {}]
  %s1 = inlined_call_operand.vmem [shape: f32[1,64], index: 1, kind: input, shape index: {}]
  %s2 = inlined_call_operand.vmem [shape: f32[1,64], index: 2, kind: input, shape index: {}]
  %s3 = inlined_call_operand.vmem [shape: f32[32,64], index: 3, kind: output, shape index: {}]
  %s4 = sld [smem:[#allocation0]]
  $region22: #{cradio_v2_forward.19} parent=0
    _
  %s6 = ssub.s32 1, %s4
  %s7 = scalar_select 0, %s6, %s4
  // Predicated region
  $region2: #{cradio_v2_forward.19} parent=0 // pred_check
    _
  $region3: #{cradio_v2_forward.19} parent=0 // pred_check_branch
    %9 = sbr.rel (0) target = $region5
  $region4: #{cradio_v2_forward.19} parent=0 // pred_region
    _
  $region5: #{cradio_v2_forward.19} parent=0 // pred_fallthru
    _
  // Predicated region
  $region6: #{cradio_v2_forward.19} parent=0 // pred_check
    _
  $region7: #{cradio_v2_forward.19} parent=0 // pred_check_branch
    %11 = sbr.rel (0) target = $region9
  $region8: #{cradio_v2_forward.19} parent=0 // pred_region
    _
  $region9: #{cradio_v2_forward.19} parent=0 // pred_fallthru
    _
  // Predicated region
  $region10: #{cradio_v2_forward.19} parent=0 // pred_check
    _
  $region11: #{cradio_v2_forward.19} parent=0 // pred_check_branch
    %13 = sbr.rel (0) target = $region13
  $region12: #{cradio_v2_forward.19} parent=0 // pred_region
    _
  $region13: #{cradio_v2_forward.19} parent=0 // pred_fallthru
    _
  %v14 = vld [vmem:[%s0] sm:$0xff]
  %v15 = vld [vmem:[%s0 + $0x8] sm:$0xff]
  %v16 = vld [vmem:[%s0 + $0x10] sm:$0xff]
  %v17 = vld [vmem:[%s0 + $0x18] sm:$0xff]
  %vm18 = vcmask 523264
  %v19 = vsel %vm18, %v14, 0.0
  %20 = vadd.xlane.f32.xlu0 %v19
  %v21 = vpop.xlane.xlu0 %20
  %v22 = vsel %vm18, %v15, 0.0
  %23 = vadd.xlane.f32.xlu0 %v22
  %v24 = vpop.xlane.xlu0 %23
  %v25 = vsel %vm18, %v16, 0.0
  %26 = vadd.xlane.f32.xlu0 %v25
  %v27 = vpop.xlane.xlu0 %26
  %v28 = vsel %vm18, %v17, 0.0
  %29 = vadd.xlane.f32.xlu0 %v28
  %v30 = vpop.xlane.xlu0 %29
  %v31 = vrcp.pop 64.0
  %v32 = vmul.f32 %v21, %v31
  %v33 = vmul.f32 %v24, %v31
  %v34 = vmul.f32 %v27, %v31
  %v35 = vmul.f32 %v30, %v31
  %v36 = vsub.f32 %v14, %v32
  %v37 = vsub.f32 %v15, %v33
  %v38 = vsub.f32 %v16, %v34
  %v39 = vsub.f32 %v17, %v35
  %v40 = vmul.f32 %v36, %v36
  %v41 = vmul.f32 %v37, %v37
  %v42 = vmul.f32 %v38, %v38
  %v43 = vmul.f32 %v39, %v39
  %v44 = vsel %vm18, %v40, 0.0
  %45 = vadd.xlane.f32.xlu0 %v44
  %v46 = vpop.xlane.xlu0 %45
  %v47 = vsel %vm18, %v41, 0.0
  %48 = vadd.xlane.f32.xlu0 %v47
  %v49 = vpop.xlane.xlu0 %48
  %v50 = vsel %vm18, %v42, 0.0
  %51 = vadd.xlane.f32.xlu0 %v50
  %v52 = vpop.xlane.xlu0 %51
  %v53 = vsel %vm18, %v43, 0.0
  %54 = vadd.xlane.f32.xlu0 %v53
  %v55 = vpop.xlane.xlu0 %54
  %v56 = vmul.f32 %v46, %v31
  %v57 = vmul.f32 %v49, %v31
  %v58 = vmul.f32 %v52, %v31
  %v59 = vmul.f32 %v55, %v31
  %v60 = vadd.f32 %v56, 1e-06
  %v61 = vadd.f32 %v57, 1e-06
  %v62 = vadd.f32 %v58, 1e-06
  %v63 = vadd.f32 %v59, 1e-06
  %v64 = vrsqrt.pop %v60
  %v65 = vrsqrt.pop %v61
  %v66 = vrsqrt.pop %v62
  %v67 = vrsqrt.pop %v63
  %v68 = vmul.f32 %v36, %v64
  %v69 = vmul.f32 %v37, %v65
  %v70 = vmul.f32 %v38, %v66
  %v71 = vmul.f32 %v39, %v67
  %v72 = vld [vmem:[%s1] sm:$0x1]
  %v74 = vlaneseq
  %v75 = vshrl.u32 %v74, 7
  %v76 = vsub.s32 0, %v75
  %v77 = vrot.slane %v72, %v76
  %v79 = vmul.f32 %v68, %v77
  %v80 = vmul.f32 %v69, %v77
  %v81 = vmul.f32 %v70, %v77
  %v82 = vmul.f32 %v71, %v77
  %v83 = vld [vmem:[%s2] sm:$0x1]
  %v85 = vlaneseq
  %v86 = vshrl.u32 %v85, 7
  %v87 = vsub.s32 0, %v86
  %v88 = vrot.slane %v83, %v87
  %v90 = vadd.f32 %v79, %v88
  %v91 = vadd.f32 %v80, %v88
  %v92 = vadd.f32 %v81, %v88
  %v93 = vadd.f32 %v82, %v88
  %94 = vst.msk [vmem:[%s3] sm:$0xff] %vm18, %v90
  %95 = vst.msk [vmem:[%s3 + $0x8] sm:$0xff] %vm18, %v91
  %96 = vst.msk [vmem:[%s3 + $0x10] sm:$0xff] %vm18, %v92
  %97 = vst.msk [vmem:[%s3 + $0x18] sm:$0xff] %vm18, %v93
  // Predicated region
  $region14: #{cradio_v2_forward.19} parent=0 // pred_check
    _
  $region15: #{cradio_v2_forward.19} parent=0 // pred_check_branch
    %99 = sbr.rel (0) target = $region17
  $region16: #{cradio_v2_forward.19} parent=0 // pred_region
    _
  $region17: #{cradio_v2_forward.19} parent=0 // pred_fallthru
    _
  // Predicated region
  $region18: #{cradio_v2_forward.19} parent=0 // pred_check
    _
  $region19: #{cradio_v2_forward.19} parent=0 // pred_check_branch
    %101 = sbr.rel (0) target = $region21
  $region20: #{cradio_v2_forward.19} parent=0 // pred_region
    _
  $region21: #{cradio_v2_forward.19} parent=0 // pred_fallthru
    _

// kernel: cradio_v2_forward.14
$region0: #{cradio_v2_forward.14}
  #allocation0 [shape = 'u32[]', space=smem, size = 0x4, offset = 0x4, fixed_abs, tag = 'smem constant byte address 0x4 - core index']
  #allocation1 [shape = 'u32[144,128]{1,0:T(1,128)}', space=vmem, size = 0x12000, scoped, tag = 'internal scratch']
  #allocation2 [shape = 'bf16[32,64]{1,0:T(8,128)(2,1)}', space=vmem, size = 0x2000, scoped, tag = 'scratch operand']
  #allocation3 [shape = 'f32[32,64]{1,0:T(8,128)}', space=vmem, size = 0x4000, scoped, tag = 'scratch operand']
  %s0 = inlined_call_operand.vmem [shape: f32[32,64], index: 0, kind: input, shape index: {}, may-alias: {0,7}]
  %s1 = inlined_call_operand.vmem [shape: f32[1,64], index: 1, kind: input, shape index: {}]
  %s2 = inlined_call_operand.vmem [shape: f32[1,64], index: 2, kind: input, shape index: {}]
  %s3 = inlined_call_operand.vmem [shape: bf16[64,256], index: 3, kind: input, shape index: {}]
  %s4 = inlined_call_operand.vmem [shape: f32[1,256], index: 4, kind: input, shape index: {}]
  %s5 = inlined_call_operand.vmem [shape: bf16[256,64], index: 5, kind: input, shape index: {}]
  %s6 = inlined_call_operand.vmem [shape: f32[1,64], index: 6, kind: input, shape index: {}]
  %s7 = inlined_call_operand.vmem [shape: f32[32,64], index: 7, kind: output, shape index: {}, may-alias: {0,7}]
  %s8 = sld [smem:[#allocation0]]
  $region46: #{cradio_v2_forward.14} parent=0
    _
  %s10 = ssub.s32 1, %s8
  %s11 = scalar_select 0, %s10, %s8
  // Predicated region
  $region2: #{cradio_v2_forward.14} parent=0 // pred_check
    _
  $region3: #{cradio_v2_forward.14} parent=0 // pred_check_branch
    %13 = sbr.rel (0) target = $region5
  $region4: #{cradio_v2_forward.14} parent=0 // pred_region
    _
  $region5: #{cradio_v2_forward.14} parent=0 // pred_fallthru
    _
  // Predicated region
  $region6: #{cradio_v2_forward.14} parent=0 // pred_check
    _
  $region7: #{cradio_v2_forward.14} parent=0 // pred_check_branch
    %15 = sbr.rel (0) target = $region9
  $region8: #{cradio_v2_forward.14} parent=0 // pred_region
    _
  $region9: #{cradio_v2_forward.14} parent=0 // pred_fallthru
    _
  // Predicated region
  $region10: #{cradio_v2_forward.14} parent=0 // pred_check
    _
  $region11: #{cradio_v2_forward.14} parent=0 // pred_check_branch
    %17 = sbr.rel (0) target = $region13
  $region12: #{cradio_v2_forward.14} parent=0 // pred_region
    _
  $region13: #{cradio_v2_forward.14} parent=0 // pred_fallthru
    _
  // Predicated region
  $region14: #{cradio_v2_forward.14} parent=0 // pred_check
    _
  $region15: #{cradio_v2_forward.14} parent=0 // pred_check_branch
    %19 = sbr.rel (0) target = $region17
  $region16: #{cradio_v2_forward.14} parent=0 // pred_region
    _
  $region17: #{cradio_v2_forward.14} parent=0 // pred_fallthru
    _
  // Predicated region
  $region18: #{cradio_v2_forward.14} parent=0 // pred_check
    _
  $region19: #{cradio_v2_forward.14} parent=0 // pred_check_branch
    %21 = sbr.rel (0) target = $region21
  $region20: #{cradio_v2_forward.14} parent=0 // pred_region
    _
  $region21: #{cradio_v2_forward.14} parent=0 // pred_fallthru
    _
  // Predicated region
  $region22: #{cradio_v2_forward.14} parent=0 // pred_check
    _
  $region23: #{cradio_v2_forward.14} parent=0 // pred_check_branch
    %23 = sbr.rel (0) target = $region25
  $region24: #{cradio_v2_forward.14} parent=0 // pred_region
    _
  $region25: #{cradio_v2_forward.14} parent=0 // pred_fallthru
    _
  // Predicated region
  $region26: #{cradio_v2_forward.14} parent=0 // pred_check
    _
  $region27: #{cradio_v2_forward.14} parent=0 // pred_check_branch
    %25 = sbr.rel (0) target = $region29
  $region28: #{cradio_v2_forward.14} parent=0 // pred_region
    _
  $region29: #{cradio_v2_forward.14} parent=0 // pred_fallthru
    _
  %p27 = scmp.eq.s32.totalorder 0, 0
  // Predicated region
  $region30: #{cradio_v2_forward.14} parent=0 // pred_check
    %p28 = pneg %p27
  $region31: #{cradio_v2_forward.14} parent=0 // pred_check_branch
    %30 = sbr.rel (%p28) target = $region33
  $region32: #{cradio_v2_forward.14} parent=0 // pred_region
    %v31 = vld [vmem:[%s0] sm:$0xff]
    %v32 = vld [vmem:[%s0 + $0x8] sm:$0xff]
    %v33 = vld [vmem:[%s0 + $0x10] sm:$0xff]
    %v34 = vld [vmem:[%s0 + $0x18] sm:$0xff]
    %vm35 = vcmask 523264
    %v36 = vsel %vm35, %v31, 0.0
    %37 = vadd.xlane.f32.xlu0 %v36
    %v38 = vpop.xlane.xlu0 %37
    %v39 = vsel %vm35, %v32, 0.0
    %40 = vadd.xlane.f32.xlu0 %v39
    %v41 = vpop.xlane.xlu0 %40
    %v42 = vsel %vm35, %v33, 0.0
    %43 = vadd.xlane.f32.xlu0 %v42
    %v44 = vpop.xlane.xlu0 %43
    %v45 = vsel %vm35, %v34, 0.0
    %46 = vadd.xlane.f32.xlu0 %v45
    %v47 = vpop.xlane.xlu0 %46
    %v48 = vrcp.pop 64.0
    %v49 = vmul.f32 %v38, %v48
    %v50 = vmul.f32 %v41, %v48
    %v51 = vmul.f32 %v44, %v48
    %v52 = vmul.f32 %v47, %v48
    %v53 = vsub.f32 %v31, %v49
    %v54 = vsub.f32 %v32, %v50
    %v55 = vsub.f32 %v33, %v51
    %v56 = vsub.f32 %v34, %v52
    %v57 = vmul.f32 %v53, %v53
    %v58 = vmul.f32 %v54, %v54
    %v59 = vmul.f32 %v55, %v55
    %v60 = vmul.f32 %v56, %v56
    %v61 = vsel %vm35, %v57, 0.0
    %62 = vadd.xlane.f32.xlu0 %v61
    %v63 = vpop.xlane.xlu0 %62
    %v64 = vsel %vm35, %v58, 0.0
    %65 = vadd.xlane.f32.xlu0 %v64
    %v66 = vpop.xlane.xlu0 %65
    %v67 = vsel %vm35, %v59, 0.0
    %68 = vadd.xlane.f32.xlu0 %v67
    %v69 = vpop.xlane.xlu0 %68
    %v70 = vsel %vm35, %v60, 0.0
    %71 = vadd.xlane.f32.xlu0 %v70
    %v72 = vpop.xlane.xlu0 %71
    %v73 = vmul.f32 %v63, %v48
    %v74 = vmul.f32 %v66, %v48
    %v75 = vmul.f32 %v69, %v48
    %v76 = vmul.f32 %v72, %v48
    %v77 = vadd.f32 %v73, 1e-06
    %v78 = vadd.f32 %v74, 1e-06
    %v79 = vadd.f32 %v75, 1e-06
    %v80 = vadd.f32 %v76, 1e-06
    %v81 = vrsqrt.pop %v77
    %v82 = vrsqrt.pop %v78
    %v83 = vrsqrt.pop %v79
    %v84 = vrsqrt.pop %v80
    %v85 = vmul.f32 %v53, %v81
    %v86 = vmul.f32 %v54, %v82
    %v87 = vmul.f32 %v55, %v83
    %v88 = vmul.f32 %v56, %v84
    %v89 = vld [vmem:[%s1] sm:$0x1]
    %v91 = vlaneseq
    %v92 = vshrl.u32 %v91, 7
    %v93 = vsub.s32 0, %v92
    %v94 = vrot.slane %v89, %v93
    %v96 = vmul.f32 %v85, %v94
    %v97 = vmul.f32 %v86, %v94
    %v98 = vmul.f32 %v87, %v94
    %v99 = vmul.f32 %v88, %v94
    %v100 = vld [vmem:[%s2] sm:$0x1]
    %v102 = vlaneseq
    %v103 = vshrl.u32 %v102, 7
    %v104 = vsub.s32 0, %v103
    %v105 = vrot.slane %v100, %v104
    %v107 = vadd.f32 %v96, %v105
    %v108 = vadd.f32 %v97, %v105
    %v109 = vadd.f32 %v98, %v105
    %v110 = vadd.f32 %v99, %v105
    %v111 = vpack.c.bf16 %v108, %v107
    %v112 = vpack.c.bf16 %v110, %v109
    %v115 = vunpack.c.l.b16 %v111
    %v116 = vunpack.c.h.b16 %v111
    %v117 = vunpack.c.l.b16 %v112
    %v118 = vunpack.c.h.b16 %v112
    %v119 = vpack.c.b16 %v115, %v115
    %v120 = vpack.c.b16 %v116, %v116
    %v121 = vpack.c.b16 %v117, %v117
    %v122 = vpack.c.b16 %v118, %v118
    %vm127 = vcmask 519168
    %128 = vst.msk [vmem:[#allocation2] sm:$0xf] %vm127, %v119
    %129 = vst.msk [vmem:[#allocation2 + $0x4] sm:$0xf] %vm127, %v120
    %130 = vst.msk [vmem:[#allocation2 + $0x8] sm:$0xf] %vm127, %v121
    %131 = vst.msk [vmem:[#allocation2 + $0xc] sm:$0xf] %vm127, %v122
    %132 = vst.msk [vmem:[#allocation3] sm:$0xff] %vm35, 0.0
    %133 = vst.msk [vmem:[#allocation3 + $0x8] sm:$0xff] %vm35, 0.0
    %134 = vst.msk [vmem:[#allocation3 + $0x10] sm:$0xff] %vm35, 0.0
    %135 = vst.msk [vmem:[#allocation3 + $0x18] sm:$0xff] %vm35, 0.0
  $region33: #{cradio_v2_forward.14} parent=0 // pred_fallthru
    _
  %v136 = vld [vmem:[#allocation2] sm:$0xf]
  %v137 = vld [vmem:[#allocation2 + $0x4] sm:$0xf]
  %v138 = vld [vmem:[#allocation2 + $0x8] sm:$0xf]
  %v139 = vld [vmem:[#allocation2 + $0xc] sm:$0xf]
  %v140 = vld [vmem:[%s3] sm:$0xff]
  %v141 = vld [vmem:[%s3 + $0x8] sm:$0xff]
  %v142 = vld [vmem:[%s3 + $0x10] sm:$0xff]
  %v143 = vld [vmem:[%s3 + $0x18] sm:$0xff]
  %v144 = vld [vmem:[%s3 + $0x20] sm:$0xff]
  %v145 = vld [vmem:[%s3 + $0x28] sm:$0xff]
  %v146 = vld [vmem:[%s3 + $0x30] sm:$0xff]
  %v147 = vld [vmem:[%s3 + $0x38] sm:$0xff]
  %v148 = vld [vmem:[%s4] sm:$0x3]
  %v150 = vlaneseq
  %v151 = vshrl.u32 %v150, 7
  %v152 = vsub.s32 0, %v151
  %v153 = vrot.slane %v148, %v152
  %v154 = vlaneseq
  %v155 = vshrl.u32 %v154, 7
  %v156 = vsub.s32 1, %v155
  %v157 = vrot.slane %v148, %v156
  %v164 = vunpack.c.l.b16 %v136
  %v165 = vunpack.c.l.b16 %v137
  %v166 = vunpack.c.l.b16 %v138
  %v167 = vunpack.c.l.b16 %v139
  %v168 = vpack.c.b16 %v165, %v164
  %v169 = vpack.c.b16 %v167, %v166
  %v178 = vunpack.c.l.b16 %v140
  %v179 = vunpack.c.h.b16 %v140
  %v180 = vunpack.c.l.b16 %v141
  %v181 = vunpack.c.h.b16 %v141
  %v182 = vunpack.c.l.b16 %v142
  %v183 = vunpack.c.h.b16 %v142
  %v184 = vunpack.c.l.b16 %v143
  %v185 = vunpack.c.h.b16 %v143
  %v186 = vunpack.c.l.b16 %v144
  %v187 = vunpack.c.h.b16 %v144
  %v188 = vunpack.c.l.b16 %v145
  %v189 = vunpack.c.h.b16 %v145
  %v190 = vunpack.c.l.b16 %v146
  %v191 = vunpack.c.h.b16 %v146
  %v192 = vunpack.c.l.b16 %v147
  %v193 = vunpack.c.h.b16 %v147
  %v194 = vpack.c.b16 %v180, %v178
  %v195 = vpack.c.b16 %v181, %v179
  %v196 = vpack.c.b16 %v184, %v182
  %v197 = vpack.c.b16 %v185, %v183
  %v198 = vpack.c.b16 %v188, %v186
  %v199 = vpack.c.b16 %v189, %v187
  %v200 = vpack.c.b16 %v192, %v190
  %v201 = vpack.c.b16 %v193, %v191
  %vm210 = vcmask 523264
  %v212 = vsel %vm210, %v168, 0
  %v215 = vsel %vm210, %v169, 0
  %217 = vmatprep.subr.bf16.mxu0 0
  %218 = vmatpush1.bf16.msra.mxu0 0
  %219 = vmatprep.subr.bf16.mxu0 0
  %220 = vmatpush1.bf16.msra.mxu0 0
  %221 = vmatprep.subr.bf16.mxu0 0
  %222 = vmatpush1.bf16.msra.mxu0 0
  %223 = vmatprep.subr.bf16.mxu0 0
  %224 = vmatpush1.bf16.msra.mxu0 0
  %225 = vmatprep.subr.bf16.mxu0 %v201
  %226 = vmatpush1.bf16.msra.mxu0 %v200
  %227 = vmatprep.subr.bf16.mxu0 %v199
  %228 = vmatpush1.bf16.msra.mxu0 %v198
  %229 = vmatprep.subr.bf16.mxu0 %v197
  %230 = vmatpush1.bf16.msra.mxu0 %v196
  %231 = vmatprep.subr.bf16.mxu0 %v195
  %232 = vmatpush1.bf16.msra.mxu0 %v194
  %233 = vmatprep.subr.bf16.mxu0 0
  %234 = vmatpush2.bf16.msra.mxu0 0
  %235 = vmatprep.subr.bf16.mxu0 0
  %236 = vmatpush2.bf16.msra.mxu0 0
  %237 = vmatprep.subr.bf16.mxu0 0
  %238 = vmatpush2.bf16.msra.mxu0 0
  %239 = vmatprep.subr.bf16.mxu0 0
  %240 = vmatpush2.bf16.msra.mxu0 0
  %241 = vmatprep.subr.bf16.mxu0 0
  %242 = vmatpush2.bf16.msra.mxu0 0
  %243 = vmatprep.subr.bf16.mxu0 0
  %244 = vmatpush2.bf16.msra.mxu0 0
  %245 = vmatprep.subr.bf16.mxu0 0
  %246 = vmatpush2.bf16.msra.mxu0 0
  %247 = vmatprep.subr.bf16.mxu0 0
  %248 = vmatpush2.bf16.msra.mxu0 0
  %249 = vmatprep.mubr.bf16.mxu0 0
  %250 = vmatmul.mubr.bf16.gmra.mxu0 %v212
  %v251 = vpop.f32.mrf.mxu0
  %v252 = vadd.f32 %v153, %v251
  %v253 = vpop.f32.mrf.mxu0
  %v254 = vadd.f32 %v157, %v253
  %v255 = vpop.f32.mrf.mxu0
  %v256 = vadd.f32 %v153, %v255
  %v257 = vpop.f32.mrf.mxu0
  %v258 = vadd.f32 %v157, %v257
  %259 = vmatprep.mubr.bf16.mxu0 0
  %260 = vmatmul.mubr.bf16.gmra.mxu0 %v215
  %v261 = vpop.f32.mrf.mxu0
  %v262 = vadd.f32 %v153, %v261
  %v263 = vpop.f32.mrf.mxu0
  %v264 = vadd.f32 %v157, %v263
  %v265 = vpop.f32.mrf.mxu0
  %v266 = vadd.f32 %v153, %v265
  %v267 = vpop.f32.mrf.mxu0
  %v268 = vadd.f32 %v157, %v267
  %269 = vdwg.mxu0
  %v270 = vmul.f32 %v252, 0.5
  %v271 = vmul.f32 %v254, 0.5
  %v272 = vmul.f32 %v256, 0.5
  %v273 = vmul.f32 %v258, 0.5
  %v274 = vmul.f32 %v262, 0.5
  %v275 = vmul.f32 %v264, 0.5
  %v276 = vmul.f32 %v266, 0.5
  %v277 = vmul.f32 %v268, 0.5
  %v278 = vmul.f32 %v252, 0.044715
  %v279 = vmul.f32 %v254, 0.044715
  %v280 = vmul.f32 %v256, 0.044715
  %v281 = vmul.f32 %v258, 0.044715
  %v282 = vmul.f32 %v262, 0.044715
  %v283 = vmul.f32 %v264, 0.044715
  %v284 = vmul.f32 %v266, 0.044715
  %v285 = vmul.f32 %v268, 0.044715
  %v286 = vmul.f32 %v278, %v252
  %v287 = vmul.f32 %v279, %v254
  %v288 = vmul.f32 %v280, %v256
  %v289 = vmul.f32 %v281, %v258
  %v290 = vmul.f32 %v282, %v262
  %v291 = vmul.f32 %v283, %v264
  %v292 = vmul.f32 %v284, %v266
  %v293 = vmul.f32 %v285, %v268
  %v294 = vmul.f32 %v286, %v252
  %v295 = vmul.f32 %v287, %v254
  %v296 = vmul.f32 %v288, %v256
  %v297 = vmul.f32 %v289, %v258
  %v298 = vmul.f32 %v290, %v262
  %v299 = vmul.f32 %v291, %v264
  %v300 = vmul.f32 %v292, %v266
  %v301 = vmul.f32 %v293, %v268
  %v302 = vadd.f32 %v252, %v294
  %v303 = vadd.f32 %v254, %v295
  %v304 = vadd.f32 %v256, %v296
  %v305 = vadd.f32 %v258, %v297
  %v306 = vadd.f32 %v262, %v298
  %v307 = vadd.f32 %v264, %v299
  %v308 = vadd.f32 %v266, %v300
  %v309 = vadd.f32 %v268, %v301
  %v310 = vmul.f32 %v302, 0.7978846
  %v311 = vmul.f32 %v303, 0.7978846
  %v312 = vmul.f32 %v304, 0.7978846
  %v313 = vmul.f32 %v305, 0.7978846
  %v314 = vmul.f32 %v306, 0.7978846
  %v315 = vmul.f32 %v307, 0.7978846
  %v316 = vmul.f32 %v308, 0.7978846
  %v317 = vmul.f32 %v309, 0.7978846
  %v318 = vtanh.pop %v310
  %v319 = vtanh.pop %v311
  %v320 = vtanh.pop %v312
  %v321 = vtanh.pop %v313
  %v322 = vtanh.pop %v314
  %v323 = vtanh.pop %v315
  %v324 = vtanh.pop %v316
  %v325 = vtanh.pop %v317
  %v326 = vadd.f32 %v318, 1.0
  %v327 = vadd.f32 %v319, 1.0
  %v328 = vadd.f32 %v320, 1.0
  %v329 = vadd.f32 %v321, 1.0
  %v330 = vadd.f32 %v322, 1.0
  %v331 = vadd.f32 %v323, 1.0
  %v332 = vadd.f32 %v324, 1.0
  %v333 = vadd.f32 %v325, 1.0
  %v334 = vmul.f32 %v270, %v326
  %v335 = vmul.f32 %v271, %v327
  %v336 = vmul.f32 %v272, %v328
  %v337 = vmul.f32 %v273, %v329
  %v338 = vmul.f32 %v274, %v330
  %v339 = vmul.f32 %v275, %v331
  %v340 = vmul.f32 %v276, %v332
  %v341 = vmul.f32 %v277, %v333
  %v342 = vld [vmem:[#allocation3] sm:$0xff]
  %v343 = vld [vmem:[#allocation3 + $0x8] sm:$0xff]
  %v344 = vld [vmem:[#allocation3 + $0x10] sm:$0xff]
  %v345 = vld [vmem:[#allocation3 + $0x18] sm:$0xff]
  %v346 = vpack.c.bf16 %v336, %v334
  %v347 = vpack.c.bf16 %v337, %v335
  %v348 = vpack.c.bf16 %v340, %v338
  %v349 = vpack.c.bf16 %v341, %v339
  %v350 = vld [vmem:[%s5] sm:$0xf]
  %v351 = vld [vmem:[%s5 + $0x4] sm:$0xf]
  %v352 = vld [vmem:[%s5 + $0x8] sm:$0xf]
  %v353 = vld [vmem:[%s5 + $0xc] sm:$0xf]
  %v354 = vld [vmem:[%s5 + $0x10] sm:$0xf]
  %v355 = vld [vmem:[%s5 + $0x14] sm:$0xf]
  %v356 = vld [vmem:[%s5 + $0x18] sm:$0xf]
  %v357 = vld [vmem:[%s5 + $0x1c] sm:$0xf]
  %v358 = vld [vmem:[%s5 + $0x20] sm:$0xf]
  %v359 = vld [vmem:[%s5 + $0x24] sm:$0xf]
  %v360 = vld [vmem:[%s5 + $0x28] sm:$0xf]
  %v361 = vld [vmem:[%s5 + $0x2c] sm:$0xf]
  %v362 = vld [vmem:[%s5 + $0x30] sm:$0xf]
  %v363 = vld [vmem:[%s5 + $0x34] sm:$0xf]
  %v364 = vld [vmem:[%s5 + $0x38] sm:$0xf]
  %v365 = vld [vmem:[%s5 + $0x3c] sm:$0xf]
  %v366 = vld [vmem:[%s5 + $0x40] sm:$0xf]
  %v367 = vld [vmem:[%s5 + $0x44] sm:$0xf]
  %v368 = vld [vmem:[%s5 + $0x48] sm:$0xf]
  %v369 = vld [vmem:[%s5 + $0x4c] sm:$0xf]
  %v370 = vld [vmem:[%s5 + $0x50] sm:$0xf]
  %v371 = vld [vmem:[%s5 + $0x54] sm:$0xf]
  %v372 = vld [vmem:[%s5 + $0x58] sm:$0xf]
  %v373 = vld [vmem:[%s5 + $0x5c] sm:$0xf]
  %v374 = vld [vmem:[%s5 + $0x60] sm:$0xf]
  %v375 = vld [vmem:[%s5 + $0x64] sm:$0xf]
  %v376 = vld [vmem:[%s5 + $0x68] sm:$0xf]
  %v377 = vld [vmem:[%s5 + $0x6c] sm:$0xf]
  %v378 = vld [vmem:[%s5 + $0x70] sm:$0xf]
  %v379 = vld [vmem:[%s5 + $0x74] sm:$0xf]
  %v380 = vld [vmem:[%s5 + $0x78] sm:$0xf]
  %v381 = vld [vmem:[%s5 + $0x7c] sm:$0xf]
  %v414 = vunpack.c.l.b16 %v350
  %v415 = vunpack.c.l.b16 %v351
  %v416 = vunpack.c.l.b16 %v352
  %v417 = vunpack.c.l.b16 %v353
  %v418 = vunpack.c.l.b16 %v354
  %v419 = vunpack.c.l.b16 %v355
  %v420 = vunpack.c.l.b16 %v356
  %v421 = vunpack.c.l.b16 %v357
  %v422 = vunpack.c.l.b16 %v358
  %v423 = vunpack.c.l.b16 %v359
  %v424 = vunpack.c.l.b16 %v360
  %v425 = vunpack.c.l.b16 %v361
  %v426 = vunpack.c.l.b16 %v362
  %v427 = vunpack.c.l.b16 %v363
  %v428 = vunpack.c.l.b16 %v364
  %v429 = vunpack.c.l.b16 %v365
  %v430 = vunpack.c.l.b16 %v366
  %v431 = vunpack.c.l.b16 %v367
  %v432 = vunpack.c.l.b16 %v368
  %v433 = vunpack.c.l.b16 %v369
  %v434 = vunpack.c.l.b16 %v370
  %v435 = vunpack.c.l.b16 %v371
  %v436 = vunpack.c.l.b16 %v372
  %v437 = vunpack.c.l.b16 %v373
  %v438 = vunpack.c.l.b16 %v374
  %v439 = vunpack.c.l.b16 %v375
  %v440 = vunpack.c.l.b16 %v376
  %v441 = vunpack.c.l.b16 %v377
  %v442 = vunpack.c.l.b16 %v378
  %v443 = vunpack.c.l.b16 %v379
  %v444 = vunpack.c.l.b16 %v380
  %v445 = vunpack.c.l.b16 %v381
  %v446 = vpack.c.b16 %v415, %v414
  %v447 = vpack.c.b16 %v417, %v416
  %v448 = vpack.c.b16 %v419, %v418
  %v449 = vpack.c.b16 %v421, %v420
  %v450 = vpack.c.b16 %v423, %v422
  %v451 = vpack.c.b16 %v425, %v424
  %v452 = vpack.c.b16 %v427, %v426
  %v453 = vpack.c.b16 %v429, %v428
  %v454 = vpack.c.b16 %v431, %v430
  %v455 = vpack.c.b16 %v433, %v432
  %v456 = vpack.c.b16 %v435, %v434
  %v457 = vpack.c.b16 %v437, %v436
  %v458 = vpack.c.b16 %v439, %v438
  %v459 = vpack.c.b16 %v441, %v440
  %v460 = vpack.c.b16 %v443, %v442
  %v461 = vpack.c.b16 %v445, %v444
  %478 = vmatprep.subr.bf16.mxu0 0
  %479 = vmatpush1.bf16.msra.mxu0 %v453
  %480 = vmatprep.subr.bf16.mxu0 0
  %481 = vmatpush1.bf16.msra.mxu0 %v452
  %482 = vmatprep.subr.bf16.mxu0 0
  %483 = vmatpush1.bf16.msra.mxu0 %v451
  %484 = vmatprep.subr.bf16.mxu0 0
  %485 = vmatpush1.bf16.msra.mxu0 %v450
  %486 = vmatprep.subr.bf16.mxu0 0
  %487 = vmatpush1.bf16.msra.mxu0 %v449
  %488 = vmatprep.subr.bf16.mxu0 0
  %489 = vmatpush1.bf16.msra.mxu0 %v448
  %490 = vmatprep.subr.bf16.mxu0 0
  %491 = vmatpush1.bf16.msra.mxu0 %v447
  %492 = vmatprep.subr.bf16.mxu0 0
  %493 = vmatpush1.bf16.msra.mxu0 %v446
  %494 = vmatprep.subr.bf16.mxu0 0
  %495 = vmatpush2.bf16.msra.mxu0 %v461
  %496 = vmatprep.subr.bf16.mxu0 0
  %497 = vmatpush2.bf16.msra.mxu0 %v460
  %498 = vmatprep.subr.bf16.mxu0 0
  %499 = vmatpush2.bf16.msra.mxu0 %v459
  %500 = vmatprep.subr.bf16.mxu0 0
  %501 = vmatpush2.bf16.msra.mxu0 %v458
  %502 = vmatprep.subr.bf16.mxu0 0
  %503 = vmatpush2.bf16.msra.mxu0 %v457
  %504 = vmatprep.subr.bf16.mxu0 0
  %505 = vmatpush2.bf16.msra.mxu0 %v456
  %506 = vmatprep.subr.bf16.mxu0 0
  %507 = vmatpush2.bf16.msra.mxu0 %v455
  %508 = vmatprep.subr.bf16.mxu0 0
  %509 = vmatpush2.bf16.msra.mxu0 %v454
  %510 = vmatprep.mubr.bf16.mxu0 %v347
  %511 = vmatmul.mubr.bf16.gmra.mxu0 %v346
  %v512 = vpop.f32.mrf.mxu0
  %v513 = vadd.f32 0.0, %v512
  %v514 = vpop.f32.mrf.mxu0
  %v515 = vpop.f32.mrf.mxu0
  %v516 = vadd.f32 0.0, %v515
  %v517 = vpop.f32.mrf.mxu0
  %518 = vmatprep.mubr.bf16.mxu0 %v349
  %519 = vmatmul.mubr.bf16.gmra.mxu0 %v348
  %v520 = vpop.f32.mrf.mxu0
  %v521 = vadd.f32 0.0, %v520
  %v522 = vpop.f32.mrf.mxu0
  %v523 = vpop.f32.mrf.mxu0
  %v524 = vadd.f32 0.0, %v523
  %v525 = vpop.f32.mrf.mxu0
  %526 = vdwg.mxu0
  %v527 = vadd.f32 %v342, %v513
  %v528 = vadd.f32 %v343, %v516
  %v529 = vadd.f32 %v344, %v521
  %v530 = vadd.f32 %v345, %v524
  %531 = vst.msk [vmem:[#allocation3] sm:$0xff] %vm210, %v527
  %532 = vst.msk [vmem:[#allocation3 + $0x8] sm:$0xff] %vm210, %v528
  %533 = vst.msk [vmem:[#allocation3 + $0x10] sm:$0xff] %vm210, %v529
  %534 = vst.msk [vmem:[#allocation3 + $0x18] sm:$0xff] %vm210, %v530
  // Predicated region
  $region34: #{cradio_v2_forward.14} parent=0 // pred_check
    %p535 = pneg %p27
  $region35: #{cradio_v2_forward.14} parent=0 // pred_check_branch
    %537 = sbr.rel (%p535) target = $region37
  $region36: #{cradio_v2_forward.14} parent=0 // pred_region
    %v538 = vld [vmem:[#allocation3] sm:$0xff]
    %v539 = vld [vmem:[#allocation3 + $0x8] sm:$0xff]
    %v540 = vld [vmem:[#allocation3 + $0x10] sm:$0xff]
    %v541 = vld [vmem:[#allocation3 + $0x18] sm:$0xff]
    %v542 = vld [vmem:[%s6] sm:$0x1]
    %v544 = vlaneseq
    %v545 = vshrl.u32 %v544, 7
    %v546 = vsub.s32 0, %v545
    %v547 = vrot.slane %v542, %v546
    %v549 = vadd.f32 %v538, %v547
    %v550 = vadd.f32 %v539, %v547
    %v551 = vadd.f32 %v540, %v547
    %v552 = vadd.f32 %v541, %v547
    %v553 = vld [vmem:[%s0] sm:$0xff]
    %v554 = vld [vmem:[%s0 + $0x8] sm:$0xff]
    %v555 = vld [vmem:[%s0 + $0x10] sm:$0xff]
    %v556 = vld [vmem:[%s0 + $0x18] sm:$0xff]
    %v557 = vadd.f32 %v549, %v553
    %v558 = vadd.f32 %v550, %v554
    %v559 = vadd.f32 %v551, %v555
    %v560 = vadd.f32 %v552, %v556
    %561 = vst.msk [vmem:[%s7] sm:$0xff] %vm210, %v557
    %562 = vst.msk [vmem:[%s7 + $0x8] sm:$0xff] %vm210, %v558
    %563 = vst.msk [vmem:[%s7 + $0x10] sm:$0xff] %vm210, %v559
    %564 = vst.msk [vmem:[%s7 + $0x18] sm:$0xff] %vm210, %v560
  $region37: #{cradio_v2_forward.14} parent=0 // pred_fallthru
    _
  // Predicated region
  $region38: #{cradio_v2_forward.14} parent=0 // pred_check
    _
  $region39: #{cradio_v2_forward.14} parent=0 // pred_check_branch
    %566 = sbr.rel (0) target = $region41
  $region40: #{cradio_v2_forward.14} parent=0 // pred_region
    _
  $region41: #{cradio_v2_forward.14} parent=0 // pred_fallthru
    _
  // Predicated region
  $region42: #{cradio_v2_forward.14} parent=0 // pred_check
    _
  $region43: #{cradio_v2_forward.14} parent=0 // pred_check_branch
    %568 = sbr.rel (0) target = $region45
  $region44: #{cradio_v2_forward.14} parent=0 // pred_region
    _
  $region45: #{cradio_v2_forward.14} parent=0 // pred_fallthru
    _

</llo_original>
